<compile_context>
chip_gen: v7x
topology: tpu7x:2x2x1
jax: 0.10.0
libtpu: 0.0.40
codegen_flags: <defaults>
</compile_context>

<pallas_src>
import functools
import math

import jax
import jax.numpy as jnp
from jax.experimental import pallas as pl
from jax.experimental.pallas import tpu as pltpu

F32 = jnp.float32
BF16 = jnp.bfloat16
_VMEM_LIMIT = 48 * 1024 * 1024


# ----------------------------------------------------------------------------
# Pallas kernel A: fused emb_in + GCL (edge MLP + att gate + aggregation +
# node MLP + residual + node mask), one (batch, branch) block per grid step.
# ----------------------------------------------------------------------------
def _gcl_fused_kernel(x_ref, ea_ref, em_ref, nm_ref,
                      win_ref, bin_ref,
                      w0_ref, b0_ref, w1_ref, b1_ref, wa_ref, ba_ref,
                      nw0_ref, nb0_ref, nw1_ref, nb1_ref,
                      h_ref, *, hidden, inv_norm):
    H = hidden
    x = x_ref[0]                          # (N, in_dim) bf16
    ea = ea_ref[0]                        # (N, N, E)   bf16
    em = em_ref[0]                        # (N, N)      f32
    nm = nm_ref[0]                        # (N, 1)      f32
    n = x.shape[0]
    e_feats = ea.shape[-1]

    # --- input embedding (branch-specific weights) -------------------------
    h0 = jnp.dot(x, win_ref[0], preferred_element_type=jnp.float32) + bin_ref[0, 0]
    h0b = h0.astype(BF16)                 # (N, H)

    # --- edge MLP: concat[h_i | h_j | e_attr] via split-weight matmuls ------
    w0 = w0_ref[0]                        # (2H+E, H) bf16
    part_i = jnp.dot(h0b, w0[:H], preferred_element_type=jnp.float32)          # (N,H)
    part_j = jnp.dot(h0b, w0[H:2 * H], preferred_element_type=jnp.float32)     # (N,H)
    part_e = jnp.dot(ea.reshape(n * n, e_feats), w0[2 * H:],
                     preferred_element_type=jnp.float32)                       # (N*N,H)

    pre = (part_e.reshape(n, n, H)
           + part_i[:, None, :] + part_j[None, :, :] + b0_ref[0, 0])
    m1 = pre * jax.nn.sigmoid(pre)                                             # silu

    m2 = jnp.dot(m1.reshape(n * n, H).astype(BF16), w1_ref[0],
                 preferred_element_type=jnp.float32) + b1_ref[0, 0]
    m2 = m2 * jax.nn.sigmoid(m2)                                               # (N*N,H)

    att = jax.nn.sigmoid(
        jnp.dot(m2.astype(BF16), wa_ref[0],
                preferred_element_type=jnp.float32) + ba_ref[0, 0])            # (N*N,1)

    ef = (m2 * att).reshape(n, n, H) * em[:, :, None]
    agg = jnp.sum(ef, axis=1) * inv_norm                                       # (N,H)

    # --- node MLP: concat[h0 | agg] via split-weight matmuls, residual ------
    nw0 = nw0_ref[0]                      # (2H, H) bf16
    t = (jnp.dot(h0b, nw0[:H], preferred_element_type=jnp.float32)
         + jnp.dot(agg.astype(BF16), nw0[H:], preferred_element_type=jnp.float32)
         + nb0_ref[0, 0])
    t = t * jax.nn.sigmoid(t)
    dh = jnp.dot(t.astype(BF16), nw1_ref[0],
                 preferred_element_type=jnp.float32) + nb1_ref[0, 0]

    h_ref[0, 0] = ((h0 + dh) * nm).astype(h_ref.dtype)


def gcl_fused(x_feat_b, e_attr_b, edge_mask, node_mask, sp, *,
              hidden, normalization_factor):
    """x_feat_b: (B,N,in) bf16, e_attr_b: (B,N,N,E) bf16 -> h (3,B,N,H) bf16."""
    B, N, in_dim = x_feat_b.shape
    E = e_attr_b.shape[-1]
    G, H = 3, hidden
    kern = functools.partial(_gcl_fused_kernel, hidden=H,
                             inv_norm=1.0 / normalization_factor)
    return pl.pallas_call(
        kern,
        out_shape=jax.ShapeDtypeStruct((G, B, N, H), BF16),
        grid=(B, G),   # branch innermost: shared per-batch blocks are revisited
        in_specs=[
            pl.BlockSpec((1, N, in_dim), lambda b, g: (b, 0, 0)),
            pl.BlockSpec((1, N, N, E), lambda b, g: (b, 0, 0, 0)),
            pl.BlockSpec((1, N, N), lambda b, g: (b, 0, 0)),
            pl.BlockSpec((1, N, 1), lambda b, g: (b, 0, 0)),
            pl.BlockSpec((1, in_dim, H), lambda b, g: (g, 0, 0)),
            pl.BlockSpec((1, 1, H), lambda b, g: (g, 0, 0)),
            pl.BlockSpec((1, 2 * H + E, H), lambda b, g: (g, 0, 0)),
            pl.BlockSpec((1, 1, H), lambda b, g: (g, 0, 0)),
            pl.BlockSpec((1, H, H), lambda b, g: (g, 0, 0)),
            pl.BlockSpec((1, 1, H), lambda b, g: (g, 0, 0)),
            pl.BlockSpec((1, H, 1), lambda b, g: (g, 0, 0)),
            pl.BlockSpec((1, 1, 1), lambda b, g: (g, 0, 0)),
            pl.BlockSpec((1, 2 * H, H), lambda b, g: (g, 0, 0)),
            pl.BlockSpec((1, 1, H), lambda b, g: (g, 0, 0)),
            pl.BlockSpec((1, H, H), lambda b, g: (g, 0, 0)),
            pl.BlockSpec((1, 1, H), lambda b, g: (g, 0, 0)),
        ],
        out_specs=pl.BlockSpec((1, 1, N, H), lambda b, g: (g, b, 0, 0)),
        compiler_params=pltpu.CompilerParams(
            dimension_semantics=("parallel", "arbitrary"),
            vmem_limit_bytes=_VMEM_LIMIT),
    )(x_feat_b, e_attr_b, edge_mask, node_mask,
      sp["win"], sp["bin"],
      sp["ew0"], sp["eb0"], sp["ew1"], sp["eb1"], sp["wa"], sp["ba"],
      sp["nw0"], sp["nb0"], sp["nw1"], sp["nb1"])


# ----------------------------------------------------------------------------
# Pallas kernel B: fused EquivariantUpdate coord path + emb_out linear.
#   x_out[i] = (pos[i] + (1/nf) * sum_j cd[i,j]*tanh(phi)*range*mask) * nm[i]
#   h_out[i] = (h[i] @ W_out + b_out) * nm[i]
# ----------------------------------------------------------------------------
def _coord_embout_kernel(h_ref, ea_ref, cd_ref, em_ref, nm_ref, pos_ref,
                         cw0_ref, cb0_ref, cw1_ref, cb1_ref, cw2_ref,
                         wo_ref, bo_ref,
                         x_ref, ho_ref, *, hidden, inv_norm, coords_range):
    H = hidden
    h = h_ref[0, 0]                       # (N, H) bf16
    ea = ea_ref[0]                        # (N, N, E) bf16
    cd = cd_ref[0]                        # (N, N, 3) f32
    em = em_ref[0]                        # (N, N)    f32
    nm = nm_ref[0]                        # (N, 1)    f32
    pos = pos_ref[0]                      # (N, 3)    f32
    n = h.shape[0]
    e_feats = ea.shape[-1]

    w0 = cw0_ref[0]                       # (2H+E, H) bf16
    part_i = jnp.dot(h, w0[:H], preferred_element_type=jnp.float32)
    part_j = jnp.dot(h, w0[H:2 * H], preferred_element_type=jnp.float32)
    part_e = jnp.dot(ea.reshape(n * n, e_feats), w0[2 * H:],
                     preferred_element_type=jnp.float32)

    pre = (part_e.reshape(n, n, H)
           + part_i[:, None, :] + part_j[None, :, :] + cb0_ref[0, 0])
    c1 = pre * jax.nn.sigmoid(pre)
    c2 = jnp.dot(c1.reshape(n * n, H).astype(BF16), cw1_ref[0],
                 preferred_element_type=jnp.float32) + cb1_ref[0, 0]
    c2 = c2 * jax.nn.sigmoid(c2)
    phi = jnp.dot(c2.astype(BF16), cw2_ref[0],
                  preferred_element_type=jnp.float32)                          # (N*N,1)

    gate = jnp.tanh(phi).reshape(n, n, 1) * coords_range * em[:, :, None]
    trans = jnp.sum(cd * gate, axis=1) * inv_norm                              # (N,3)
    x_ref[0, 0] = ((pos + trans) * nm).astype(x_ref.dtype)

    ho = jnp.dot(h, wo_ref[0], preferred_element_type=jnp.float32) + bo_ref[0, 0]
    ho_ref[0, 0] = (ho * nm).astype(ho_ref.dtype)


def coord_embout(h_stk, e_attr_b, coord_diff, edge_mask, node_mask, pos, sp, *,
                 hidden, out_max, normalization_factor, coords_range=15.0):
    G, B, N, H = h_stk.shape
    E = e_attr_b.shape[-1]
    kern = functools.partial(_coord_embout_kernel, hidden=hidden,
                             inv_norm=1.0 / normalization_factor,
                             coords_range=coords_range)
    return pl.pallas_call(
        kern,
        out_shape=(jax.ShapeDtypeStruct((G, B, N, 3), F32),
                   jax.ShapeDtypeStruct((G, B, N, out_max), F32)),
        grid=(B, G),
        in_specs=[
            pl.BlockSpec((1, 1, N, H), lambda b, g: (g, b, 0, 0)),
            pl.BlockSpec((1, N, N, E), lambda b, g: (b, 0, 0, 0)),
            pl.BlockSpec((1, N, N, 3), lambda b, g: (b, 0, 0, 0)),
            pl.BlockSpec((1, N, N), lambda b, g: (b, 0, 0)),
            pl.BlockSpec((1, N, 1), lambda b, g: (b, 0, 0)),
            pl.BlockSpec((1, N, 3), lambda b, g: (b, 0, 0)),
            pl.BlockSpec((1, 2 * H + E, H), lambda b, g: (g, 0, 0)),
            pl.BlockSpec((1, 1, H), lambda b, g: (g, 0, 0)),
            pl.BlockSpec((1, H, H), lambda b, g: (g, 0, 0)),
            pl.BlockSpec((1, 1, H), lambda b, g: (g, 0, 0)),
            pl.BlockSpec((1, H, 1), lambda b, g: (g, 0, 0)),
            pl.BlockSpec((1, H, out_max), lambda b, g: (g, 0, 0)),
            pl.BlockSpec((1, 1, out_max), lambda b, g: (g, 0, 0)),
        ],
        out_specs=(pl.BlockSpec((1, 1, N, 3), lambda b, g: (g, b, 0, 0)),
                   pl.BlockSpec((1, 1, N, out_max), lambda b, g: (g, b, 0, 0))),
        compiler_params=pltpu.CompilerParams(
            dimension_semantics=("parallel", "arbitrary"),
            vmem_limit_bytes=_VMEM_LIMIT),
    )(h_stk, e_attr_b, coord_diff, edge_mask, node_mask, pos,
      sp["cw0"], sp["cb0"], sp["cw1"], sp["cb1"], sp["cw2"],
      sp["wo"], sp["bo"])


# ----------------------------------------------------------------------------
# Pallas kernel C: attention scores
#   A[b] = mean_h tanh( Q_h @ K_h^T / sqrt(out_dim) ),  symmetrized
# ----------------------------------------------------------------------------
def _attn_kernel(q_ref, k_ref, a_ref, *, scale, inv_heads):
    q = q_ref[...]                        # (Bt, Hc, N, ds) bf16
    k = k_ref[...]
    bt, hc, n, ds = q.shape
    q2 = q.reshape(bt * hc, n, ds)
    k2 = k.reshape(bt * hc, n, ds)
    s = jax.lax.dot_general(q2, k2, (((2,), (2,)), ((0,), (0,))),
                            preferred_element_type=jnp.float32)                # (Bt*Hc,N,N)
    s = s.reshape(bt, hc, n, n)
    a = jnp.sum(jnp.tanh(s * scale), axis=1) * inv_heads                       # (Bt,N,N)
    a_ref[...] = 0.5 * (a + jnp.swapaxes(a, -1, -2))


def _pick_bt(batch):
    if batch < 2:
        return 1
    cap = min(8, batch // 2)              # keep >=2 grid steps for megacore
    for d in range(cap, 0, -1):
        if batch % d == 0:
            return d
    return 1


def attention_scores(Q, K, dim_split, out_dim):
    B, N, D = Q.shape
    n_chunks = -(-D // dim_split)         # ceil; zero-pad matches torch split/cat
    D_pad = n_chunks * dim_split
    if D_pad != D:
        pad = ((0, 0), (0, 0), (0, D_pad - D))
        Q = jnp.pad(Q, pad)
        K = jnp.pad(K, pad)
    qs = Q.reshape(B, N, n_chunks, dim_split).transpose(0, 2, 1, 3).astype(BF16)
    ks = K.reshape(B, N, n_chunks, dim_split).transpose(0, 2, 1, 3).astype(BF16)
    Bt = _pick_bt(B)
    kern = functools.partial(_attn_kernel, scale=1.0 / math.sqrt(out_dim),
                             inv_heads=1.0 / n_chunks)
    return pl.pallas_call(
        kern,
        out_shape=jax.ShapeDtypeStruct((B, N, N), F32),
        grid=(B // Bt,),
        in_specs=[
            pl.BlockSpec((Bt, n_chunks, N, dim_split), lambda i: (i, 0, 0, 0)),
            pl.BlockSpec((Bt, n_chunks, N, dim_split), lambda i: (i, 0, 0, 0)),
        ],
        out_specs=pl.BlockSpec((Bt, N, N), lambda i: (i, 0, 0)),
        compiler_params=pltpu.CompilerParams(
            dimension_semantics=("parallel",),
            vmem_limit_bytes=_VMEM_LIMIT),
    )(qs, ks)


# ----------------------------------------------------------------------------
# Parameter stacking (Q/K/V branches along axis 0)
# ----------------------------------------------------------------------------
def _stack_params(params_qkv, out_dims):
    branches = (params_qkv["q"], params_qkv["k"], params_qkv["v"])

    def stack(get):
        return jnp.stack([get(p) for p in branches], axis=0)

    max_out = max(out_dims)               # pad q/k emb_out to v width (lane-denser)
    emb_out_w = jnp.stack(
        [jnp.pad(p["emb_out"][0], ((0, 0), (0, max_out - od)))
         for p, od in zip(branches, out_dims)], axis=0)
    emb_out_b = jnp.stack(
        [jnp.pad(p["emb_out"][1], ((0, max_out - od),))
         for p, od in zip(branches, out_dims)], axis=0)

    return {
        "win": stack(lambda p: p["emb_in"][0]).astype(BF16),
        "bin": stack(lambda p: p["emb_in"][1])[:, None, :].astype(F32),
        "ew0": stack(lambda p: p["edge_mlp"][0][0]).astype(BF16),
        "eb0": stack(lambda p: p["edge_mlp"][0][1])[:, None, :].astype(F32),
        "ew1": stack(lambda p: p["edge_mlp"][1][0]).astype(BF16),
        "eb1": stack(lambda p: p["edge_mlp"][1][1])[:, None, :].astype(F32),
        "wa": stack(lambda p: p["att_mlp"][0]).astype(BF16),
        "ba": stack(lambda p: p["att_mlp"][1])[:, None, :].astype(F32),
        "nw0": stack(lambda p: p["node_mlp"][0][0]).astype(BF16),
        "nb0": stack(lambda p: p["node_mlp"][0][1])[:, None, :].astype(F32),
        "nw1": stack(lambda p: p["node_mlp"][1][0]).astype(BF16),
        "nb1": stack(lambda p: p["node_mlp"][1][1])[:, None, :].astype(F32),
        "cw0": stack(lambda p: p["coord_mlp"][0][0]).astype(BF16),
        "cb0": stack(lambda p: p["coord_mlp"][0][1])[:, None, :].astype(F32),
        "cw1": stack(lambda p: p["coord_mlp"][1][0]).astype(BF16),
        "cb1": stack(lambda p: p["coord_mlp"][1][1])[:, None, :].astype(F32),
        "cw2": stack(lambda p: p["coord_mlp"][2][0]).astype(BF16),
        "wo": emb_out_w.astype(BF16),
        "bo": emb_out_b[:, None, :].astype(F32),
    }


# ----------------------------------------------------------------------------
# Batched EGNN forward (Q/K/V branches together, dense fully-connected graph)
# ----------------------------------------------------------------------------
def egnn_batched_forward(params_qkv, x_feat, pos, adj, node_mask, edge_mask, *,
                         hidden, out_dims, norm_constant=1.0,
                         coords_range=15.0, normalization_factor=4.0):
    """x_feat: (B,N,in_dim), pos: (B,N,3), adj: (B,N,N),
    node_mask: (B,N,1), edge_mask: (B,N,N).
    Returns ([Q_x, K_x, V_x], x_stacked (3,B,N,3))."""
    B, N, _ = x_feat.shape
    G, H = 3, hidden

    # shared geometric edge features (identical for all three branches)
    diff = pos[:, :, None, :] - pos[:, None, :, :]                    # (B,N,N,3)
    radial = jnp.sum(diff * diff, axis=-1, keepdims=True)             # (B,N,N,1)
    norm = jnp.sqrt(radial + 1e-8)
    coord_diff = (diff / (norm + norm_constant)).astype(F32)
    # [block distances, egnn distances, adj]  (radial is norm-constant independent)
    e_attr_b = jnp.concatenate([radial, radial, adj[..., None]], axis=-1).astype(BF16)

    sp = _stack_params(params_qkv, out_dims)
    edge_mask_f = edge_mask.astype(F32)
    node_mask_f = node_mask.astype(F32)

    # fused: emb_in + GCL edge path + aggregation + node MLP + residual + mask
    h = gcl_fused(x_feat.astype(BF16), e_attr_b, edge_mask_f, node_mask_f, sp,
                  hidden=H, normalization_factor=normalization_factor)   # (G,B,N,H) bf16

    # fused: EquivariantUpdate coord path + emb_out
    x_out, h_out = coord_embout(h, e_attr_b, coord_diff, edge_mask_f,
                                node_mask_f, pos.astype(F32), sp,
                                hidden=H, out_max=max(out_dims),
                                normalization_factor=normalization_factor,
                                coords_range=coords_range)
    outs = [h_out[g, ..., :out_dims[g]] for g in range(G)]
    return outs, x_out


def remove_mean_with_mask(x, node_mask):
    n = jnp.sum(node_mask, axis=1, keepdims=True)
    mean = jnp.sum(x, axis=1, keepdims=True) / n
    return x - mean * node_mask


# ----------------------------------------------------------------------------
# Attention.forward
# ----------------------------------------------------------------------------
def attention_forward(params, x, pos, adj, flags, node_mask, edge_mask, *,
                      attn_dim, out_dim, num_heads, normalization_factor=4.0):
    out_dims = (out_dim - 3, out_dim - 3, out_dim)
    (Q_x, K_x, V_x), x_stk = egnn_batched_forward(
        params, x, pos, adj, node_mask, edge_mask,
        hidden=attn_dim, out_dims=out_dims,
        normalization_factor=normalization_factor)

    fmask = flags[..., None]
    Q_p = remove_mean_with_mask(x_stk[0], fmask)
    K_p = remove_mean_with_mask(x_stk[1], fmask)
    V_p = remove_mean_with_mask(x_stk[2], fmask)

    Q = jnp.concatenate([Q_x, Q_p], axis=-1)    # (B, N, out_dim)
    K = jnp.concatenate([K_x, K_p], axis=-1)    # (B, N, out_dim)

    dim_split = attn_dim // num_heads
    A = attention_scores(Q, K, dim_split, out_dim)   # (B, N, N)
    return V_x, V_p, A


# ----------------------------------------------------------------------------
# Deterministic parameter initialization
# ----------------------------------------------------------------------------
def _init_linear(key, fan_in, fan_out, bias=True, bound=None):
    k1, k2 = jax.random.split(key)
    if bound is None:
        bound = 1.0 / math.sqrt(fan_in)
    w = jax.random.uniform(k1, (fan_in, fan_out), F32, -bound, bound)
    b = (jax.random.uniform(k2, (fan_out,), F32, -bound, bound)
         if bias else None)
    return (w, b)


def init_egnn_params(key, in_dim, hidden, out_nf):
    ks = jax.random.split(key, 10)
    edge_in = 2 * hidden + 3
    return {
        "emb_in":  _init_linear(ks[0], in_dim, hidden),
        "edge_mlp": [_init_linear(ks[1], edge_in, hidden),
                     _init_linear(ks[2], hidden, hidden)],
        "att_mlp": _init_linear(ks[3], hidden, 1),
        "node_mlp": [_init_linear(ks[4], 2 * hidden, hidden),
                     _init_linear(ks[5], hidden, hidden)],
        "coord_mlp": [_init_linear(ks[6], edge_in, hidden),
                      _init_linear(ks[7], hidden, hidden),
                      _init_linear(ks[8], hidden, 1, bias=False,
                                   bound=0.001 * math.sqrt(6.0 / (hidden + 1)))],
        "emb_out": _init_linear(ks[9], hidden, out_nf),
    }


# ----------------------------------------------------------------------------
if __name__ == "__main__":
    key = jax.random.PRNGKey(0)
    B, N = 2, 8
    in_dim, attn_dim, out_dim, num_heads = 4, 16, 16, 4

    k_param, kx, kp, ka = jax.random.split(key, 4)
    kq, kk, kv = jax.random.split(k_param, 3)
    params = {
        "q": init_egnn_params(kq, in_dim, attn_dim, out_dim - 3),
        "k": init_egnn_params(kk, in_dim, attn_dim, out_dim - 3),
        "v": init_egnn_params(kv, in_dim, attn_dim, out_dim),
    }

    # flags / masks (batch 0 fully present, batch 1 has 6 real nodes)
    n_real = jnp.array([[8], [6]])
    flags = (jnp.arange(N)[None, :] < n_real).astype(F32)              # (B, N)
    node_mask = flags[..., None]                                        # (B,N,1)
    eye = jnp.eye(N)[None]
    edge_mask = flags[:, :, None] * flags[:, None, :] * (1.0 - eye)     # (B,N,N)

    x = jax.random.normal(kx, (B, N, in_dim), F32) * node_mask
    pos = jax.random.normal(kp, (B, N, 3), F32) * node_mask
    a_raw = jax.random.uniform(ka, (B, N, N))
    adj = ((a_raw + jnp.swapaxes(a_raw, -1, -2)) * 0.5 > 0.5).astype(F32)
    adj = adj * edge_mask

    fwd = jax.jit(functools.partial(attention_forward,
                                    attn_dim=attn_dim, out_dim=out_dim,
                                    num_heads=num_heads,
                                    normalization_factor=4.0))
    V_x, V_p, A = fwd(params, x, pos, adj, flags, node_mask, edge_mask)
    jax.block_until_ready((V_x, V_p, A))

    assert V_x.shape == (B, N, out_dim)
    assert V_p.shape == (B, N, 3)
    assert A.shape == (B, N, N)
    print("KERNEL_OK")
</pallas_src>

<mosaic_0001>
module attributes {stable_mosaic.version = 11 : i64} {
  func.func @_coord_embout_kernel(%arg0: i32, %arg1: i32, %arg2: memref<1x1x8x16xbf16, #tpu.memory_space<vmem>>, %arg3: memref<1x8x8x3xbf16, #tpu.memory_space<vmem>>, %arg4: memref<1x8x8x3xf32, #tpu.memory_space<vmem>>, %arg5: memref<1x8x8xf32, #tpu.memory_space<vmem>>, %arg6: memref<1x8x1xf32, #tpu.memory_space<vmem>>, %arg7: memref<1x8x3xf32, #tpu.memory_space<vmem>>, %arg8: memref<1x35x16xbf16, #tpu.memory_space<vmem>>, %arg9: memref<1x1x16xf32, #tpu.memory_space<vmem>>, %arg10: memref<1x16x16xbf16, #tpu.memory_space<vmem>>, %arg11: memref<1x1x16xf32, #tpu.memory_space<vmem>>, %arg12: memref<1x16x1xbf16, #tpu.memory_space<vmem>>, %arg13: memref<1x16x16xbf16, #tpu.memory_space<vmem>>, %arg14: memref<1x1x16xf32, #tpu.memory_space<vmem>>, %arg15: memref<1x1x8x3xf32, #tpu.memory_space<vmem>>, %arg16: memref<1x1x8x16xf32, #tpu.memory_space<vmem>>) attributes {dimension_semantics = [#tpu.dimension_semantics<parallel>, #tpu.dimension_semantics<arbitrary>], iteration_bounds = array<i64: 2, 3>, scalar_prefetch = 0 : i64, scratch_operands = 0 : i64, tpu.core_type = #tpu.core_type<tc>, window_params = [{transform_indices = @transform_0, window_bounds = array<i64: 1, 1, 8, 16>}, {transform_indices = @transform_1, window_bounds = array<i64: 1, 8, 8, 3>}, {transform_indices = @transform_2, window_bounds = array<i64: 1, 8, 8, 3>}, {transform_indices = @transform_3, window_bounds = array<i64: 1, 8, 8>}, {transform_indices = @transform_4, window_bounds = array<i64: 1, 8, 1>}, {transform_indices = @transform_5, window_bounds = array<i64: 1, 8, 3>}, {transform_indices = @transform_6, window_bounds = array<i64: 1, 35, 16>}, {transform_indices = @transform_7, window_bounds = array<i64: 1, 1, 16>}, {transform_indices = @transform_8, window_bounds = array<i64: 1, 16, 16>}, {transform_indices = @transform_9, window_bounds = array<i64: 1, 1, 16>}, {transform_indices = @transform_10, window_bounds = array<i64: 1, 16, 1>}, {transform_indices = @transform_11, window_bounds = array<i64: 1, 16, 16>}, {transform_indices = @transform_12, window_bounds = array<i64: 1, 1, 16>}, {transform_indices = @transform_13, window_bounds = array<i64: 1, 1, 8, 3>}, {transform_indices = @transform_14, window_bounds = array<i64: 1, 1, 8, 16>}]} {
    %c0 = arith.constant 0 : index
    %c0_0 = arith.constant 0 : index
    %c0_1 = arith.constant 0 : index
    %c0_2 = arith.constant 0 : index
    %0 = vector.load %arg2[%c0, %c0_0, %c0_1, %c0_2] : memref<1x1x8x16xbf16, #tpu.memory_space<vmem>>, vector<1x1x8x16xbf16>
    %1 = vector.shape_cast %0 : vector<1x1x8x16xbf16> to vector<8x16xbf16>
    %c0_3 = arith.constant 0 : index
    %c0_4 = arith.constant 0 : index
    %c0_5 = arith.constant 0 : index
    %c0_6 = arith.constant 0 : index
    %2 = vector.load %arg3[%c0_3, %c0_4, %c0_5, %c0_6] : memref<1x8x8x3xbf16, #tpu.memory_space<vmem>>, vector<1x8x8x3xbf16>
    %3 = vector.shape_cast %2 : vector<1x8x8x3xbf16> to vector<8x8x3xbf16>
    %c0_7 = arith.constant 0 : index
    %c0_8 = arith.constant 0 : index
    %c0_9 = arith.constant 0 : index
    %c0_10 = arith.constant 0 : index
    %4 = vector.load %arg4[%c0_7, %c0_8, %c0_9, %c0_10] : memref<1x8x8x3xf32, #tpu.memory_space<vmem>>, vector<1x8x8x3xf32>
    %5 = vector.shape_cast %4 : vector<1x8x8x3xf32> to vector<8x8x3xf32>
    %c0_11 = arith.constant 0 : index
    %c0_12 = arith.constant 0 : index
    %c0_13 = arith.constant 0 : index
    %6 = vector.load %arg5[%c0_11, %c0_12, %c0_13] : memref<1x8x8xf32, #tpu.memory_space<vmem>>, vector<1x8x8xf32>
    %7 = vector.shape_cast %6 : vector<1x8x8xf32> to vector<8x8xf32>
    %c0_14 = arith.constant 0 : index
    %c0_15 = arith.constant 0 : index
    %c0_16 = arith.constant 0 : index
    %8 = vector.load %arg6[%c0_14, %c0_15, %c0_16] : memref<1x8x1xf32, #tpu.memory_space<vmem>>, vector<1x8x1xf32>
    %9 = vector.shape_cast %8 : vector<1x8x1xf32> to vector<8x1xf32>
    %c0_17 = arith.constant 0 : index
    %c0_18 = arith.constant 0 : index
    %c0_19 = arith.constant 0 : index
    %10 = vector.load %arg7[%c0_17, %c0_18, %c0_19] : memref<1x8x3xf32, #tpu.memory_space<vmem>>, vector<1x8x3xf32>
    %11 = vector.shape_cast %10 : vector<1x8x3xf32> to vector<8x3xf32>
    %c0_20 = arith.constant 0 : index
    %c0_21 = arith.constant 0 : index
    %c0_22 = arith.constant 0 : index
    %12 = vector.load %arg8[%c0_20, %c0_21, %c0_22] : memref<1x35x16xbf16, #tpu.memory_space<vmem>>, vector<1x35x16xbf16>
    %13 = vector.shape_cast %12 : vector<1x35x16xbf16> to vector<35x16xbf16>
    %14 = vector.extract_strided_slice %13 {offsets = [0, 0], sizes = [16, 16], strides = [1, 1]} : vector<35x16xbf16> to vector<16x16xbf16>
    %cst = arith.constant dense<0.000000e+00> : vector<8x16xf32>
    %15 = tpu.matmul %1, %14, %cst {dimension_numbers = #tpu.dot_dimension_numbers<[1], [0], [0], [1], [0, 0, 1, 1], [], []>} : vector<8x16xbf16>, vector<16x16xbf16>, vector<8x16xf32> -> vector<8x16xf32>
    %16 = vector.extract_strided_slice %13 {offsets = [16, 0], sizes = [16, 16], strides = [1, 1]} : vector<35x16xbf16> to vector<16x16xbf16>
    %cst_23 = arith.constant dense<0.000000e+00> : vector<8x16xf32>
    %17 = tpu.matmul %1, %16, %cst_23 {dimension_numbers = #tpu.dot_dimension_numbers<[1], [0], [0], [1], [0, 0, 1, 1], [], []>} : vector<8x16xbf16>, vector<16x16xbf16>, vector<8x16xf32> -> vector<8x16xf32>
    %18 = vector.shape_cast %3 : vector<8x8x3xbf16> to vector<64x3xbf16>
    %19 = vector.extract_strided_slice %13 {offsets = [32, 0], sizes = [3, 16], strides = [1, 1]} : vector<35x16xbf16> to vector<3x16xbf16>
    %cst_24 = arith.constant dense<0.000000e+00> : vector<64x16xf32>
    %20 = tpu.matmul %18, %19, %cst_24 {dimension_numbers = #tpu.dot_dimension_numbers<[1], [0], [0], [1], [0, 0, 1, 1], [], []>} : vector<64x3xbf16>, vector<3x16xbf16>, vector<64x16xf32> -> vector<64x16xf32>
    %21 = vector.shape_cast %20 : vector<64x16xf32> to vector<8x8x16xf32>
    %22 = vector.shape_cast %15 : vector<8x16xf32> to vector<8x1x16xf32>
    %23 = vector.broadcast %22 : vector<8x1x16xf32> to vector<8x8x16xf32>
    %24 = arith.addf %21, %23 : vector<8x8x16xf32>
    %25 = vector.shape_cast %17 : vector<8x16xf32> to vector<1x8x16xf32>
    %26 = vector.broadcast %25 : vector<1x8x16xf32> to vector<8x8x16xf32>
    %27 = arith.addf %24, %26 : vector<8x8x16xf32>
    %c0_25 = arith.constant 0 : index
    %c0_26 = arith.constant 0 : index
    %c0_27 = arith.constant 0 : index
    %28 = vector.load %arg9[%c0_25, %c0_26, %c0_27] : memref<1x1x16xf32, #tpu.memory_space<vmem>>, vector<1x1x16xf32>
    %29 = vector.shape_cast %28 : vector<1x1x16xf32> to vector<16xf32>
    %30 = vector.shape_cast %29 : vector<16xf32> to vector<1x1x16xf32>
    %31 = vector.broadcast %30 : vector<1x1x16xf32> to vector<8x8x16xf32>
    %32 = arith.addf %27, %31 : vector<8x8x16xf32>
    %33 = arith.negf %32 : vector<8x8x16xf32>
    %34 = math.exp %33 : vector<8x8x16xf32>
    %cst_28 = arith.constant 1.000000e+00 : f32
    %35 = vector.broadcast %cst_28 : f32 to vector<8x8x16xf32>
    %36 = arith.addf %35, %34 : vector<8x8x16xf32>
    %37 = arith.divf %35, %36 : vector<8x8x16xf32>
    %38 = arith.mulf %32, %37 : vector<8x8x16xf32>
    %39 = vector.shape_cast %38 : vector<8x8x16xf32> to vector<64x16xf32>
    %40 = arith.truncf %39 : vector<64x16xf32> to vector<64x16xbf16>
    %c0_29 = arith.constant 0 : index
    %c0_30 = arith.constant 0 : index
    %c0_31 = arith.constant 0 : index
    %41 = vector.load %arg10[%c0_29, %c0_30, %c0_31] : memref<1x16x16xbf16, #tpu.memory_space<vmem>>, vector<1x16x16xbf16>
    %42 = vector.shape_cast %41 : vector<1x16x16xbf16> to vector<16x16xbf16>
    %cst_32 = arith.constant dense<0.000000e+00> : vector<64x16xf32>
    %43 = tpu.matmul %40, %42, %cst_32 {dimension_numbers = #tpu.dot_dimension_numbers<[1], [0], [0], [1], [0, 0, 1, 1], [], []>} : vector<64x16xbf16>, vector<16x16xbf16>, vector<64x16xf32> -> vector<64x16xf32>
    %c0_33 = arith.constant 0 : index
    %c0_34 = arith.constant 0 : index
    %c0_35 = arith.constant 0 : index
    %44 = vector.load %arg11[%c0_33, %c0_34, %c0_35] : memref<1x1x16xf32, #tpu.memory_space<vmem>>, vector<1x1x16xf32>
    %45 = vector.shape_cast %44 : vector<1x1x16xf32> to vector<16xf32>
    %46 = vector.shape_cast %45 : vector<16xf32> to vector<1x16xf32>
    %47 = vector.broadcast %46 : vector<1x16xf32> to vector<64x16xf32>
    %48 = arith.addf %43, %47 : vector<64x16xf32>
    %49 = arith.negf %48 : vector<64x16xf32>
    %50 = math.exp %49 : vector<64x16xf32>
    %cst_36 = arith.constant 1.000000e+00 : f32
    %51 = vector.broadcast %cst_36 : f32 to vector<64x16xf32>
    %52 = arith.addf %51, %50 : vector<64x16xf32>
    %53 = arith.divf %51, %52 : vector<64x16xf32>
    %54 = arith.mulf %48, %53 : vector<64x16xf32>
    %55 = arith.truncf %54 : vector<64x16xf32> to vector<64x16xbf16>
    %c0_37 = arith.constant 0 : index
    %c0_38 = arith.constant 0 : index
    %c0_39 = arith.constant 0 : index
    %56 = vector.load %arg12[%c0_37, %c0_38, %c0_39] : memref<1x16x1xbf16, #tpu.memory_space<vmem>>, vector<1x16x1xbf16>
    %57 = vector.shape_cast %56 : vector<1x16x1xbf16> to vector<16x1xbf16>
    %cst_40 = arith.constant dense<0.000000e+00> : vector<64x1xf32>
    %58 = tpu.matmul %55, %57, %cst_40 {dimension_numbers = #tpu.dot_dimension_numbers<[1], [0], [0], [1], [0, 0, 1, 1], [], []>} : vector<64x16xbf16>, vector<16x1xbf16>, vector<64x1xf32> -> vector<64x1xf32>
    %59 = math.tanh %58 : vector<64x1xf32>
    %60 = vector.shape_cast %59 : vector<64x1xf32> to vector<8x8x1xf32>
    %cst_41 = arith.constant 1.500000e+01 : f32
    %61 = vector.broadcast %cst_41 : f32 to vector<8x8x1xf32>
    %62 = arith.mulf %60, %61 : vector<8x8x1xf32>
    %63 = vector.shape_cast %7 : vector<8x8xf32> to vector<8x8x1xf32>
    %64 = arith.mulf %62, %63 : vector<8x8x1xf32>
    %65 = vector.broadcast %64 : vector<8x8x1xf32> to vector<8x8x3xf32>
    %66 = arith.mulf %5, %65 : vector<8x8x3xf32>
    %cst_42 = arith.constant dense<0.000000e+00> : vector<8x3xf32>
    %67 = vector.multi_reduction <add>, %66, %cst_42 [1] : vector<8x8x3xf32> to vector<8x3xf32>
    %cst_43 = arith.constant 2.500000e-01 : f32
    %68 = vector.broadcast %cst_43 : f32 to vector<8x3xf32>
    %69 = arith.mulf %67, %68 : vector<8x3xf32>
    %70 = arith.addf %11, %69 : vector<8x3xf32>
    %71 = vector.broadcast %9 : vector<8x1xf32> to vector<8x3xf32>
    %72 = arith.mulf %70, %71 : vector<8x3xf32>
    %c0_44 = arith.constant 0 : index
    %c0_45 = arith.constant 0 : index
    %c0_46 = arith.constant 0 : index
    %c0_47 = arith.constant 0 : index
    %73 = vector.load %arg15[%c0_44, %c0_45, %c0_46, %c0_47] : memref<1x1x8x3xf32, #tpu.memory_space<vmem>>, vector<1x1x8x3xf32>
    %74 = vector.shape_cast %73 : vector<1x1x8x3xf32> to vector<8x3xf32>
    %75 = vector.shape_cast %72 : vector<8x3xf32> to vector<1x1x8x3xf32>
    tpu.vector_store %arg15[%c0_44, %c0_45, %c0_46, %c0_47], %75 {strides = array<i32>} : memref<1x1x8x3xf32, #tpu.memory_space<vmem>>, vector<1x1x8x3xf32>,
    %c0_48 = arith.constant 0 : index
    %c0_49 = arith.constant 0 : index
    %c0_50 = arith.constant 0 : index
    %76 = vector.load %arg13[%c0_48, %c0_49, %c0_50] : memref<1x16x16xbf16, #tpu.memory_space<vmem>>, vector<1x16x16xbf16>
    %77 = vector.shape_cast %76 : vector<1x16x16xbf16> to vector<16x16xbf16>
    %cst_51 = arith.constant dense<0.000000e+00> : vector<8x16xf32>
    %78 = tpu.matmul %1, %77, %cst_51 {dimension_numbers = #tpu.dot_dimension_numbers<[1], [0], [0], [1], [0, 0, 1, 1], [], []>} : vector<8x16xbf16>, vector<16x16xbf16>, vector<8x16xf32> -> vector<8x16xf32>
    %c0_52 = arith.constant 0 : index
    %c0_53 = arith.constant 0 : index
    %c0_54 = arith.constant 0 : index
    %79 = vector.load %arg14[%c0_52, %c0_53, %c0_54] : memref<1x1x16xf32, #tpu.memory_space<vmem>>, vector<1x1x16xf32>
    %80 = vector.shape_cast %79 : vector<1x1x16xf32> to vector<16xf32>
    %81 = vector.shape_cast %80 : vector<16xf32> to vector<1x16xf32>
    %82 = vector.broadcast %81 : vector<1x16xf32> to vector<8x16xf32>
    %83 = arith.addf %78, %82 : vector<8x16xf32>
    %84 = vector.broadcast %9 : vector<8x1xf32> to vector<8x16xf32>
    %85 = arith.mulf %83, %84 : vector<8x16xf32>
    %c0_55 = arith.constant 0 : index
    %c0_56 = arith.constant 0 : index
    %c0_57 = arith.constant 0 : index
    %c0_58 = arith.constant 0 : index
    %86 = vector.load %arg16[%c0_55, %c0_56, %c0_57, %c0_58] : memref<1x1x8x16xf32, #tpu.memory_space<vmem>>, vector<1x1x8x16xf32>
    %87 = vector.shape_cast %86 : vector<1x1x8x16xf32> to vector<8x16xf32>
    %88 = vector.shape_cast %85 : vector<8x16xf32> to vector<1x1x8x16xf32>
    tpu.vector_store %arg16[%c0_55, %c0_56, %c0_57, %c0_58], %88 {strides = array<i32>} : memref<1x1x8x16xf32, #tpu.memory_space<vmem>>, vector<1x1x8x16xf32>,
    return
  }
  func.func @transform_0(%arg0: i32, %arg1: i32) -> (i32, i32, i32, i32) {
    %c0_i32 = arith.constant 0 : i32
    %c0_i32_0 = arith.constant 0 : i32
    %c0_i32_1 = arith.constant 0 : i32
    return %arg1, %arg0, %c0_i32, %c0_i32_0 : i32, i32, i32, i32
  }
  func.func @transform_1(%arg0: i32, %arg1: i32) -> (i32, i32, i32, i32) {
    %c0_i32 = arith.constant 0 : i32
    %c0_i32_0 = arith.constant 0 : i32
    %c0_i32_1 = arith.constant 0 : i32
    %c0_i32_2 = arith.constant 0 : i32
    return %arg0, %c0_i32, %c0_i32_0, %c0_i32_1 : i32, i32, i32, i32
  }
  func.func @transform_2(%arg0: i32, %arg1: i32) -> (i32, i32, i32, i32) {
    %c0_i32 = arith.constant 0 : i32
    %c0_i32_0 = arith.constant 0 : i32
    %c0_i32_1 = arith.constant 0 : i32
    %c0_i32_2 = arith.constant 0 : i32
    return %arg0, %c0_i32, %c0_i32_0, %c0_i32_1 : i32, i32, i32, i32
  }
  func.func @transform_3(%arg0: i32, %arg1: i32) -> (i32, i32, i32) {
    %c0_i32 = arith.constant 0 : i32
    %c0_i32_0 = arith.constant 0 : i32
    %c0_i32_1 = arith.constant 0 : i32
    return %arg0, %c0_i32, %c0_i32_0 : i32, i32, i32
  }
  func.func @transform_4(%arg0: i32, %arg1: i32) -> (i32, i32, i32) {
    %c0_i32 = arith.constant 0 : i32
    %c0_i32_0 = arith.constant 0 : i32
    %c0_i32_1 = arith.constant 0 : i32
    return %arg0, %c0_i32, %c0_i32_0 : i32, i32, i32
  }
  func.func @transform_5(%arg0: i32, %arg1: i32) -> (i32, i32, i32) {
    %c0_i32 = arith.constant 0 : i32
    %c0_i32_0 = arith.constant 0 : i32
    %c0_i32_1 = arith.constant 0 : i32
    return %arg0, %c0_i32, %c0_i32_0 : i32, i32, i32
  }
  func.func @transform_6(%arg0: i32, %arg1: i32) -> (i32, i32, i32) {
    %c0_i32 = arith.constant 0 : i32
    %c0_i32_0 = arith.constant 0 : i32
    %c0_i32_1 = arith.constant 0 : i32
    return %arg1, %c0_i32, %c0_i32_0 : i32, i32, i32
  }
  func.func @transform_7(%arg0: i32, %arg1: i32) -> (i32, i32, i32) {
    %c0_i32 = arith.constant 0 : i32
    %c0_i32_0 = arith.constant 0 : i32
    %c0_i32_1 = arith.constant 0 : i32
    return %arg1, %c0_i32, %c0_i32_0 : i32, i32, i32
  }
  func.func @transform_8(%arg0: i32, %arg1: i32) -> (i32, i32, i32) {
    %c0_i32 = arith.constant 0 : i32
    %c0_i32_0 = arith.constant 0 : i32
    %c0_i32_1 = arith.constant 0 : i32
    return %arg1, %c0_i32, %c0_i32_0 : i32, i32, i32
  }
  func.func @transform_9(%arg0: i32, %arg1: i32) -> (i32, i32, i32) {
    %c0_i32 = arith.constant 0 : i32
    %c0_i32_0 = arith.constant 0 : i32
    %c0_i32_1 = arith.constant 0 : i32
    return %arg1, %c0_i32, %c0_i32_0 : i32, i32, i32
  }
  func.func @transform_10(%arg0: i32, %arg1: i32) -> (i32, i32, i32) {
    %c0_i32 = arith.constant 0 : i32
    %c0_i32_0 = arith.constant 0 : i32
    %c0_i32_1 = arith.constant 0 : i32
    return %arg1, %c0_i32, %c0_i32_0 : i32, i32, i32
  }
  func.func @transform_11(%arg0: i32, %arg1: i32) -> (i32, i32, i32) {
    %c0_i32 = arith.constant 0 : i32
    %c0_i32_0 = arith.constant 0 : i32
    %c0_i32_1 = arith.constant 0 : i32
    return %arg1, %c0_i32, %c0_i32_0 : i32, i32, i32
  }
  func.func @transform_12(%arg0: i32, %arg1: i32) -> (i32, i32, i32) {
    %c0_i32 = arith.constant 0 : i32
    %c0_i32_0 = arith.constant 0 : i32
    %c0_i32_1 = arith.constant 0 : i32
    return %arg1, %c0_i32, %c0_i32_0 : i32, i32, i32
  }
  func.func @transform_13(%arg0: i32, %arg1: i32) -> (i32, i32, i32, i32) {
    %c0_i32 = arith.constant 0 : i32
    %c0_i32_0 = arith.constant 0 : i32
    %c0_i32_1 = arith.constant 0 : i32
    return %arg1, %arg0, %c0_i32, %c0_i32_0 : i32, i32, i32, i32
  }
  func.func @transform_14(%arg0: i32, %arg1: i32) -> (i32, i32, i32, i32) {
    %c0_i32 = arith.constant 0 : i32
    %c0_i32_0 = arith.constant 0 : i32
    %c0_i32_1 = arith.constant 0 : i32
    return %arg1, %arg0, %c0_i32, %c0_i32_0 : i32, i32, i32, i32
  }
}

module attributes {stable_mosaic.version = 11 : i64} {
  func.func @_gcl_fused_kernel(%arg0: i32, %arg1: i32, %arg2: memref<1x8x4xbf16, #tpu.memory_space<vmem>>, %arg3: memref<1x8x8x3xbf16, #tpu.memory_space<vmem>>, %arg4: memref<1x8x8xf32, #tpu.memory_space<vmem>>, %arg5: memref<1x8x1xf32, #tpu.memory_space<vmem>>, %arg6: memref<1x4x16xbf16, #tpu.memory_space<vmem>>, %arg7: memref<1x1x16xf32, #tpu.memory_space<vmem>>, %arg8: memref<1x35x16xbf16, #tpu.memory_space<vmem>>, %arg9: memref<1x1x16xf32, #tpu.memory_space<vmem>>, %arg10: memref<1x16x16xbf16, #tpu.memory_space<vmem>>, %arg11: memref<1x1x16xf32, #tpu.memory_space<vmem>>, %arg12: memref<1x16x1xbf16, #tpu.memory_space<vmem>>, %arg13: memref<1x1x1xf32, #tpu.memory_space<vmem>>, %arg14: memref<1x32x16xbf16, #tpu.memory_space<vmem>>, %arg15: memref<1x1x16xf32, #tpu.memory_space<vmem>>, %arg16: memref<1x16x16xbf16, #tpu.memory_space<vmem>>, %arg17: memref<1x1x16xf32, #tpu.memory_space<vmem>>, %arg18: memref<1x1x8x16xbf16, #tpu.memory_space<vmem>>) attributes {dimension_semantics = [#tpu.dimension_semantics<parallel>, #tpu.dimension_semantics<arbitrary>], iteration_bounds = array<i64: 2, 3>, scalar_prefetch = 0 : i64, scratch_operands = 0 : i64, tpu.core_type = #tpu.core_type<tc>, window_params = [{transform_indices = @transform_0, window_bounds = array<i64: 1, 8, 4>}, {transform_indices = @transform_1, window_bounds = array<i64: 1, 8, 8, 3>}, {transform_indices = @transform_2, window_bounds = array<i64: 1, 8, 8>}, {transform_indices = @transform_3, window_bounds = array<i64: 1, 8, 1>}, {transform_indices = @transform_4, window_bounds = array<i64: 1, 4, 16>}, {transform_indices = @transform_5, window_bounds = array<i64: 1, 1, 16>}, {transform_indices = @transform_6, window_bounds = array<i64: 1, 35, 16>}, {transform_indices = @transform_7, window_bounds = array<i64: 1, 1, 16>}, {transform_indices = @transform_8, window_bounds = array<i64: 1, 16, 16>}, {transform_indices = @transform_9, window_bounds = array<i64: 1, 1, 16>}, {transform_indices = @transform_10, window_bounds = array<i64: 1, 16, 1>}, {transform_indices = @transform_11, window_bounds = array<i64: 1, 1, 1>}, {transform_indices = @transform_12, window_bounds = array<i64: 1, 32, 16>}, {transform_indices = @transform_13, window_bounds = array<i64: 1, 1, 16>}, {transform_indices = @transform_14, window_bounds = array<i64: 1, 16, 16>}, {transform_indices = @transform_15, window_bounds = array<i64: 1, 1, 16>}, {transform_indices = @transform_16, window_bounds = array<i64: 1, 1, 8, 16>}]} {
    %c0 = arith.constant 0 : index
    %c0_0 = arith.constant 0 : index
    %c0_1 = arith.constant 0 : index
    %0 = vector.load %arg2[%c0, %c0_0, %c0_1] : memref<1x8x4xbf16, #tpu.memory_space<vmem>>, vector<1x8x4xbf16>
    %1 = vector.shape_cast %0 : vector<1x8x4xbf16> to vector<8x4xbf16>
    %c0_2 = arith.constant 0 : index
    %c0_3 = arith.constant 0 : index
    %c0_4 = arith.constant 0 : index
    %c0_5 = arith.constant 0 : index
    %2 = vector.load %arg3[%c0_2, %c0_3, %c0_4, %c0_5] : memref<1x8x8x3xbf16, #tpu.memory_space<vmem>>, vector<1x8x8x3xbf16>
    %3 = vector.shape_cast %2 : vector<1x8x8x3xbf16> to vector<8x8x3xbf16>
    %c0_6 = arith.constant 0 : index
    %c0_7 = arith.constant 0 : index
    %c0_8 = arith.constant 0 : index
    %4 = vector.load %arg4[%c0_6, %c0_7, %c0_8] : memref<1x8x8xf32, #tpu.memory_space<vmem>>, vector<1x8x8xf32>
    %5 = vector.shape_cast %4 : vector<1x8x8xf32> to vector<8x8xf32>
    %c0_9 = arith.constant 0 : index
    %c0_10 = arith.constant 0 : index
    %c0_11 = arith.constant 0 : index
    %6 = vector.load %arg5[%c0_9, %c0_10, %c0_11] : memref<1x8x1xf32, #tpu.memory_space<vmem>>, vector<1x8x1xf32>
    %7 = vector.shape_cast %6 : vector<1x8x1xf32> to vector<8x1xf32>
    %c0_12 = arith.constant 0 : index
    %c0_13 = arith.constant 0 : index
    %c0_14 = arith.constant 0 : index
    %8 = vector.load %arg6[%c0_12, %c0_13, %c0_14] : memref<1x4x16xbf16, #tpu.memory_space<vmem>>, vector<1x4x16xbf16>
    %9 = vector.shape_cast %8 : vector<1x4x16xbf16> to vector<4x16xbf16>
    %cst = arith.constant dense<0.000000e+00> : vector<8x16xf32>
    %10 = tpu.matmul %1, %9, %cst {dimension_numbers = #tpu.dot_dimension_numbers<[1], [0], [0], [1], [0, 0, 1, 1], [], []>} : vector<8x4xbf16>, vector<4x16xbf16>, vector<8x16xf32> -> vector<8x16xf32>
    %c0_15 = arith.constant 0 : index
    %c0_16 = arith.constant 0 : index
    %c0_17 = arith.constant 0 : index
    %11 = vector.load %arg7[%c0_15, %c0_16, %c0_17] : memref<1x1x16xf32, #tpu.memory_space<vmem>>, vector<1x1x16xf32>
    %12 = vector.shape_cast %11 : vector<1x1x16xf32> to vector<16xf32>
    %13 = vector.shape_cast %12 : vector<16xf32> to vector<1x16xf32>
    %14 = vector.broadcast %13 : vector<1x16xf32> to vector<8x16xf32>
    %15 = arith.addf %10, %14 : vector<8x16xf32>
    %16 = arith.truncf %15 : vector<8x16xf32> to vector<8x16xbf16>
    %c0_18 = arith.constant 0 : index
    %c0_19 = arith.constant 0 : index
    %c0_20 = arith.constant 0 : index
    %17 = vector.load %arg8[%c0_18, %c0_19, %c0_20] : memref<1x35x16xbf16, #tpu.memory_space<vmem>>, vector<1x35x16xbf16>
    %18 = vector.shape_cast %17 : vector<1x35x16xbf16> to vector<35x16xbf16>
    %19 = vector.extract_strided_slice %18 {offsets = [0, 0], sizes = [16, 16], strides = [1, 1]} : vector<35x16xbf16> to vector<16x16xbf16>
    %cst_21 = arith.constant dense<0.000000e+00> : vector<8x16xf32>
    %20 = tpu.matmul %16, %19, %cst_21 {dimension_numbers = #tpu.dot_dimension_numbers<[1], [0], [0], [1], [0, 0, 1, 1], [], []>} : vector<8x16xbf16>, vector<16x16xbf16>, vector<8x16xf32> -> vector<8x16xf32>
    %21 = vector.extract_strided_slice %18 {offsets = [16, 0], sizes = [16, 16], strides = [1, 1]} : vector<35x16xbf16> to vector<16x16xbf16>
    %cst_22 = arith.constant dense<0.000000e+00> : vector<8x16xf32>
    %22 = tpu.matmul %16, %21, %cst_22 {dimension_numbers = #tpu.dot_dimension_numbers<[1], [0], [0], [1], [0, 0, 1, 1], [], []>} : vector<8x16xbf16>, vector<16x16xbf16>, vector<8x16xf32> -> vector<8x16xf32>
    %23 = vector.shape_cast %3 : vector<8x8x3xbf16> to vector<64x3xbf16>
    %24 = vector.extract_strided_slice %18 {offsets = [32, 0], sizes = [3, 16], strides = [1, 1]} : vector<35x16xbf16> to vector<3x16xbf16>
    %cst_23 = arith.constant dense<0.000000e+00> : vector<64x16xf32>
    %25 = tpu.matmul %23, %24, %cst_23 {dimension_numbers = #tpu.dot_dimension_numbers<[1], [0], [0], [1], [0, 0, 1, 1], [], []>} : vector<64x3xbf16>, vector<3x16xbf16>, vector<64x16xf32> -> vector<64x16xf32>
    %26 = vector.shape_cast %25 : vector<64x16xf32> to vector<8x8x16xf32>
    %27 = vector.shape_cast %20 : vector<8x16xf32> to vector<8x1x16xf32>
    %28 = vector.broadcast %27 : vector<8x1x16xf32> to vector<8x8x16xf32>
    %29 = arith.addf %26, %28 : vector<8x8x16xf32>
    %30 = vector.shape_cast %22 : vector<8x16xf32> to vector<1x8x16xf32>
    %31 = vector.broadcast %30 : vector<1x8x16xf32> to vector<8x8x16xf32>
    %32 = arith.addf %29, %31 : vector<8x8x16xf32>
    %c0_24 = arith.constant 0 : index
    %c0_25 = arith.constant 0 : index
    %c0_26 = arith.constant 0 : index
    %33 = vector.load %arg9[%c0_24, %c0_25, %c0_26] : memref<1x1x16xf32, #tpu.memory_space<vmem>>, vector<1x1x16xf32>
    %34 = vector.shape_cast %33 : vector<1x1x16xf32> to vector<16xf32>
    %35 = vector.shape_cast %34 : vector<16xf32> to vector<1x1x16xf32>
    %36 = vector.broadcast %35 : vector<1x1x16xf32> to vector<8x8x16xf32>
    %37 = arith.addf %32, %36 : vector<8x8x16xf32>
    %38 = arith.negf %37 : vector<8x8x16xf32>
    %39 = math.exp %38 : vector<8x8x16xf32>
    %cst_27 = arith.constant 1.000000e+00 : f32
    %40 = vector.broadcast %cst_27 : f32 to vector<8x8x16xf32>
    %41 = arith.addf %40, %39 : vector<8x8x16xf32>
    %42 = arith.divf %40, %41 : vector<8x8x16xf32>
    %43 = arith.mulf %37, %42 : vector<8x8x16xf32>
    %44 = vector.shape_cast %43 : vector<8x8x16xf32> to vector<64x16xf32>
    %45 = arith.truncf %44 : vector<64x16xf32> to vector<64x16xbf16>
    %c0_28 = arith.constant 0 : index
    %c0_29 = arith.constant 0 : index
    %c0_30 = arith.constant 0 : index
    %46 = vector.load %arg10[%c0_28, %c0_29, %c0_30] : memref<1x16x16xbf16, #tpu.memory_space<vmem>>, vector<1x16x16xbf16>
    %47 = vector.shape_cast %46 : vector<1x16x16xbf16> to vector<16x16xbf16>
    %cst_31 = arith.constant dense<0.000000e+00> : vector<64x16xf32>
    %48 = tpu.matmul %45, %47, %cst_31 {dimension_numbers = #tpu.dot_dimension_numbers<[1], [0], [0], [1], [0, 0, 1, 1], [], []>} : vector<64x16xbf16>, vector<16x16xbf16>, vector<64x16xf32> -> vector<64x16xf32>
    %c0_32 = arith.constant 0 : index
    %c0_33 = arith.constant 0 : index
    %c0_34 = arith.constant 0 : index
    %49 = vector.load %arg11[%c0_32, %c0_33, %c0_34] : memref<1x1x16xf32, #tpu.memory_space<vmem>>, vector<1x1x16xf32>
    %50 = vector.shape_cast %49 : vector<1x1x16xf32> to vector<16xf32>
    %51 = vector.shape_cast %50 : vector<16xf32> to vector<1x16xf32>
    %52 = vector.broadcast %51 : vector<1x16xf32> to vector<64x16xf32>
    %53 = arith.addf %48, %52 : vector<64x16xf32>
    %54 = arith.negf %53 : vector<64x16xf32>
    %55 = math.exp %54 : vector<64x16xf32>
    %cst_35 = arith.constant 1.000000e+00 : f32
    %56 = vector.broadcast %cst_35 : f32 to vector<64x16xf32>
    %57 = arith.addf %56, %55 : vector<64x16xf32>
    %58 = arith.divf %56, %57 : vector<64x16xf32>
    %59 = arith.mulf %53, %58 : vector<64x16xf32>
    %60 = arith.truncf %59 : vector<64x16xf32> to vector<64x16xbf16>
    %c0_36 = arith.constant 0 : index
    %c0_37 = arith.constant 0 : index
    %c0_38 = arith.constant 0 : index
    %61 = vector.load %arg12[%c0_36, %c0_37, %c0_38] : memref<1x16x1xbf16, #tpu.memory_space<vmem>>, vector<1x16x1xbf16>
    %62 = vector.shape_cast %61 : vector<1x16x1xbf16> to vector<16x1xbf16>
    %cst_39 = arith.constant dense<0.000000e+00> : vector<64x1xf32>
    %63 = tpu.matmul %60, %62, %cst_39 {dimension_numbers = #tpu.dot_dimension_numbers<[1], [0], [0], [1], [0, 0, 1, 1], [], []>} : vector<64x16xbf16>, vector<16x1xbf16>, vector<64x1xf32> -> vector<64x1xf32>
    %c0_40 = arith.constant 0 : index
    %c0_41 = arith.constant 0 : index
    %c0_42 = arith.constant 0 : index
    %64 = vector.load %arg13[%c0_40, %c0_41, %c0_42] : memref<1x1x1xf32, #tpu.memory_space<vmem>>, vector<1x1x1xf32>
    %65 = vector.shape_cast %64 : vector<1x1x1xf32> to vector<1xf32>
    %66 = vector.shape_cast %65 : vector<1xf32> to vector<1x1xf32>
    %67 = vector.broadcast %66 : vector<1x1xf32> to vector<64x1xf32>
    %68 = arith.addf %63, %67 : vector<64x1xf32>
    %69 = arith.negf %68 : vector<64x1xf32>
    %70 = math.exp %69 : vector<64x1xf32>
    %cst_43 = arith.constant 1.000000e+00 : f32
    %71 = vector.broadcast %cst_43 : f32 to vector<64x1xf32>
    %72 = arith.addf %71, %70 : vector<64x1xf32>
    %73 = arith.divf %71, %72 : vector<64x1xf32>
    %74 = vector.broadcast %73 : vector<64x1xf32> to vector<64x16xf32>
    %75 = arith.mulf %59, %74 : vector<64x16xf32>
    %76 = vector.shape_cast %75 : vector<64x16xf32> to vector<8x8x16xf32>
    %77 = vector.shape_cast %5 : vector<8x8xf32> to vector<8x8x1xf32>
    %78 = vector.broadcast %77 : vector<8x8x1xf32> to vector<8x8x16xf32>
    %79 = arith.mulf %76, %78 : vector<8x8x16xf32>
    %cst_44 = arith.constant dense<0.000000e+00> : vector<8x16xf32>
    %80 = vector.multi_reduction <add>, %79, %cst_44 [1] : vector<8x8x16xf32> to vector<8x16xf32>
    %cst_45 = arith.constant 2.500000e-01 : f32
    %81 = vector.broadcast %cst_45 : f32 to vector<8x16xf32>
    %82 = arith.mulf %80, %81 : vector<8x16xf32>
    %c0_46 = arith.constant 0 : index
    %c0_47 = arith.constant 0 : index
    %c0_48 = arith.constant 0 : index
    %83 = vector.load %arg14[%c0_46, %c0_47, %c0_48] : memref<1x32x16xbf16, #tpu.memory_space<vmem>>, vector<1x32x16xbf16>
    %84 = vector.shape_cast %83 : vector<1x32x16xbf16> to vector<32x16xbf16>
    %85 = vector.extract_strided_slice %84 {offsets = [0, 0], sizes = [16, 16], strides = [1, 1]} : vector<32x16xbf16> to vector<16x16xbf16>
    %cst_49 = arith.constant dense<0.000000e+00> : vector<8x16xf32>
    %86 = tpu.matmul %16, %85, %cst_49 {dimension_numbers = #tpu.dot_dimension_numbers<[1], [0], [0], [1], [0, 0, 1, 1], [], []>} : vector<8x16xbf16>, vector<16x16xbf16>, vector<8x16xf32> -> vector<8x16xf32>
    %87 = arith.truncf %82 : vector<8x16xf32> to vector<8x16xbf16>
    %88 = vector.extract_strided_slice %84 {offsets = [16, 0], sizes = [16, 16], strides = [1, 1]} : vector<32x16xbf16> to vector<16x16xbf16>
    %cst_50 = arith.constant dense<0.000000e+00> : vector<8x16xf32>
    %89 = tpu.matmul %87, %88, %cst_50 {dimension_numbers = #tpu.dot_dimension_numbers<[1], [0], [0], [1], [0, 0, 1, 1], [], []>} : vector<8x16xbf16>, vector<16x16xbf16>, vector<8x16xf32> -> vector<8x16xf32>
    %90 = arith.addf %86, %89 : vector<8x16xf32>
    %c0_51 = arith.constant 0 : index
    %c0_52 = arith.constant 0 : index
    %c0_53 = arith.constant 0 : index
    %91 = vector.load %arg15[%c0_51, %c0_52, %c0_53] : memref<1x1x16xf32, #tpu.memory_space<vmem>>, vector<1x1x16xf32>
    %92 = vector.shape_cast %91 : vector<1x1x16xf32> to vector<16xf32>
    %93 = vector.shape_cast %92 : vector<16xf32> to vector<1x16xf32>
    %94 = vector.broadcast %93 : vector<1x16xf32> to vector<8x16xf32>
    %95 = arith.addf %90, %94 : vector<8x16xf32>
    %96 = arith.negf %95 : vector<8x16xf32>
    %97 = math.exp %96 : vector<8x16xf32>
    %cst_54 = arith.constant 1.000000e+00 : f32
    %98 = vector.broadcast %cst_54 : f32 to vector<8x16xf32>
    %99 = arith.addf %98, %97 : vector<8x16xf32>
    %100 = arith.divf %98, %99 : vector<8x16xf32>
    %101 = arith.mulf %95, %100 : vector<8x16xf32>
    %102 = arith.truncf %101 : vector<8x16xf32> to vector<8x16xbf16>
    %c0_55 = arith.constant 0 : index
    %c0_56 = arith.constant 0 : index
    %c0_57 = arith.constant 0 : index
    %103 = vector.load %arg16[%c0_55, %c0_56, %c0_57] : memref<1x16x16xbf16, #tpu.memory_space<vmem>>, vector<1x16x16xbf16>
    %104 = vector.shape_cast %103 : vector<1x16x16xbf16> to vector<16x16xbf16>
    %cst_58 = arith.constant dense<0.000000e+00> : vector<8x16xf32>
    %105 = tpu.matmul %102, %104, %cst_58 {dimension_numbers = #tpu.dot_dimension_numbers<[1], [0], [0], [1], [0, 0, 1, 1], [], []>} : vector<8x16xbf16>, vector<16x16xbf16>, vector<8x16xf32> -> vector<8x16xf32>
    %c0_59 = arith.constant 0 : index
    %c0_60 = arith.constant 0 : index
    %c0_61 = arith.constant 0 : index
    %106 = vector.load %arg17[%c0_59, %c0_60, %c0_61] : memref<1x1x16xf32, #tpu.memory_space<vmem>>, vector<1x1x16xf32>
    %107 = vector.shape_cast %106 : vector<1x1x16xf32> to vector<16xf32>
    %108 = vector.shape_cast %107 : vector<16xf32> to vector<1x16xf32>
    %109 = vector.broadcast %108 : vector<1x16xf32> to vector<8x16xf32>
    %110 = arith.addf %105, %109 : vector<8x16xf32>
    %111 = arith.addf %15, %110 : vector<8x16xf32>
    %112 = vector.broadcast %7 : vector<8x1xf32> to vector<8x16xf32>
    %113 = arith.mulf %111, %112 : vector<8x16xf32>
    %114 = arith.truncf %113 : vector<8x16xf32> to vector<8x16xbf16>
    %c0_62 = arith.constant 0 : index
    %c0_63 = arith.constant 0 : index
    %c0_64 = arith.constant 0 : index
    %c0_65 = arith.constant 0 : index
    %115 = vector.load %arg18[%c0_62, %c0_63, %c0_64, %c0_65] : memref<1x1x8x16xbf16, #tpu.memory_space<vmem>>, vector<1x1x8x16xbf16>
    %116 = vector.shape_cast %115 : vector<1x1x8x16xbf16> to vector<8x16xbf16>
    %117 = vector.shape_cast %114 : vector<8x16xbf16> to vector<1x1x8x16xbf16>
    tpu.vector_store %arg18[%c0_62, %c0_63, %c0_64, %c0_65], %117 {strides = array<i32>} : memref<1x1x8x16xbf16, #tpu.memory_space<vmem>>, vector<1x1x8x16xbf16>,
    return
  }
  func.func @transform_0(%arg0: i32, %arg1: i32) -> (i32, i32, i32) {
    %c0_i32 = arith.constant 0 : i32
    %c0_i32_0 = arith.constant 0 : i32
    %c0_i32_1 = arith.constant 0 : i32
    return %arg0, %c0_i32, %c0_i32_0 : i32, i32, i32
  }
  func.func @transform_1(%arg0: i32, %arg1: i32) -> (i32, i32, i32, i32) {
    %c0_i32 = arith.constant 0 : i32
    %c0_i32_0 = arith.constant 0 : i32
    %c0_i32_1 = arith.constant 0 : i32
    %c0_i32_2 = arith.constant 0 : i32
    return %arg0, %c0_i32, %c0_i32_0, %c0_i32_1 : i32, i32, i32, i32
  }
  func.func @transform_2(%arg0: i32, %arg1: i32) -> (i32, i32, i32) {
    %c0_i32 = arith.constant 0 : i32
    %c0_i32_0 = arith.constant 0 : i32
    %c0_i32_1 = arith.constant 0 : i32
    return %arg0, %c0_i32, %c0_i32_0 : i32, i32, i32
  }
  func.func @transform_3(%arg0: i32, %arg1: i32) -> (i32, i32, i32) {
    %c0_i32 = arith.constant 0 : i32
    %c0_i32_0 = arith.constant 0 : i32
    %c0_i32_1 = arith.constant 0 : i32
    return %arg0, %c0_i32, %c0_i32_0 : i32, i32, i32
  }
  func.func @transform_4(%arg0: i32, %arg1: i32) -> (i32, i32, i32) {
    %c0_i32 = arith.constant 0 : i32
    %c0_i32_0 = arith.constant 0 : i32
    %c0_i32_1 = arith.constant 0 : i32
    return %arg1, %c0_i32, %c0_i32_0 : i32, i32, i32
  }
  func.func @transform_5(%arg0: i32, %arg1: i32) -> (i32, i32, i32) {
    %c0_i32 = arith.constant 0 : i32
    %c0_i32_0 = arith.constant 0 : i32
    %c0_i32_1 = arith.constant 0 : i32
    return %arg1, %c0_i32, %c0_i32_0 : i32, i32, i32
  }
  func.func @transform_6(%arg0: i32, %arg1: i32) -> (i32, i32, i32) {
    %c0_i32 = arith.constant 0 : i32
    %c0_i32_0 = arith.constant 0 : i32
    %c0_i32_1 = arith.constant 0 : i32
    return %arg1, %c0_i32, %c0_i32_0 : i32, i32, i32
  }
  func.func @transform_7(%arg0: i32, %arg1: i32) -> (i32, i32, i32) {
    %c0_i32 = arith.constant 0 : i32
    %c0_i32_0 = arith.constant 0 : i32
    %c0_i32_1 = arith.constant 0 : i32
    return %arg1, %c0_i32, %c0_i32_0 : i32, i32, i32
  }
  func.func @transform_8(%arg0: i32, %arg1: i32) -> (i32, i32, i32) {
    %c0_i32 = arith.constant 0 : i32
    %c0_i32_0 = arith.constant 0 : i32
    %c0_i32_1 = arith.constant 0 : i32
    return %arg1, %c0_i32, %c0_i32_0 : i32, i32, i32
  }
  func.func @transform_9(%arg0: i32, %arg1: i32) -> (i32, i32, i32) {
    %c0_i32 = arith.constant 0 : i32
    %c0_i32_0 = arith.constant 0 : i32
    %c0_i32_1 = arith.constant 0 : i32
    return %arg1, %c0_i32, %c0_i32_0 : i32, i32, i32
  }
  func.func @transform_10(%arg0: i32, %arg1: i32) -> (i32, i32, i32) {
    %c0_i32 = arith.constant 0 : i32
    %c0_i32_0 = arith.constant 0 : i32
    %c0_i32_1 = arith.constant 0 : i32
    return %arg1, %c0_i32, %c0_i32_0 : i32, i32, i32
  }
  func.func @transform_11(%arg0: i32, %arg1: i32) -> (i32, i32, i32) {
    %c0_i32 = arith.constant 0 : i32
    %c0_i32_0 = arith.constant 0 : i32
    %c0_i32_1 = arith.constant 0 : i32
    return %arg1, %c0_i32, %c0_i32_0 : i32, i32, i32
  }
  func.func @transform_12(%arg0: i32, %arg1: i32) -> (i32, i32, i32) {
    %c0_i32 = arith.constant 0 : i32
    %c0_i32_0 = arith.constant 0 : i32
    %c0_i32_1 = arith.constant 0 : i32
    return %arg1, %c0_i32, %c0_i32_0 : i32, i32, i32
  }
  func.func @transform_13(%arg0: i32, %arg1: i32) -> (i32, i32, i32) {
    %c0_i32 = arith.constant 0 : i32
    %c0_i32_0 = arith.constant 0 : i32
    %c0_i32_1 = arith.constant 0 : i32
    return %arg1, %c0_i32, %c0_i32_0 : i32, i32, i32
  }
  func.func @transform_14(%arg0: i32, %arg1: i32) -> (i32, i32, i32) {
    %c0_i32 = arith.constant 0 : i32
    %c0_i32_0 = arith.constant 0 : i32
    %c0_i32_1 = arith.constant 0 : i32
    return %arg1, %c0_i32, %c0_i32_0 : i32, i32, i32
  }
  func.func @transform_15(%arg0: i32, %arg1: i32) -> (i32, i32, i32) {
    %c0_i32 = arith.constant 0 : i32
    %c0_i32_0 = arith.constant 0 : i32
    %c0_i32_1 = arith.constant 0 : i32
    return %arg1, %c0_i32, %c0_i32_0 : i32, i32, i32
  }
  func.func @transform_16(%arg0: i32, %arg1: i32) -> (i32, i32, i32, i32) {
    %c0_i32 = arith.constant 0 : i32
    %c0_i32_0 = arith.constant 0 : i32
    %c0_i32_1 = arith.constant 0 : i32
    return %arg1, %arg0, %c0_i32, %c0_i32_0 : i32, i32, i32, i32
  }
}

module attributes {stable_mosaic.version = 11 : i64} {
  func.func @_attn_kernel(%arg0: i32, %arg1: memref<1x4x8x4xbf16, #tpu.memory_space<vmem>>, %arg2: memref<1x4x8x4xbf16, #tpu.memory_space<vmem>>, %arg3: memref<1x8x8xf32, #tpu.memory_space<vmem>>) attributes {dimension_semantics = [#tpu.dimension_semantics<parallel>], iteration_bounds = array<i64: 2>, scalar_prefetch = 0 : i64, scratch_operands = 0 : i64, tpu.core_type = #tpu.core_type<tc>, window_params = [{transform_indices = @transform_0, window_bounds = array<i64: 1, 4, 8, 4>}, {transform_indices = @transform_1, window_bounds = array<i64: 1, 4, 8, 4>}, {transform_indices = @transform_2, window_bounds = array<i64: 1, 8, 8>}]} {
    %c0 = arith.constant 0 : index
    %c0_0 = arith.constant 0 : index
    %c0_1 = arith.constant 0 : index
    %c0_2 = arith.constant 0 : index
    %0 = vector.load %arg1[%c0, %c0_0, %c0_1, %c0_2] : memref<1x4x8x4xbf16, #tpu.memory_space<vmem>>, vector<1x4x8x4xbf16>
    %c0_3 = arith.constant 0 : index
    %c0_4 = arith.constant 0 : index
    %c0_5 = arith.constant 0 : index
    %c0_6 = arith.constant 0 : index
    %1 = vector.load %arg2[%c0_3, %c0_4, %c0_5, %c0_6] : memref<1x4x8x4xbf16, #tpu.memory_space<vmem>>, vector<1x4x8x4xbf16>
    %2 = vector.shape_cast %0 : vector<1x4x8x4xbf16> to vector<4x8x4xbf16>
    %3 = vector.shape_cast %1 : vector<1x4x8x4xbf16> to vector<4x8x4xbf16>
    %cst = arith.constant dense<0.000000e+00> : vector<4x8x8xf32>
    %4 = tpu.matmul %2, %3, %cst {dimension_numbers = #tpu.dot_dimension_numbers<[2], [2], [1], [1], [0, 0, 0, 1, 1, 1], [0], [0]>} : vector<4x8x4xbf16>, vector<4x8x4xbf16>, vector<4x8x8xf32> -> vector<4x8x8xf32>
    %5 = vector.shape_cast %4 : vector<4x8x8xf32> to vector<1x4x8x8xf32>
    %cst_7 = arith.constant 2.500000e-01 : f32
    %6 = vector.broadcast %cst_7 : f32 to vector<1x4x8x8xf32>
    %7 = arith.mulf %5, %6 : vector<1x4x8x8xf32>
    %8 = math.tanh %7 : vector<1x4x8x8xf32>
    %cst_8 = arith.constant dense<0.000000e+00> : vector<1x8x8xf32>
    %9 = vector.multi_reduction <add>, %8, %cst_8 [1] : vector<1x4x8x8xf32> to vector<1x8x8xf32>
    %cst_9 = arith.constant 2.500000e-01 : f32
    %10 = vector.broadcast %cst_9 : f32 to vector<1x8x8xf32>
    %11 = arith.mulf %9, %10 : vector<1x8x8xf32>
    %12 = tpu.transpose %11, [0, 2, 1] : vector<1x8x8xf32> -> vector<1x8x8xf32>
    %13 = arith.addf %11, %12 : vector<1x8x8xf32>
    %cst_10 = arith.constant 5.000000e-01 : f32
    %14 = vector.broadcast %cst_10 : f32 to vector<1x8x8xf32>
    %15 = arith.mulf %14, %13 : vector<1x8x8xf32>
    %c0_11 = arith.constant 0 : index
    %c0_12 = arith.constant 0 : index
    %c0_13 = arith.constant 0 : index
    %16 = vector.load %arg3[%c0_11, %c0_12, %c0_13] : memref<1x8x8xf32, #tpu.memory_space<vmem>>, vector<1x8x8xf32>
    tpu.vector_store %arg3[%c0_11, %c0_12, %c0_13], %15 {strides = array<i32>} : memref<1x8x8xf32, #tpu.memory_space<vmem>>, vector<1x8x8xf32>,
    return
  }
  func.func @transform_0(%arg0: i32) -> (i32, i32, i32, i32) {
    %c0_i32 = arith.constant 0 : i32
    %c0_i32_0 = arith.constant 0 : i32
    %c0_i32_1 = arith.constant 0 : i32
    %c0_i32_2 = arith.constant 0 : i32
    return %arg0, %c0_i32, %c0_i32_0, %c0_i32_1 : i32, i32, i32, i32
  }
  func.func @transform_1(%arg0: i32) -> (i32, i32, i32, i32) {
    %c0_i32 = arith.constant 0 : i32
    %c0_i32_0 = arith.constant 0 : i32
    %c0_i32_1 = arith.constant 0 : i32
    %c0_i32_2 = arith.constant 0 : i32
    return %arg0, %c0_i32, %c0_i32_0, %c0_i32_1 : i32, i32, i32, i32
  }
  func.func @transform_2(%arg0: i32) -> (i32, i32, i32) {
    %c0_i32 = arith.constant 0 : i32
    %c0_i32_0 = arith.constant 0 : i32
    %c0_i32_1 = arith.constant 0 : i32
    return %arg0, %c0_i32, %c0_i32_0 : i32, i32, i32
  }
}

</mosaic_0001>

<llo_original>
// kernel: attention_forward.4
$region0: #{attention_forward.4}
  #allocation0 [shape = 'u32[]', space=smem, size = 0x4, offset = 0x4, fixed_abs, tag = 'smem constant byte address 0x4 - core index']
  #allocation1 [shape = 'u32[144,128]{1,0:T(1,128)}', space=vmem, size = 0x12000, scoped, tag = 'internal scratch']
  %s0 = inlined_call_operand.vmem [shape: bf16[3,2,8,16], index: 0, kind: input, shape index: {}]
  %s1 = inlined_call_operand.vmem [shape: bf16[2,8,8,3], index: 1, kind: input, shape index: {}]
  %s2 = inlined_call_operand.vmem [shape: f32[2,8,8,3], index: 2, kind: input, shape index: {}]
  %s3 = inlined_call_operand.vmem [shape: f32[2,8,8], index: 3, kind: input, shape index: {}]
  %s4 = inlined_call_operand.vmem [shape: f32[2,8,1], index: 4, kind: input, shape index: {}]
  %s5 = inlined_call_operand.vmem [shape: f32[2,8,3], index: 5, kind: input, shape index: {}]
  %s6 = inlined_call_operand.vmem [shape: bf16[3,35,16], index: 6, kind: input, shape index: {}]
  %s7 = inlined_call_operand.vmem [shape: f32[3,1,16], index: 7, kind: input, shape index: {}]
  %s8 = inlined_call_operand.vmem [shape: bf16[3,16,16], index: 8, kind: input, shape index: {}]
  %s9 = inlined_call_operand.vmem [shape: f32[3,1,16], index: 9, kind: input, shape index: {}]
  %s10 = inlined_call_operand.vmem [shape: bf16[3,16,1], index: 10, kind: input, shape index: {}]
  %s11 = inlined_call_operand.vmem [shape: bf16[3,16,16], index: 11, kind: input, shape index: {}]
  %s12 = inlined_call_operand.vmem [shape: f32[3,1,16], index: 12, kind: input, shape index: {}]
  %s13 = inlined_call_operand.vmem [shape: f32[3,2,8,3], index: 13, kind: output, shape index: {0}]
  %s14 = inlined_call_operand.vmem [shape: f32[3,2,8,16], index: 14, kind: output, shape index: {1}]
  %15 = xla_tuple %s13, %s14
  %s16 = sld [smem:[#allocation0]]
  $region93: #{attention_forward.4} parent=0
    _
  %s18 = ssub.s32 1, %s16
  %s19 = scalar_select 0, %s18, %s16
  loop: start=0, step=1, limit=8
  $region2: #{attention_forward.4} parent=0 // loop_pre_header
    _
  $region3: #{attention_forward.4} parent=0 // loop_header
    %s21 = sphi 0, %s25
    %p22 = scmp.ge.s32.totalorder %s21, 8
    %s28 = sphi 0, %s40
    %s29 = sphi 0, %s36
    %s30 = sphi 0, %s28
    %s31 = sphi 0, %s29
    %s32 = sphi 0, %s30
    %s33 = sphi 0, %s31
    %s45 = sphi 0, %s47
    %s48 = sphi 0, %s45
    %s49 = sphi 0, %s48
    %s65 = sphi 0, %s49
    %s71 = sphi 0, %s73
    %s74 = sphi 0, %s71
    %s75 = sphi 0, %s74
    %s91 = sphi 0, %s75
    %s97 = sphi 0, %s99
    %s100 = sphi 0, %s97
    %s101 = sphi 0, %s100
    %s117 = sphi 0, %s101
    %s123 = sphi 0, %s125
    %s126 = sphi 0, %s123
    %s127 = sphi 0, %s126
    %s143 = sphi 0, %s127
    %s149 = sphi 0, %s151
    %s152 = sphi 0, %s149
    %s153 = sphi 0, %s152
    %s169 = sphi 0, %s153
    %s175 = sphi 0, %s177
    %s178 = sphi 0, %s175
    %s179 = sphi 0, %s178
    %s195 = sphi 0, %s179
    %s201 = sphi 0, %s203
    %s204 = sphi 0, %s201
    %s205 = sphi 0, %s204
    %s221 = sphi 0, %s205
    %s227 = sphi 0, %s229
    %s230 = sphi 0, %s227
    %s231 = sphi 0, %s230
    %s247 = sphi 0, %s231
    %s253 = sphi 0, %s255
    %s256 = sphi 0, %s253
    %s257 = sphi 0, %s256
    %s273 = sphi 0, %s257
    %s279 = sphi 0, %s281
    %s282 = sphi 0, %s279
    %s283 = sphi 0, %s282
    %s299 = sphi 0, %s283
    %s305 = sphi 0, %s307
    %s308 = sphi 0, %s305
    %s309 = sphi 0, %s308
    %s325 = sphi 0, %s309
    %s331 = sphi 0, %s333
    %s334 = sphi 0, %s331
    %s335 = sphi 0, %s334
    %s351 = sphi 0, %s335
    %s357 = sphi 0, %s359
    %s360 = sphi 0, %s357
    %s361 = sphi 0, %s360
    %s377 = sphi 0, %s361
    %s385 = sphi 0, %s387
    %s388 = sphi 0, %s385
    %s389 = sphi 0, %s388
    %s405 = sphi 0, %s389
    %s413 = sphi 0, %s415
    %s416 = sphi 0, %s413
    %s417 = sphi 0, %s416
    %s433 = sphi 0, %s417
  $region4: #{attention_forward.4} parent=0 // loop_header_branch
    %24 = sbr.rel (%p22) target = $region8
  $region5: #{attention_forward.4} parent=0 // loop_body
    %s26 = ssub.s32 %s21, 1
    %s27 = ssub.s32 %s21, 2
    %s34 = sadd.s32 1, %s29
    %p35 = scmp.ge.s32.totalorder %s34, 3
    %s36 = scalar_select %p35, 0, %s34
    %s37 = sadd.s32 1, %s28
    %s38 = scalar_select %p35, %s37, %s28
    %p39 = scmp.ge.s32.totalorder %s38, 2
    %s40 = scalar_select %p39, 0, %s38
    %s41 = ssub.s32 %s29, %s36
    %s42 = ssub.s32 %s28, %s40
    %s43 = sor.u32 %s41, %s42
    %p44 = scmp.eq.s32.totalorder %s43, 0
    %s46 = sadd.s32 %s45, 1
    %s47 = scalar_select %p44, %s45, %s46
    %p50 = pneg %p44
    %p51 = scmp.eq.s32.totalorder %s21, 5
    %p52 = por %p50, %p51
    %p53 = scmp.ne.s32.totalorder %s45, %s48
    %p54 = scmp.eq.s32.totalorder %s21, 0
    %p55 = por %p53, %p54
    %p56 = scmp.ne.s32.totalorder %s45, %s48
    %p57 = scmp.eq.s32.totalorder %s26, 5
    %p58 = por %p56, %p57
    %p59 = scmp.ne.s32.totalorder %s48, %s49
    %p60 = scmp.eq.s32.totalorder %s26, 0
    %p61 = por %p59, %p60
    %p62 = scmp.ne.s32.totalorder %s48, %s49
    %p63 = scmp.eq.s32.totalorder %s27, 5
    %p64 = por %p62, %p63
    %p66 = scmp.ne.s32.totalorder %s49, %s65
    %p67 = scmp.eq.s32.totalorder %s27, 0
    %p68 = por %p66, %p67
    %s69 = ssub.s32 %s28, %s40
    %p70 = scmp.eq.s32.totalorder %s69, 0
    %s72 = sadd.s32 %s71, 1
    %s73 = scalar_select %p70, %s71, %s72
    %p76 = pneg %p70
    %p77 = scmp.eq.s32.totalorder %s21, 5
    %p78 = por %p76, %p77
    %p79 = scmp.ne.s32.totalorder %s71, %s74
    %p80 = scmp.eq.s32.totalorder %s21, 0
    %p81 = por %p79, %p80
    %p82 = scmp.ne.s32.totalorder %s71, %s74
    %p83 = scmp.eq.s32.totalorder %s26, 5
    %p84 = por %p82, %p83
    %p85 = scmp.ne.s32.totalorder %s74, %s75
    %p86 = scmp.eq.s32.totalorder %s26, 0
    %p87 = por %p85, %p86
    %p88 = scmp.ne.s32.totalorder %s74, %s75
    %p89 = scmp.eq.s32.totalorder %s27, 5
    %p90 = por %p88, %p89
    %p92 = scmp.ne.s32.totalorder %s75, %s91
    %p93 = scmp.eq.s32.totalorder %s27, 0
    %p94 = por %p92, %p93
    %s95 = ssub.s32 %s28, %s40
    %p96 = scmp.eq.s32.totalorder %s95, 0
    %s98 = sadd.s32 %s97, 1
    %s99 = scalar_select %p96, %s97, %s98
    %p102 = pneg %p96
    %p103 = scmp.eq.s32.totalorder %s21, 5
    %p104 = por %p102, %p103
    %p105 = scmp.ne.s32.totalorder %s97, %s100
    %p106 = scmp.eq.s32.totalorder %s21, 0
    %p107 = por %p105, %p106
    %p108 = scmp.ne.s32.totalorder %s97, %s100
    %p109 = scmp.eq.s32.totalorder %s26, 5
    %p110 = por %p108, %p109
    %p111 = scmp.ne.s32.totalorder %s100, %s101
    %p112 = scmp.eq.s32.totalorder %s26, 0
    %p113 = por %p111, %p112
    %p114 = scmp.ne.s32.totalorder %s100, %s101
    %p115 = scmp.eq.s32.totalorder %s27, 5
    %p116 = por %p114, %p115
    %p118 = scmp.ne.s32.totalorder %s101, %s117
    %p119 = scmp.eq.s32.totalorder %s27, 0
    %p120 = por %p118, %p119
    %s121 = ssub.s32 %s28, %s40
    %p122 = scmp.eq.s32.totalorder %s121, 0
    %s124 = sadd.s32 %s123, 1
    %s125 = scalar_select %p122, %s123, %s124
    %p128 = pneg %p122
    %p129 = scmp.eq.s32.totalorder %s21, 5
    %p130 = por %p128, %p129
    %p131 = scmp.ne.s32.totalorder %s123, %s126
    %p132 = scmp.eq.s32.totalorder %s21, 0
    %p133 = por %p131, %p132
    %p134 = scmp.ne.s32.totalorder %s123, %s126
    %p135 = scmp.eq.s32.totalorder %s26, 5
    %p136 = por %p134, %p135
    %p137 = scmp.ne.s32.totalorder %s126, %s127
    %p138 = scmp.eq.s32.totalorder %s26, 0
    %p139 = por %p137, %p138
    %p140 = scmp.ne.s32.totalorder %s126, %s127
    %p141 = scmp.eq.s32.totalorder %s27, 5
    %p142 = por %p140, %p141
    %p144 = scmp.ne.s32.totalorder %s127, %s143
    %p145 = scmp.eq.s32.totalorder %s27, 0
    %p146 = por %p144, %p145
    %s147 = ssub.s32 %s28, %s40
    %p148 = scmp.eq.s32.totalorder %s147, 0
    %s150 = sadd.s32 %s149, 1
    %s151 = scalar_select %p148, %s149, %s150
    %p154 = pneg %p148
    %p155 = scmp.eq.s32.totalorder %s21, 5
    %p156 = por %p154, %p155
    %p157 = scmp.ne.s32.totalorder %s149, %s152
    %p158 = scmp.eq.s32.totalorder %s21, 0
    %p159 = por %p157, %p158
    %p160 = scmp.ne.s32.totalorder %s149, %s152
    %p161 = scmp.eq.s32.totalorder %s26, 5
    %p162 = por %p160, %p161
    %p163 = scmp.ne.s32.totalorder %s152, %s153
    %p164 = scmp.eq.s32.totalorder %s26, 0
    %p165 = por %p163, %p164
    %p166 = scmp.ne.s32.totalorder %s152, %s153
    %p167 = scmp.eq.s32.totalorder %s27, 5
    %p168 = por %p166, %p167
    %p170 = scmp.ne.s32.totalorder %s153, %s169
    %p171 = scmp.eq.s32.totalorder %s27, 0
    %p172 = por %p170, %p171
    %s173 = ssub.s32 %s28, %s40
    %p174 = scmp.eq.s32.totalorder %s173, 0
    %s176 = sadd.s32 %s175, 1
    %s177 = scalar_select %p174, %s175, %s176
    %p180 = pneg %p174
    %p181 = scmp.eq.s32.totalorder %s21, 5
    %p182 = por %p180, %p181
    %p183 = scmp.ne.s32.totalorder %s175, %s178
    %p184 = scmp.eq.s32.totalorder %s21, 0
    %p185 = por %p183, %p184
    %p186 = scmp.ne.s32.totalorder %s175, %s178
    %p187 = scmp.eq.s32.totalorder %s26, 5
    %p188 = por %p186, %p187
    %p189 = scmp.ne.s32.totalorder %s178, %s179
    %p190 = scmp.eq.s32.totalorder %s26, 0
    %p191 = por %p189, %p190
    %p192 = scmp.ne.s32.totalorder %s178, %s179
    %p193 = scmp.eq.s32.totalorder %s27, 5
    %p194 = por %p192, %p193
    %p196 = scmp.ne.s32.totalorder %s179, %s195
    %p197 = scmp.eq.s32.totalorder %s27, 0
    %p198 = por %p196, %p197
    %s199 = ssub.s32 %s29, %s36
    %p200 = scmp.eq.s32.totalorder %s199, 0
    %s202 = sadd.s32 %s201, 1
    %s203 = scalar_select %p200, %s201, %s202
    %p206 = pneg %p200
    %p207 = scmp.eq.s32.totalorder %s21, 5
    %p208 = por %p206, %p207
    %p209 = scmp.ne.s32.totalorder %s201, %s204
    %p210 = scmp.eq.s32.totalorder %s21, 0
    %p211 = por %p209, %p210
    %p212 = scmp.ne.s32.totalorder %s201, %s204
    %p213 = scmp.eq.s32.totalorder %s26, 5
    %p214 = por %p212, %p213
    %p215 = scmp.ne.s32.totalorder %s204, %s205
    %p216 = scmp.eq.s32.totalorder %s26, 0
    %p217 = por %p215, %p216
    %p218 = scmp.ne.s32.totalorder %s204, %s205
    %p219 = scmp.eq.s32.totalorder %s27, 5
    %p220 = por %p218, %p219
    %p222 = scmp.ne.s32.totalorder %s205, %s221
    %p223 = scmp.eq.s32.totalorder %s27, 0
    %p224 = por %p222, %p223
    %s225 = ssub.s32 %s29, %s36
    %p226 = scmp.eq.s32.totalorder %s225, 0
    %s228 = sadd.s32 %s227, 1
    %s229 = scalar_select %p226, %s227, %s228
    %p232 = pneg %p226
    %p233 = scmp.eq.s32.totalorder %s21, 5
    %p234 = por %p232, %p233
    %p235 = scmp.ne.s32.totalorder %s227, %s230
    %p236 = scmp.eq.s32.totalorder %s21, 0
    %p237 = por %p235, %p236
    %p238 = scmp.ne.s32.totalorder %s227, %s230
    %p239 = scmp.eq.s32.totalorder %s26, 5
    %p240 = por %p238, %p239
    %p241 = scmp.ne.s32.totalorder %s230, %s231
    %p242 = scmp.eq.s32.totalorder %s26, 0
    %p243 = por %p241, %p242
    %p244 = scmp.ne.s32.totalorder %s230, %s231
    %p245 = scmp.eq.s32.totalorder %s27, 5
    %p246 = por %p244, %p245
    %p248 = scmp.ne.s32.totalorder %s231, %s247
    %p249 = scmp.eq.s32.totalorder %s27, 0
    %p250 = por %p248, %p249
    %s251 = ssub.s32 %s29, %s36
    %p252 = scmp.eq.s32.totalorder %s251, 0
    %s254 = sadd.s32 %s253, 1
    %s255 = scalar_select %p252, %s253, %s254
    %p258 = pneg %p252
    %p259 = scmp.eq.s32.totalorder %s21, 5
    %p260 = por %p258, %p259
    %p261 = scmp.ne.s32.totalorder %s253, %s256
    %p262 = scmp.eq.s32.totalorder %s21, 0
    %p263 = por %p261, %p262
    %p264 = scmp.ne.s32.totalorder %s253, %s256
    %p265 = scmp.eq.s32.totalorder %s26, 5
    %p266 = por %p264, %p265
    %p267 = scmp.ne.s32.totalorder %s256, %s257
    %p268 = scmp.eq.s32.totalorder %s26, 0
    %p269 = por %p267, %p268
    %p270 = scmp.ne.s32.totalorder %s256, %s257
    %p271 = scmp.eq.s32.totalorder %s27, 5
    %p272 = por %p270, %p271
    %p274 = scmp.ne.s32.totalorder %s257, %s273
    %p275 = scmp.eq.s32.totalorder %s27, 0
    %p276 = por %p274, %p275
    %s277 = ssub.s32 %s29, %s36
    %p278 = scmp.eq.s32.totalorder %s277, 0
    %s280 = sadd.s32 %s279, 1
    %s281 = scalar_select %p278, %s279, %s280
    %p284 = pneg %p278
    %p285 = scmp.eq.s32.totalorder %s21, 5
    %p286 = por %p284, %p285
    %p287 = scmp.ne.s32.totalorder %s279, %s282
    %p288 = scmp.eq.s32.totalorder %s21, 0
    %p289 = por %p287, %p288
    %p290 = scmp.ne.s32.totalorder %s279, %s282
    %p291 = scmp.eq.s32.totalorder %s26, 5
    %p292 = por %p290, %p291
    %p293 = scmp.ne.s32.totalorder %s282, %s283
    %p294 = scmp.eq.s32.totalorder %s26, 0
    %p295 = por %p293, %p294
    %p296 = scmp.ne.s32.totalorder %s282, %s283
    %p297 = scmp.eq.s32.totalorder %s27, 5
    %p298 = por %p296, %p297
    %p300 = scmp.ne.s32.totalorder %s283, %s299
    %p301 = scmp.eq.s32.totalorder %s27, 0
    %p302 = por %p300, %p301
    %s303 = ssub.s32 %s29, %s36
    %p304 = scmp.eq.s32.totalorder %s303, 0
    %s306 = sadd.s32 %s305, 1
    %s307 = scalar_select %p304, %s305, %s306
    %p310 = pneg %p304
    %p311 = scmp.eq.s32.totalorder %s21, 5
    %p312 = por %p310, %p311
    %p313 = scmp.ne.s32.totalorder %s305, %s308
    %p314 = scmp.eq.s32.totalorder %s21, 0
    %p315 = por %p313, %p314
    %p316 = scmp.ne.s32.totalorder %s305, %s308
    %p317 = scmp.eq.s32.totalorder %s26, 5
    %p318 = por %p316, %p317
    %p319 = scmp.ne.s32.totalorder %s308, %s309
    %p320 = scmp.eq.s32.totalorder %s26, 0
    %p321 = por %p319, %p320
    %p322 = scmp.ne.s32.totalorder %s308, %s309
    %p323 = scmp.eq.s32.totalorder %s27, 5
    %p324 = por %p322, %p323
    %p326 = scmp.ne.s32.totalorder %s309, %s325
    %p327 = scmp.eq.s32.totalorder %s27, 0
    %p328 = por %p326, %p327
    %s329 = ssub.s32 %s29, %s36
    %p330 = scmp.eq.s32.totalorder %s329, 0
    %s332 = sadd.s32 %s331, 1
    %s333 = scalar_select %p330, %s331, %s332
    %p336 = pneg %p330
    %p337 = scmp.eq.s32.totalorder %s21, 5
    %p338 = por %p336, %p337
    %p339 = scmp.ne.s32.totalorder %s331, %s334
    %p340 = scmp.eq.s32.totalorder %s21, 0
    %p341 = por %p339, %p340
    %p342 = scmp.ne.s32.totalorder %s331, %s334
    %p343 = scmp.eq.s32.totalorder %s26, 5
    %p344 = por %p342, %p343
    %p345 = scmp.ne.s32.totalorder %s334, %s335
    %p346 = scmp.eq.s32.totalorder %s26, 0
    %p347 = por %p345, %p346
    %p348 = scmp.ne.s32.totalorder %s334, %s335
    %p349 = scmp.eq.s32.totalorder %s27, 5
    %p350 = por %p348, %p349
    %p352 = scmp.ne.s32.totalorder %s335, %s351
    %p353 = scmp.eq.s32.totalorder %s27, 0
    %p354 = por %p352, %p353
    %s355 = ssub.s32 %s29, %s36
    %p356 = scmp.eq.s32.totalorder %s355, 0
    %s358 = sadd.s32 %s357, 1
    %s359 = scalar_select %p356, %s357, %s358
    %p362 = pneg %p356
    %p363 = scmp.eq.s32.totalorder %s21, 5
    %p364 = por %p362, %p363
    %p365 = scmp.ne.s32.totalorder %s357, %s360
    %p366 = scmp.eq.s32.totalorder %s21, 0
    %p367 = por %p365, %p366
    %p368 = scmp.ne.s32.totalorder %s357, %s360
    %p369 = scmp.eq.s32.totalorder %s26, 5
    %p370 = por %p368, %p369
    %p371 = scmp.ne.s32.totalorder %s360, %s361
    %p372 = scmp.eq.s32.totalorder %s26, 0
    %p373 = por %p371, %p372
    %p374 = scmp.ne.s32.totalorder %s360, %s361
    %p375 = scmp.eq.s32.totalorder %s27, 5
    %p376 = por %p374, %p375
    %p378 = scmp.ne.s32.totalorder %s361, %s377
    %p379 = scmp.eq.s32.totalorder %s27, 0
    %p380 = por %p378, %p379
    %s381 = ssub.s32 %s29, %s36
    %s382 = ssub.s32 %s28, %s40
    %s383 = sor.u32 %s381, %s382
    %p384 = scmp.eq.s32.totalorder %s383, 0
    %s386 = sadd.s32 %s385, 1
    %s387 = scalar_select %p384, %s385, %s386
    %p390 = pneg %p384
    %p391 = scmp.eq.s32.totalorder %s21, 5
    %p392 = por %p390, %p391
    %p393 = scmp.ne.s32.totalorder %s385, %s388
    %p394 = scmp.eq.s32.totalorder %s21, 0
    %p395 = por %p393, %p394
    %p396 = scmp.ne.s32.totalorder %s385, %s388
    %p397 = scmp.eq.s32.totalorder %s26, 5
    %p398 = por %p396, %p397
    %p399 = scmp.ne.s32.totalorder %s388, %s389
    %p400 = scmp.eq.s32.totalorder %s26, 0
    %p401 = por %p399, %p400
    %p402 = scmp.ne.s32.totalorder %s388, %s389
    %p403 = scmp.eq.s32.totalorder %s27, 5
    %p404 = por %p402, %p403
    %p406 = scmp.ne.s32.totalorder %s389, %s405
    %p407 = scmp.eq.s32.totalorder %s27, 0
    %p408 = por %p406, %p407
    %s409 = ssub.s32 %s29, %s36
    %s410 = ssub.s32 %s28, %s40
    %s411 = sor.u32 %s409, %s410
    %p412 = scmp.eq.s32.totalorder %s411, 0
    %s414 = sadd.s32 %s413, 1
    %s415 = scalar_select %p412, %s413, %s414
    %p418 = pneg %p412
    %p419 = scmp.eq.s32.totalorder %s21, 5
    %p420 = por %p418, %p419
    %p421 = scmp.ne.s32.totalorder %s413, %s416
    %p422 = scmp.eq.s32.totalorder %s21, 0
    %p423 = por %p421, %p422
    %p424 = scmp.ne.s32.totalorder %s413, %s416
    %p425 = scmp.eq.s32.totalorder %s26, 5
    %p426 = por %p424, %p425
    %p427 = scmp.ne.s32.totalorder %s416, %s417
    %p428 = scmp.eq.s32.totalorder %s26, 0
    %p429 = por %p427, %p428
    %p430 = scmp.ne.s32.totalorder %s416, %s417
    %p431 = scmp.eq.s32.totalorder %s27, 5
    %p432 = por %p430, %p431
    %p434 = scmp.ne.s32.totalorder %s417, %s433
    %p435 = scmp.eq.s32.totalorder %s27, 0
    %p436 = por %p434, %p435
    %p437 = scmp.le.s32.totalorder 1, %s21
    %p438 = scmp.lt.s32.totalorder %s21, 7
    %p439 = pnand %p437, %p438
    %p440 = pneg %p439
    // Predicated region
    $region9: #{attention_forward.4} parent=5 // pred_check
      _
    $region10: #{attention_forward.4} parent=5 // pred_check_branch
      %442 = sbr.rel (%p439) target = $region12
    $region11: #{attention_forward.4} parent=5 // pred_region
      %s443 = ssub.s32 %s21, 1
    $region12: #{attention_forward.4} parent=5 // pred_fallthru
      _
    %p444 = scmp.lt.s32.totalorder %s21, 6
    // Predicated region
    $region13: #{attention_forward.4} parent=5 // pred_check
      %p445 = pneg %p444
    $region14: #{attention_forward.4} parent=5 // pred_check_branch
      %447 = sbr.rel (%p445) target = $region16
    $region15: #{attention_forward.4} parent=5 // pred_region
      // Predicated region
      $region17: #{attention_forward.4} parent=15 // pred_check
        %p448 = pneg %p55
      $region18: #{attention_forward.4} parent=15 // pred_check_branch
        %450 = sbr.rel (%p448) target = $region20
      $region19: #{attention_forward.4} parent=15 // pred_region
        %p451 = scmp.lt.s32.totalorder %s29, 2
        %s452 = scalar_select %p451, %s29, 2
        %p453 = scmp.lt.s32.totalorder %s28, 1
        %s454 = scalar_select %p453, %s28, 1
        %s455 = smul.addr %s452, 2
        %s456 = sadd.s32 %s454, %s455
        %s457 = smul.addr %s456, 4
        %s458 = scalar_lea.vmem %s0, %s457
      $region20: #{attention_forward.4} parent=15 // pred_fallthru
        _
      // Predicated region
      $region21: #{attention_forward.4} parent=15 // pred_check
        %p459 = pneg %p81
      $region22: #{attention_forward.4} parent=15 // pred_check_branch
        %461 = sbr.rel (%p459) target = $region24
      $region23: #{attention_forward.4} parent=15 // pred_region
        %p462 = scmp.lt.s32.totalorder %s28, 1
        %s463 = scalar_select %p462, %s28, 1
        %s464 = smul.addr %s463, 8
        %s465 = smul.addr %s464, 4
        %s466 = scalar_lea.vmem %s1, %s465
      $region24: #{attention_forward.4} parent=15 // pred_fallthru
        _
      // Predicated region
      $region25: #{attention_forward.4} parent=15 // pred_check
        %p467 = pneg %p107
      $region26: #{attention_forward.4} parent=15 // pred_check_branch
        %469 = sbr.rel (%p467) target = $region28
      $region27: #{attention_forward.4} parent=15 // pred_region
        %p470 = scmp.lt.s32.totalorder %s28, 1
        %s471 = scalar_select %p470, %s28, 1
        %s472 = smul.addr %s471, 8
        %s473 = smul.addr %s472, 8
        %s474 = scalar_lea.vmem %s2, %s473
      $region28: #{attention_forward.4} parent=15 // pred_fallthru
        _
      // Predicated region
      $region29: #{attention_forward.4} parent=15 // pred_check
        %p475 = pneg %p133
      $region30: #{attention_forward.4} parent=15 // pred_check_branch
        %477 = sbr.rel (%p475) target = $region32
      $region31: #{attention_forward.4} parent=15 // pred_region
        %p478 = scmp.lt.s32.totalorder %s28, 1
        %s479 = scalar_select %p478, %s28, 1
        %s480 = smul.addr %s479, 8
        %s481 = scalar_lea.vmem %s3, %s480
      $region32: #{attention_forward.4} parent=15 // pred_fallthru
        _
      // Predicated region
      $region33: #{attention_forward.4} parent=15 // pred_check
        %p482 = pneg %p159
      $region34: #{attention_forward.4} parent=15 // pred_check_branch
        %484 = sbr.rel (%p482) target = $region36
      $region35: #{attention_forward.4} parent=15 // pred_region
        %p485 = scmp.lt.s32.totalorder %s28, 1
        %s486 = scalar_select %p485, %s28, 1
        %s487 = smul.addr %s486, 8
        %s488 = scalar_lea.vmem %s4, %s487
      $region36: #{attention_forward.4} parent=15 // pred_fallthru
        _
      // Predicated region
      $region37: #{attention_forward.4} parent=15 // pred_check
        %p489 = pneg %p185
      $region38: #{attention_forward.4} parent=15 // pred_check_branch
        %491 = sbr.rel (%p489) target = $region40
      $region39: #{attention_forward.4} parent=15 // pred_region
        %p492 = scmp.lt.s32.totalorder %s28, 1
        %s493 = scalar_select %p492, %s28, 1
        %s494 = smul.addr %s493, 8
        %s495 = scalar_lea.vmem %s5, %s494
      $region40: #{attention_forward.4} parent=15 // pred_fallthru
        _
      // Predicated region
      $region41: #{attention_forward.4} parent=15 // pred_check
        %p496 = pneg %p211
      $region42: #{attention_forward.4} parent=15 // pred_check_branch
        %498 = sbr.rel (%p496) target = $region44
      $region43: #{attention_forward.4} parent=15 // pred_region
        %p499 = scmp.lt.s32.totalorder %s29, 2
        %s500 = scalar_select %p499, %s29, 2
        %s501 = smul.addr %s500, 5
        %s502 = smul.addr %s501, 4
        %s503 = scalar_lea.vmem %s6, %s502
      $region44: #{attention_forward.4} parent=15 // pred_fallthru
        _
      // Predicated region
      $region45: #{attention_forward.4} parent=15 // pred_check
        %p504 = pneg %p237
      $region46: #{attention_forward.4} parent=15 // pred_check_branch
        %506 = sbr.rel (%p504) target = $region48
      $region47: #{attention_forward.4} parent=15 // pred_region
        %p507 = scmp.lt.s32.totalorder %s29, 2
        %s508 = scalar_select %p507, %s29, 2
        %s509 = scalar_lea.vmem %s7, %s508
      $region48: #{attention_forward.4} parent=15 // pred_fallthru
        _
      // Predicated region
      $region49: #{attention_forward.4} parent=15 // pred_check
        %p510 = pneg %p263
      $region50: #{attention_forward.4} parent=15 // pred_check_branch
        %512 = sbr.rel (%p510) target = $region52
      $region51: #{attention_forward.4} parent=15 // pred_region
        %p513 = scmp.lt.s32.totalorder %s29, 2
        %s514 = scalar_select %p513, %s29, 2
        %s515 = smul.addr %s514, 2
        %s516 = smul.addr %s515, 4
        %s517 = scalar_lea.vmem %s8, %s516
      $region52: #{attention_forward.4} parent=15 // pred_fallthru
        _
      // Predicated region
      $region53: #{attention_forward.4} parent=15 // pred_check
        %p518 = pneg %p289
      $region54: #{attention_forward.4} parent=15 // pred_check_branch
        %520 = sbr.rel (%p518) target = $region56
      $region55: #{attention_forward.4} parent=15 // pred_region
        %p521 = scmp.lt.s32.totalorder %s29, 2
        %s522 = scalar_select %p521, %s29, 2
        %s523 = scalar_lea.vmem %s9, %s522
      $region56: #{attention_forward.4} parent=15 // pred_fallthru
        _
      // Predicated region
      $region57: #{attention_forward.4} parent=15 // pred_check
        %p524 = pneg %p315
      $region58: #{attention_forward.4} parent=15 // pred_check_branch
        %526 = sbr.rel (%p524) target = $region60
      $region59: #{attention_forward.4} parent=15 // pred_region
        %p527 = scmp.lt.s32.totalorder %s29, 2
        %s528 = scalar_select %p527, %s29, 2
        %s529 = smul.addr %s528, 2
        %s530 = smul.addr %s529, 4
        %s531 = scalar_lea.vmem %s10, %s530
      $region60: #{attention_forward.4} parent=15 // pred_fallthru
        _
      // Predicated region
      $region61: #{attention_forward.4} parent=15 // pred_check
        %p532 = pneg %p341
      $region62: #{attention_forward.4} parent=15 // pred_check_branch
        %534 = sbr.rel (%p532) target = $region64
      $region63: #{attention_forward.4} parent=15 // pred_region
        %p535 = scmp.lt.s32.totalorder %s29, 2
        %s536 = scalar_select %p535, %s29, 2
        %s537 = smul.addr %s536, 2
        %s538 = smul.addr %s537, 4
        %s539 = scalar_lea.vmem %s11, %s538
      $region64: #{attention_forward.4} parent=15 // pred_fallthru
        _
      // Predicated region
      $region65: #{attention_forward.4} parent=15 // pred_check
        %p540 = pneg %p367
      $region66: #{attention_forward.4} parent=15 // pred_check_branch
        %542 = sbr.rel (%p540) target = $region68
      $region67: #{attention_forward.4} parent=15 // pred_region
        %p543 = scmp.lt.s32.totalorder %s29, 2
        %s544 = scalar_select %p543, %s29, 2
        %s545 = scalar_lea.vmem %s12, %s544
      $region68: #{attention_forward.4} parent=15 // pred_fallthru
        _
    $region16: #{attention_forward.4} parent=5 // pred_fallthru
      _
    %p546 = scmp.le.s32.totalorder 1, %s21
    %p547 = scmp.lt.s32.totalorder %s21, 7
    %p548 = pnand %p546, %p547
    %p549 = pneg %p548
    // Predicated region
    $region69: #{attention_forward.4} parent=5 // pred_check
      _
    $region70: #{attention_forward.4} parent=5 // pred_check_branch
      %551 = sbr.rel (%p548) target = $region72
    $region71: #{attention_forward.4} parent=5 // pred_region
      %s552 = ssub.s32 %s21, 1
      %p553 = scmp.lt.s32.totalorder %s31, 2
      %s554 = scalar_select %p553, %s31, 2
      %p555 = scmp.lt.s32.totalorder %s30, 1
      %s556 = scalar_select %p555, %s30, 1
      %s557 = smul.addr %s554, 2
      %s558 = sadd.s32 %s556, %s557
      %s559 = smul.addr %s558, 4
      %s560 = scalar_lea.vmem %s0, %s559
      %p561 = pneg %p61
      %p562 = pneg %p58
      %p563 = scmp.lt.s32.totalorder %s30, 1
      %s564 = scalar_select %p563, %s30, 1
      %s565 = smul.addr %s564, 8
      %s566 = smul.addr %s565, 4
      %s567 = scalar_lea.vmem %s1, %s566
      %p568 = pneg %p87
      %p569 = pneg %p84
      %p570 = scmp.lt.s32.totalorder %s30, 1
      %s571 = scalar_select %p570, %s30, 1
      %s572 = smul.addr %s571, 8
      %s573 = smul.addr %s572, 8
      %s574 = scalar_lea.vmem %s2, %s573
      %p575 = pneg %p113
      %p576 = pneg %p110
      %p577 = scmp.lt.s32.totalorder %s30, 1
      %s578 = scalar_select %p577, %s30, 1
      %s579 = smul.addr %s578, 8
      %s580 = scalar_lea.vmem %s3, %s579
      %p581 = pneg %p139
      %p582 = pneg %p136
      %p583 = scmp.lt.s32.totalorder %s30, 1
      %s584 = scalar_select %p583, %s30, 1
      %s585 = smul.addr %s584, 8
      %s586 = scalar_lea.vmem %s4, %s585
      %p587 = pneg %p165
      %p588 = pneg %p162
      %p589 = scmp.lt.s32.totalorder %s30, 1
      %s590 = scalar_select %p589, %s30, 1
      %s591 = smul.addr %s590, 8
      %s592 = scalar_lea.vmem %s5, %s591
      %p593 = pneg %p191
      %p594 = pneg %p188
      %p595 = scmp.lt.s32.totalorder %s31, 2
      %s596 = scalar_select %p595, %s31, 2
      %s597 = smul.addr %s596, 5
      %s598 = smul.addr %s597, 4
      %s599 = scalar_lea.vmem %s6, %s598
      %p600 = pneg %p217
      %p601 = pneg %p214
      %p602 = scmp.lt.s32.totalorder %s31, 2
      %s603 = scalar_select %p602, %s31, 2
      %s604 = scalar_lea.vmem %s7, %s603
      %p605 = pneg %p243
      %p606 = pneg %p240
      %p607 = scmp.lt.s32.totalorder %s31, 2
      %s608 = scalar_select %p607, %s31, 2
      %s609 = smul.addr %s608, 2
      %s610 = smul.addr %s609, 4
      %s611 = scalar_lea.vmem %s8, %s610
      %p612 = pneg %p269
      %p613 = pneg %p266
      %p614 = scmp.lt.s32.totalorder %s31, 2
      %s615 = scalar_select %p614, %s31, 2
      %s616 = scalar_lea.vmem %s9, %s615
      %p617 = pneg %p295
      %p618 = pneg %p292
      %p619 = scmp.lt.s32.totalorder %s31, 2
      %s620 = scalar_select %p619, %s31, 2
      %s621 = smul.addr %s620, 2
      %s622 = smul.addr %s621, 4
      %s623 = scalar_lea.vmem %s10, %s622
      %p624 = pneg %p321
      %p625 = pneg %p318
      %p626 = scmp.lt.s32.totalorder %s31, 2
      %s627 = scalar_select %p626, %s31, 2
      %s628 = smul.addr %s627, 2
      %s629 = smul.addr %s628, 4
      %s630 = scalar_lea.vmem %s11, %s629
      %p631 = pneg %p347
      %p632 = pneg %p344
      %p633 = scmp.lt.s32.totalorder %s31, 2
      %s634 = scalar_select %p633, %s31, 2
      %s635 = scalar_lea.vmem %s12, %s634
      %p636 = pneg %p373
      %p637 = pneg %p370
      %p638 = pneg %p401
      %p639 = pneg %p398
      %p640 = scmp.lt.s32.totalorder %s31, 2
      %s641 = scalar_select %p640, %s31, 2
      %p642 = scmp.lt.s32.totalorder %s30, 1
      %s643 = scalar_select %p642, %s30, 1
      %s644 = smul.addr %s641, 2
      %s645 = sadd.s32 %s643, %s644
      %s646 = smul.addr %s645, 8
      %s647 = scalar_lea.vmem %s13, %s646
      %p648 = pneg %p429
      %p649 = pneg %p426
      %p650 = scmp.lt.s32.totalorder %s31, 2
      %s651 = scalar_select %p650, %s31, 2
      %p652 = scmp.lt.s32.totalorder %s30, 1
      %s653 = scalar_select %p652, %s30, 1
      %s654 = smul.addr %s651, 2
      %s655 = sadd.s32 %s653, %s654
      %s656 = smul.addr %s655, 8
      %s657 = scalar_lea.vmem %s14, %s656
      %p658 = scmp.lt.s32.totalorder %s31, 2
      %s659 = scalar_select %p658, %s31, 2
      %p660 = scmp.lt.s32.totalorder %s30, 1
      %s661 = scalar_select %p660, %s30, 1
      %s662 = smul.addr %s659, 2
      %s663 = sadd.s32 %s661, %s662
      %s664 = smul.addr %s663, 4
      %s665 = scalar_lea.vmem %s0, %s664
      %p666 = scmp.lt.s32.totalorder %s30, 1
      %s667 = scalar_select %p666, %s30, 1
      %s668 = smul.addr %s667, 8
      %s669 = smul.addr %s668, 4
      %s670 = scalar_lea.vmem %s1, %s669
      %p671 = scmp.lt.s32.totalorder %s30, 1
      %s672 = scalar_select %p671, %s30, 1
      %s673 = smul.addr %s672, 8
      %s674 = smul.addr %s673, 8
      %s675 = scalar_lea.vmem %s2, %s674
      %p676 = scmp.lt.s32.totalorder %s30, 1
      %s677 = scalar_select %p676, %s30, 1
      %s678 = smul.addr %s677, 8
      %s679 = scalar_lea.vmem %s3, %s678
      %p680 = scmp.lt.s32.totalorder %s30, 1
      %s681 = scalar_select %p680, %s30, 1
      %s682 = smul.addr %s681, 8
      %s683 = scalar_lea.vmem %s4, %s682
      %p684 = scmp.lt.s32.totalorder %s30, 1
      %s685 = scalar_select %p684, %s30, 1
      %s686 = smul.addr %s685, 8
      %s687 = scalar_lea.vmem %s5, %s686
      %p688 = scmp.lt.s32.totalorder %s31, 2
      %s689 = scalar_select %p688, %s31, 2
      %s690 = smul.addr %s689, 5
      %s691 = smul.addr %s690, 4
      %s692 = scalar_lea.vmem %s6, %s691
      %p693 = scmp.lt.s32.totalorder %s31, 2
      %s694 = scalar_select %p693, %s31, 2
      %s695 = scalar_lea.vmem %s7, %s694
      %p696 = scmp.lt.s32.totalorder %s31, 2
      %s697 = scalar_select %p696, %s31, 2
      %s698 = smul.addr %s697, 2
      %s699 = smul.addr %s698, 4
      %s700 = scalar_lea.vmem %s8, %s699
      %p701 = scmp.lt.s32.totalorder %s31, 2
      %s702 = scalar_select %p701, %s31, 2
      %s703 = scalar_lea.vmem %s9, %s702
      %p704 = scmp.lt.s32.totalorder %s31, 2
      %s705 = scalar_select %p704, %s31, 2
      %s706 = smul.addr %s705, 2
      %s707 = smul.addr %s706, 4
      %s708 = scalar_lea.vmem %s10, %s707
      %p709 = scmp.lt.s32.totalorder %s31, 2
      %s710 = scalar_select %p709, %s31, 2
      %s711 = smul.addr %s710, 2
      %s712 = smul.addr %s711, 4
      %s713 = scalar_lea.vmem %s11, %s712
      %p714 = scmp.lt.s32.totalorder %s31, 2
      %s715 = scalar_select %p714, %s31, 2
      %s716 = scalar_lea.vmem %s12, %s715
      %p717 = scmp.lt.s32.totalorder %s31, 2
      %s718 = scalar_select %p717, %s31, 2
      %p719 = scmp.lt.s32.totalorder %s30, 1
      %s720 = scalar_select %p719, %s30, 1
      %s721 = smul.addr %s718, 2
      %s722 = sadd.s32 %s720, %s721
      %s723 = smul.addr %s722, 8
      %s724 = scalar_lea.vmem %s13, %s723
      %p725 = scmp.lt.s32.totalorder %s31, 2
      %s726 = scalar_select %p725, %s31, 2
      %p727 = scmp.lt.s32.totalorder %s30, 1
      %s728 = scalar_select %p727, %s30, 1
      %s729 = smul.addr %s726, 2
      %s730 = sadd.s32 %s728, %s729
      %s731 = smul.addr %s730, 8
      %s732 = scalar_lea.vmem %s14, %s731
      %v734 = vld [vmem:[%s665] sm:$0xf]
      %v735 = vld [vmem:[%s670] sm:$0xf]
      %v736 = vld [vmem:[%s670 + $0x4] sm:$0xf]
      %v737 = vld [vmem:[%s670 + $0x8] sm:$0xf]
      %v738 = vld [vmem:[%s670 + $0xc] sm:$0xf]
      %v739 = vld [vmem:[%s670 + $0x10] sm:$0xf]
      %v740 = vld [vmem:[%s670 + $0x14] sm:$0xf]
      %v741 = vld [vmem:[%s670 + $0x18] sm:$0xf]
      %v742 = vld [vmem:[%s670 + $0x1c] sm:$0xf]
      %v743 = vld [vmem:[%s675] sm:$0xff]
      %v744 = vld [vmem:[%s675 + $0x8] sm:$0xff]
      %v745 = vld [vmem:[%s675 + $0x10] sm:$0xff]
      %v746 = vld [vmem:[%s675 + $0x18] sm:$0xff]
      %v747 = vld [vmem:[%s675 + $0x20] sm:$0xff]
      %v748 = vld [vmem:[%s675 + $0x28] sm:$0xff]
      %v749 = vld [vmem:[%s675 + $0x30] sm:$0xff]
      %v750 = vld [vmem:[%s675 + $0x38] sm:$0xff]
      %v751 = vld [vmem:[%s679] sm:$0xff]
      %v752 = vld [vmem:[%s683] sm:$0xff]
      %v753 = vld [vmem:[%s687] sm:$0xff]
      %v754 = vld [vmem:[%s692] sm:$0xf]
      %v755 = vld [vmem:[%s692 + $0x4] sm:$0xf]
      %v756 = vld [vmem:[%s692 + $0x8] sm:$0xf]
      %v757 = vld [vmem:[%s692 + $0xc] sm:$0xf]
      %v758 = vld [vmem:[%s692 + $0x10] sm:$0x3]
      %v761 = vunpack.c.l.b16 %v754
      %v762 = vunpack.c.l.b16 %v755
      %v763 = vpack.c.b16 %v762, %v761
      %vm765 = vcmask 130048
      %v767 = vsel %vm765, %v734, 0
      %769 = vmatprep.subr.bf16.mxu0 0
      %770 = vmatpush1.bf16.msra.mxu0 %v763
      %771 = vmatprep.subr.bf16.mxu0 0
      %772 = vmatpush1.bf16.msra.mxu0 0
      %773 = vmatprep.subr.bf16.mxu0 0
      %774 = vmatpush1.bf16.msra.mxu0 0
      %775 = vmatprep.subr.bf16.mxu0 0
      %776 = vmatpush1.bf16.msra.mxu0 0
      %777 = vmatprep.subr.bf16.mxu0 0
      %778 = vmatpush1.bf16.msra.mxu0 0
      %779 = vmatprep.subr.bf16.mxu0 0
      %780 = vmatpush1.bf16.msra.mxu0 0
      %781 = vmatprep.subr.bf16.mxu0 0
      %782 = vmatpush1.bf16.msra.mxu0 0
      %783 = vmatprep.subr.bf16.mxu0 0
      %784 = vmatpush1.bf16.msra.mxu0 0
      %785 = vmatprep.subr.bf16.mxu0 0
      %786 = vmatpush1.bf16.msra.mxu0 0
      %787 = vmatprep.subr.bf16.mxu0 0
      %788 = vmatpush1.bf16.msra.mxu0 0
      %789 = vmatprep.subr.bf16.mxu0 0
      %790 = vmatpush1.bf16.msra.mxu0 0
      %791 = vmatprep.subr.bf16.mxu0 0
      %792 = vmatpush1.bf16.msra.mxu0 0
      %793 = vmatprep.subr.bf16.mxu0 0
      %794 = vmatpush1.bf16.msra.mxu0 0
      %795 = vmatprep.subr.bf16.mxu0 0
      %796 = vmatpush1.bf16.msra.mxu0 0
      %797 = vmatprep.subr.bf16.mxu0 0
      %798 = vmatpush1.bf16.msra.mxu0 0
      %799 = vmatprep.subr.bf16.mxu0 0
      %800 = vmatpush1.bf16.msra.mxu0 0
      %801 = vmatprep.mubr.bf16.mxu0 0
      %802 = vmatmul.mubr.bf16.gmra.mrb[0].mxu0 %v767
      %v803 = vpop.f32.mrb[0].mxu0
      %v804 = vadd.f32 0.0, %v803
      %v805 = vpop.f32.mrb[0].mxu0
      %v806 = vpop.f32.mrb[0].mxu0
      %v807 = vpop.f32.mrb[0].mxu0
      %808 = vdwg.mxu0
      %v811 = vunpack.c.l.b16 %v756
      %v812 = vunpack.c.l.b16 %v757
      %v813 = vpack.c.b16 %v812, %v811
      %815 = vmatprep.subr.bf16.mxu0 0
      %816 = vmatpush1.bf16.msra.mxu0 %v813
      %817 = vmatprep.subr.bf16.mxu0 0
      %818 = vmatpush1.bf16.msra.mxu0 0
      %819 = vmatprep.subr.bf16.mxu0 0
      %820 = vmatpush1.bf16.msra.mxu0 0
      %821 = vmatprep.subr.bf16.mxu0 0
      %822 = vmatpush1.bf16.msra.mxu0 0
      %823 = vmatprep.subr.bf16.mxu0 0
      %824 = vmatpush1.bf16.msra.mxu0 0
      %825 = vmatprep.subr.bf16.mxu0 0
      %826 = vmatpush1.bf16.msra.mxu0 0
      %827 = vmatprep.subr.bf16.mxu0 0
      %828 = vmatpush1.bf16.msra.mxu0 0
      %829 = vmatprep.subr.bf16.mxu0 0
      %830 = vmatpush1.bf16.msra.mxu0 0
      %831 = vmatprep.subr.bf16.mxu0 0
      %832 = vmatpush1.bf16.msra.mxu0 0
      %833 = vmatprep.subr.bf16.mxu0 0
      %834 = vmatpush1.bf16.msra.mxu0 0
      %835 = vmatprep.subr.bf16.mxu0 0
      %836 = vmatpush1.bf16.msra.mxu0 0
      %837 = vmatprep.subr.bf16.mxu0 0
      %838 = vmatpush1.bf16.msra.mxu0 0
      %839 = vmatprep.subr.bf16.mxu0 0
      %840 = vmatpush1.bf16.msra.mxu0 0
      %841 = vmatprep.subr.bf16.mxu0 0
      %842 = vmatpush1.bf16.msra.mxu0 0
      %843 = vmatprep.subr.bf16.mxu0 0
      %844 = vmatpush1.bf16.msra.mxu0 0
      %845 = vmatprep.subr.bf16.mxu0 0
      %846 = vmatpush1.bf16.msra.mxu0 0
      %847 = vmatprep.mubr.bf16.mxu0 0
      %848 = vmatmul.mubr.bf16.gmra.mrb[0].mxu0 %v767
      %v849 = vpop.f32.mrb[0].mxu0
      %v850 = vadd.f32 0.0, %v849
      %v851 = vpop.f32.mrb[0].mxu0
      %v852 = vpop.f32.mrb[0].mxu0
      %v853 = vpop.f32.mrb[0].mxu0
      %854 = vdwg.mxu0
      %v863 = vunpack.c.l.b16 %v735
      %v864 = vunpack.c.l.b16 %v736
      %v865 = vunpack.c.l.b16 %v737
      %v866 = vunpack.c.l.b16 %v738
      %v867 = vunpack.c.l.b16 %v739
      %v868 = vunpack.c.l.b16 %v740
      %v869 = vunpack.c.l.b16 %v741
      %v870 = vunpack.c.l.b16 %v742
      %v871 = vpack.c.b16 %v864, %v863
      %v872 = vpack.c.b16 %v866, %v865
      %v873 = vpack.c.b16 %v868, %v867
      %v874 = vpack.c.b16 %v870, %v869
      %vm875 = vcmask 23552
      %v877 = vsel %vm875, %v871, 0
      %v880 = vsel %vm875, %v872, 0
      %v883 = vsel %vm875, %v873, 0
      %v886 = vsel %vm875, %v874, 0
      %vm888 = vcmask 1040384
      %vm889 = vcmask 1041408
      %v890 = vsel %vm888, 4294967295, 65535
      %v891 = vsel %vm889, %v890, 0
      %v893 = vand.u32 %v758, %v891
      %895 = vmatprep.subr.bf16.mxu0 0
      %896 = vmatpush1.bf16.msra.mxu0 %v893
      %897 = vmatprep.subr.bf16.mxu0 0
      %898 = vmatpush1.bf16.msra.mxu0 0
      %899 = vmatprep.subr.bf16.mxu0 0
      %900 = vmatpush1.bf16.msra.mxu0 0
      %901 = vmatprep.subr.bf16.mxu0 0
      %902 = vmatpush1.bf16.msra.mxu0 0
      %903 = vmatprep.subr.bf16.mxu0 0
      %904 = vmatpush1.bf16.msra.mxu0 0
      %905 = vmatprep.subr.bf16.mxu0 0
      %906 = vmatpush1.bf16.msra.mxu0 0
      %907 = vmatprep.subr.bf16.mxu0 0
      %908 = vmatpush1.bf16.msra.mxu0 0
      %909 = vmatprep.subr.bf16.mxu0 0
      %910 = vmatpush1.bf16.msra.mxu0 0
      %911 = vmatprep.subr.bf16.mxu0 0
      %912 = vmatpush1.bf16.msra.mxu0 0
      %913 = vmatprep.subr.bf16.mxu0 0
      %914 = vmatpush1.bf16.msra.mxu0 0
      %915 = vmatprep.subr.bf16.mxu0 0
      %916 = vmatpush1.bf16.msra.mxu0 0
      %917 = vmatprep.subr.bf16.mxu0 0
      %918 = vmatpush1.bf16.msra.mxu0 0
      %919 = vmatprep.subr.bf16.mxu0 0
      %920 = vmatpush1.bf16.msra.mxu0 0
      %921 = vmatprep.subr.bf16.mxu0 0
      %922 = vmatpush1.bf16.msra.mxu0 0
      %923 = vmatprep.subr.bf16.mxu0 0
      %924 = vmatpush1.bf16.msra.mxu0 0
      %925 = vmatprep.subr.bf16.mxu0 0
      %926 = vmatpush1.bf16.msra.mxu0 0
      %927 = vmatprep.mubr.bf16.mxu0 0
      %928 = vmatmul.mubr.bf16.gmra.mrb[0].mxu0 %v877
      %v929 = vpop.f32.mrb[0].mxu0
      %v930 = vadd.f32 0.0, %v929
      %v931 = vpop.f32.mrb[0].mxu0
      %v932 = vpop.f32.mrb[0].mxu0
      %v933 = vadd.f32 0.0, %v932
      %v934 = vpop.f32.mrb[0].mxu0
      %935 = vmatprep.mubr.bf16.mxu0 0
      %936 = vmatmul.mubr.bf16.gmra.mrb[0].mxu0 %v880
      %v937 = vpop.f32.mrb[0].mxu0
      %v938 = vadd.f32 0.0, %v937
      %v939 = vpop.f32.mrb[0].mxu0
      %v940 = vpop.f32.mrb[0].mxu0
      %v941 = vadd.f32 0.0, %v940
      %v942 = vpop.f32.mrb[0].mxu0
      %943 = vmatprep.mubr.bf16.mxu0 0
      %944 = vmatmul.mubr.bf16.gmra.mrb[0].mxu0 %v883
      %v945 = vpop.f32.mrb[0].mxu0
      %v946 = vadd.f32 0.0, %v945
      %v947 = vpop.f32.mrb[0].mxu0
      %v948 = vpop.f32.mrb[0].mxu0
      %v949 = vadd.f32 0.0, %v948
      %v950 = vpop.f32.mrb[0].mxu0
      %951 = vmatprep.mubr.bf16.mxu0 0
      %952 = vmatmul.mubr.bf16.gmra.mrb[0].mxu0 %v886
      %v953 = vpop.f32.mrb[0].mxu0
      %v954 = vadd.f32 0.0, %v953
      %v955 = vpop.f32.mrb[0].mxu0
      %v956 = vpop.f32.mrb[0].mxu0
      %v957 = vadd.f32 0.0, %v956
      %v958 = vpop.f32.mrb[0].mxu0
      %959 = vdwg.mxu0
      %v961 = vcombine.high %v804, %v804
      %v963 = vunpack.c.l.s4 1966171168
      %v964 = vunpack.c.0.s8 %v963
      %v965 = vlaneseq
      %v966 = vshrl.u32 %v965, 7
      %v967 = vsub.s32 %v964, %v966
      %v968 = vrot.slane %v804, %v967
      %v970 = vunpack.c.l.s4 1966171168
      %v971 = vunpack.c.0.s8 %v970
      %v972 = vlaneseq
      %v973 = vshrl.u32 %v972, 7
      %v974 = vsub.s32 %v971, %v973
      %v975 = vrot.slane %v961, %v974
      %v976 = vcombine.high %v968, %v968
      %v977 = vcombine.high %v975, %v975
      %v979 = vunpack.c.l.s4 1966171168
      %v980 = vunpack.c.0.s8 %v979
      %v981 = vlaneseq
      %v982 = vshrl.u32 %v981, 7
      %v983 = vsub.s32 %v980, %v982
      %v984 = vrot.slane %v968, %v983
      %v986 = vunpack.c.l.s4 1966171168
      %v987 = vunpack.c.0.s8 %v986
      %v988 = vlaneseq
      %v989 = vshrl.u32 %v988, 7
      %v990 = vsub.s32 %v987, %v989
      %v991 = vrot.slane %v975, %v990
      %v993 = vunpack.c.l.s4 1966171168
      %v994 = vunpack.c.0.s8 %v993
      %v995 = vlaneseq
      %v996 = vshrl.u32 %v995, 7
      %v997 = vsub.s32 %v994, %v996
      %v998 = vrot.slane %v976, %v997
      %v1000 = vunpack.c.l.s4 1966171168
      %v1001 = vunpack.c.0.s8 %v1000
      %v1002 = vlaneseq
      %v1003 = vshrl.u32 %v1002, 7
      %v1004 = vsub.s32 %v1001, %v1003
      %v1005 = vrot.slane %v977, %v1004
      %v1006 = vcombine.high %v984, %v984
      %v1007 = vcombine.high %v991, %v991
      %v1008 = vcombine.high %v998, %v998
      %v1009 = vcombine.high %v1005, %v1005
      %v1010 = vlaneseq
      %v1011 = vshrl.u32 %v1010, 7
      %v1012 = vsub.s32 0, %v1011
      %v1013 = vrot.slane %v984, %v1012
      %v1014 = vlaneseq
      %v1015 = vshrl.u32 %v1014, 7
      %v1016 = vsub.s32 0, %v1015
      %v1017 = vrot.slane %v998, %v1016
      %v1018 = vlaneseq
      %v1019 = vshrl.u32 %v1018, 7
      %v1020 = vsub.s32 0, %v1019
      %v1021 = vrot.slane %v1006, %v1020
      %v1022 = vlaneseq
      %v1023 = vshrl.u32 %v1022, 7
      %v1024 = vsub.s32 0, %v1023
      %v1025 = vrot.slane %v1008, %v1024
      %v1026 = vlaneseq
      %v1027 = vshrl.u32 %v1026, 7
      %v1028 = vsub.s32 0, %v1027
      %v1029 = vrot.slane %v991, %v1028
      %v1030 = vlaneseq
      %v1031 = vshrl.u32 %v1030, 7
      %v1032 = vsub.s32 0, %v1031
      %v1033 = vrot.slane %v1005, %v1032
      %v1034 = vlaneseq
      %v1035 = vshrl.u32 %v1034, 7
      %v1036 = vsub.s32 0, %v1035
      %v1037 = vrot.slane %v1007, %v1036
      %v1038 = vlaneseq
      %v1039 = vshrl.u32 %v1038, 7
      %v1040 = vsub.s32 0, %v1039
      %v1041 = vrot.slane %v1009, %v1040
      %v1050 = vadd.f32 %v930, %v1013
      %v1051 = vadd.f32 %v933, %v1017
      %v1052 = vadd.f32 %v938, %v1021
      %v1053 = vadd.f32 %v941, %v1025
      %v1054 = vadd.f32 %v946, %v1029
      %v1055 = vadd.f32 %v949, %v1033
      %v1056 = vadd.f32 %v954, %v1037
      %v1057 = vadd.f32 %v957, %v1041
      %v1058 = vadd.f32 %v1050, %v850
      %v1059 = vadd.f32 %v1051, %v850
      %v1060 = vadd.f32 %v1052, %v850
      %v1061 = vadd.f32 %v1053, %v850
      %v1062 = vadd.f32 %v1054, %v850
      %v1063 = vadd.f32 %v1055, %v850
      %v1064 = vadd.f32 %v1056, %v850
      %v1065 = vadd.f32 %v1057, %v850
      %v1066 = vld [vmem:[%s695] sm:$0x1]
      %v1068 = vlaneseq
      %v1069 = vshrl.u32 %v1068, 7
      %v1070 = vsub.s32 0, %v1069
      %v1071 = vrot.slane %v1066, %v1070
      %v1073 = vadd.f32 %v1058, %v1071
      %v1074 = vadd.f32 %v1059, %v1071
      %v1075 = vadd.f32 %v1060, %v1071
      %v1076 = vadd.f32 %v1061, %v1071
      %v1077 = vadd.f32 %v1062, %v1071
      %v1078 = vadd.f32 %v1063, %v1071
      %v1079 = vadd.f32 %v1064, %v1071
      %v1080 = vadd.f32 %v1065, %v1071
      %v1081 = vxor.u32 %v1073, 2147483648
      %v1082 = vxor.u32 %v1074, 2147483648
      %v1083 = vxor.u32 %v1075, 2147483648
      %v1084 = vxor.u32 %v1076, 2147483648
      %v1085 = vxor.u32 %v1077, 2147483648
      %v1086 = vxor.u32 %v1078, 2147483648
      %v1087 = vxor.u32 %v1079, 2147483648
      %v1088 = vxor.u32 %v1080, 2147483648
      %v1089 = vmul.f32 %v1081, 1.442695
      %v1090 = vpow.pop %v1089
      %v1091 = vmul.f32 %v1082, 1.442695
      %v1092 = vpow.pop %v1091
      %v1093 = vmul.f32 %v1083, 1.442695
      %v1094 = vpow.pop %v1093
      %v1095 = vmul.f32 %v1084, 1.442695
      %v1096 = vpow.pop %v1095
      %v1097 = vmul.f32 %v1085, 1.442695
      %v1098 = vpow.pop %v1097
      %v1099 = vmul.f32 %v1086, 1.442695
      %v1100 = vpow.pop %v1099
      %v1101 = vmul.f32 %v1087, 1.442695
      %v1102 = vpow.pop %v1101
      %v1103 = vmul.f32 %v1088, 1.442695
      %v1104 = vpow.pop %v1103
      %v1105 = vadd.f32 %v1090, 1.0
      %v1106 = vadd.f32 %v1092, 1.0
      %v1107 = vadd.f32 %v1094, 1.0
      %v1108 = vadd.f32 %v1096, 1.0
      %v1109 = vadd.f32 %v1098, 1.0
      %v1110 = vadd.f32 %v1100, 1.0
      %v1111 = vadd.f32 %v1102, 1.0
      %v1112 = vadd.f32 %v1104, 1.0
      %v1113 = vrcp.pop %v1105
      %v1114 = vmul.f32 1.0, %v1113
      %v1115 = vrcp.pop %v1106
      %v1116 = vmul.f32 1.0, %v1115
      %v1117 = vrcp.pop %v1107
      %v1118 = vmul.f32 1.0, %v1117
      %v1119 = vrcp.pop %v1108
      %v1120 = vmul.f32 1.0, %v1119
      %v1121 = vrcp.pop %v1109
      %v1122 = vmul.f32 1.0, %v1121
      %v1123 = vrcp.pop %v1110
      %v1124 = vmul.f32 1.0, %v1123
      %v1125 = vrcp.pop %v1111
      %v1126 = vmul.f32 1.0, %v1125
      %v1127 = vrcp.pop %v1112
      %v1128 = vmul.f32 1.0, %v1127
      %v1129 = vmul.f32 %v1073, %v1114
      %v1130 = vmul.f32 %v1074, %v1116
      %v1131 = vmul.f32 %v1075, %v1118
      %v1132 = vmul.f32 %v1076, %v1120
      %v1133 = vmul.f32 %v1077, %v1122
      %v1134 = vmul.f32 %v1078, %v1124
      %v1135 = vmul.f32 %v1079, %v1126
      %v1136 = vmul.f32 %v1080, %v1128
      %v1137 = vpack.c.bf16 %v1130, %v1129
      %v1138 = vpack.c.bf16 %v1132, %v1131
      %v1139 = vpack.c.bf16 %v1134, %v1133
      %v1140 = vpack.c.bf16 %v1136, %v1135
      %v1141 = vld [vmem:[%s700] sm:$0xf]
      %v1142 = vld [vmem:[%s700 + $0x4] sm:$0xf]
      %v1143 = vld [vmem:[%s703] sm:$0x1]
      %v1145 = vlaneseq
      %v1146 = vshrl.u32 %v1145, 7
      %v1147 = vsub.s32 0, %v1146
      %v1148 = vrot.slane %v1143, %v1147
      %v1152 = vunpack.c.l.b16 %v1141
      %v1153 = vunpack.c.l.b16 %v1142
      %v1154 = vpack.c.b16 %v1153, %v1152
      %v1157 = vsel %vm765, %v1137, 0
      %v1160 = vsel %vm765, %v1138, 0
      %v1163 = vsel %vm765, %v1139, 0
      %v1166 = vsel %vm765, %v1140, 0
      %1168 = vmatprep.subr.bf16.mxu0 0
      %1169 = vmatpush1.bf16.msra.mxu0 %v1154
      %1170 = vmatprep.subr.bf16.mxu0 0
      %1171 = vmatpush1.bf16.msra.mxu0 0
      %1172 = vmatprep.subr.bf16.mxu0 0
      %1173 = vmatpush1.bf16.msra.mxu0 0
      %1174 = vmatprep.subr.bf16.mxu0 0
      %1175 = vmatpush1.bf16.msra.mxu0 0
      %1176 = vmatprep.subr.bf16.mxu0 0
      %1177 = vmatpush1.bf16.msra.mxu0 0
      %1178 = vmatprep.subr.bf16.mxu0 0
      %1179 = vmatpush1.bf16.msra.mxu0 0
      %1180 = vmatprep.subr.bf16.mxu0 0
      %1181 = vmatpush1.bf16.msra.mxu0 0
      %1182 = vmatprep.subr.bf16.mxu0 0
      %1183 = vmatpush1.bf16.msra.mxu0 0
      %1184 = vmatprep.subr.bf16.mxu0 0
      %1185 = vmatpush1.bf16.msra.mxu0 0
      %1186 = vmatprep.subr.bf16.mxu0 0
      %1187 = vmatpush1.bf16.msra.mxu0 0
      %1188 = vmatprep.subr.bf16.mxu0 0
      %1189 = vmatpush1.bf16.msra.mxu0 0
      %1190 = vmatprep.subr.bf16.mxu0 0
      %1191 = vmatpush1.bf16.msra.mxu0 0
      %1192 = vmatprep.subr.bf16.mxu0 0
      %1193 = vmatpush1.bf16.msra.mxu0 0
      %1194 = vmatprep.subr.bf16.mxu0 0
      %1195 = vmatpush1.bf16.msra.mxu0 0
      %1196 = vmatprep.subr.bf16.mxu0 0
      %1197 = vmatpush1.bf16.msra.mxu0 0
      %1198 = vmatprep.subr.bf16.mxu0 0
      %1199 = vmatpush1.bf16.msra.mxu0 0
      %1200 = vmatprep.mubr.bf16.mxu0 0
      %1201 = vmatmul.mubr.bf16.gmra.mrb[0].mxu0 %v1157
      %v1202 = vpop.f32.mrb[0].mxu0
      %v1203 = vadd.f32 %v1148, %v1202
      %v1204 = vpop.f32.mrb[0].mxu0
      %v1205 = vpop.f32.mrb[0].mxu0
      %v1206 = vadd.f32 %v1148, %v1205
      %v1207 = vpop.f32.mrb[0].mxu0
      %1208 = vmatprep.mubr.bf16.mxu0 0
      %1209 = vmatmul.mubr.bf16.gmra.mrb[0].mxu0 %v1160
      %v1210 = vpop.f32.mrb[0].mxu0
      %v1211 = vadd.f32 %v1148, %v1210
      %v1212 = vpop.f32.mrb[0].mxu0
      %v1213 = vpop.f32.mrb[0].mxu0
      %v1214 = vadd.f32 %v1148, %v1213
      %v1215 = vpop.f32.mrb[0].mxu0
      %1216 = vmatprep.mubr.bf16.mxu0 0
      %1217 = vmatmul.mubr.bf16.gmra.mrb[0].mxu0 %v1163
      %v1218 = vpop.f32.mrb[0].mxu0
      %v1219 = vadd.f32 %v1148, %v1218
      %v1220 = vpop.f32.mrb[0].mxu0
      %v1221 = vpop.f32.mrb[0].mxu0
      %v1222 = vadd.f32 %v1148, %v1221
      %v1223 = vpop.f32.mrb[0].mxu0
      %1224 = vmatprep.mubr.bf16.mxu0 0
      %1225 = vmatmul.mubr.bf16.gmra.mrb[0].mxu0 %v1166
      %v1226 = vpop.f32.mrb[0].mxu0
      %v1227 = vadd.f32 %v1148, %v1226
      %v1228 = vpop.f32.mrb[0].mxu0
      %v1229 = vpop.f32.mrb[0].mxu0
      %v1230 = vadd.f32 %v1148, %v1229
      %v1231 = vpop.f32.mrb[0].mxu0
      %1232 = vdwg.mxu0
      %v1233 = vxor.u32 %v1203, 2147483648
      %v1234 = vxor.u32 %v1206, 2147483648
      %v1235 = vxor.u32 %v1211, 2147483648
      %v1236 = vxor.u32 %v1214, 2147483648
      %v1237 = vxor.u32 %v1219, 2147483648
      %v1238 = vxor.u32 %v1222, 2147483648
      %v1239 = vxor.u32 %v1227, 2147483648
      %v1240 = vxor.u32 %v1230, 2147483648
      %v1241 = vmul.f32 %v1233, 1.442695
      %v1242 = vpow.pop %v1241
      %v1243 = vmul.f32 %v1234, 1.442695
      %v1244 = vpow.pop %v1243
      %v1245 = vmul.f32 %v1235, 1.442695
      %v1246 = vpow.pop %v1245
      %v1247 = vmul.f32 %v1236, 1.442695
      %v1248 = vpow.pop %v1247
      %v1249 = vmul.f32 %v1237, 1.442695
      %v1250 = vpow.pop %v1249
      %v1251 = vmul.f32 %v1238, 1.442695
      %v1252 = vpow.pop %v1251
      %v1253 = vmul.f32 %v1239, 1.442695
      %v1254 = vpow.pop %v1253
      %v1255 = vmul.f32 %v1240, 1.442695
      %v1256 = vpow.pop %v1255
      %v1257 = vadd.f32 %v1242, 1.0
      %v1258 = vadd.f32 %v1244, 1.0
      %v1259 = vadd.f32 %v1246, 1.0
      %v1260 = vadd.f32 %v1248, 1.0
      %v1261 = vadd.f32 %v1250, 1.0
      %v1262 = vadd.f32 %v1252, 1.0
      %v1263 = vadd.f32 %v1254, 1.0
      %v1264 = vadd.f32 %v1256, 1.0
      %v1265 = vrcp.pop %v1257
      %v1266 = vmul.f32 1.0, %v1265
      %v1267 = vrcp.pop %v1258
      %v1268 = vmul.f32 1.0, %v1267
      %v1269 = vrcp.pop %v1259
      %v1270 = vmul.f32 1.0, %v1269
      %v1271 = vrcp.pop %v1260
      %v1272 = vmul.f32 1.0, %v1271
      %v1273 = vrcp.pop %v1261
      %v1274 = vmul.f32 1.0, %v1273
      %v1275 = vrcp.pop %v1262
      %v1276 = vmul.f32 1.0, %v1275
      %v1277 = vrcp.pop %v1263
      %v1278 = vmul.f32 1.0, %v1277
      %v1279 = vrcp.pop %v1264
      %v1280 = vmul.f32 1.0, %v1279
      %v1281 = vmul.f32 %v1203, %v1266
      %v1282 = vmul.f32 %v1206, %v1268
      %v1283 = vmul.f32 %v1211, %v1270
      %v1284 = vmul.f32 %v1214, %v1272
      %v1285 = vmul.f32 %v1219, %v1274
      %v1286 = vmul.f32 %v1222, %v1276
      %v1287 = vmul.f32 %v1227, %v1278
      %v1288 = vmul.f32 %v1230, %v1280
      %v1289 = vpack.c.bf16 %v1282, %v1281
      %v1290 = vpack.c.bf16 %v1284, %v1283
      %v1291 = vpack.c.bf16 %v1286, %v1285
      %v1292 = vpack.c.bf16 %v1288, %v1287
      %v1293 = vld [vmem:[%s708] sm:$0xf]
      %v1294 = vld [vmem:[%s708 + $0x4] sm:$0xf]
      %v1297 = vunpack.c.l.b16 %v1293
      %v1298 = vunpack.c.l.b16 %v1294
      %v1299 = vpack.c.b16 %v1298, %v1297
      %v1302 = vsel %vm765, %v1289, 0
      %v1305 = vsel %vm765, %v1290, 0
      %v1308 = vsel %vm765, %v1291, 0
      %v1311 = vsel %vm765, %v1292, 0
      %1313 = vmatprep.subr.bf16.mxu0 0
      %1314 = vmatpush1.bf16.msra.mxu0 %v1299
      %1315 = vmatprep.subr.bf16.mxu0 0
      %1316 = vmatpush1.bf16.msra.mxu0 0
      %1317 = vmatprep.subr.bf16.mxu0 0
      %1318 = vmatpush1.bf16.msra.mxu0 0
      %1319 = vmatprep.subr.bf16.mxu0 0
      %1320 = vmatpush1.bf16.msra.mxu0 0
      %1321 = vmatprep.subr.bf16.mxu0 0
      %1322 = vmatpush1.bf16.msra.mxu0 0
      %1323 = vmatprep.subr.bf16.mxu0 0
      %1324 = vmatpush1.bf16.msra.mxu0 0
      %1325 = vmatprep.subr.bf16.mxu0 0
      %1326 = vmatpush1.bf16.msra.mxu0 0
      %1327 = vmatprep.subr.bf16.mxu0 0
      %1328 = vmatpush1.bf16.msra.mxu0 0
      %1329 = vmatprep.subr.bf16.mxu0 0
      %1330 = vmatpush1.bf16.msra.mxu0 0
      %1331 = vmatprep.subr.bf16.mxu0 0
      %1332 = vmatpush1.bf16.msra.mxu0 0
      %1333 = vmatprep.subr.bf16.mxu0 0
      %1334 = vmatpush1.bf16.msra.mxu0 0
      %1335 = vmatprep.subr.bf16.mxu0 0
      %1336 = vmatpush1.bf16.msra.mxu0 0
      %1337 = vmatprep.subr.bf16.mxu0 0
      %1338 = vmatpush1.bf16.msra.mxu0 0
      %1339 = vmatprep.subr.bf16.mxu0 0
      %1340 = vmatpush1.bf16.msra.mxu0 0
      %1341 = vmatprep.subr.bf16.mxu0 0
      %1342 = vmatpush1.bf16.msra.mxu0 0
      %1343 = vmatprep.subr.bf16.mxu0 0
      %1344 = vmatpush1.bf16.msra.mxu0 0
      %1345 = vmatprep.mubr.bf16.mxu0 0
      %1346 = vmatmul.mubr.bf16.gmra.mrb[0].mxu0 %v1302
      %v1347 = vpop.f32.mrb[0].mxu0
      %v1348 = vadd.f32 0.0, %v1347
      %v1349 = vpop.f32.mrb[0].mxu0
      %v1350 = vpop.f32.mrb[0].mxu0
      %v1351 = vadd.f32 0.0, %v1350
      %v1352 = vpop.f32.mrb[0].mxu0
      %1353 = vmatprep.mubr.bf16.mxu0 0
      %1354 = vmatmul.mubr.bf16.gmra.mrb[0].mxu0 %v1305
      %v1355 = vpop.f32.mrb[0].mxu0
      %v1356 = vadd.f32 0.0, %v1355
      %v1357 = vpop.f32.mrb[0].mxu0
      %v1358 = vpop.f32.mrb[0].mxu0
      %v1359 = vadd.f32 0.0, %v1358
      %v1360 = vpop.f32.mrb[0].mxu0
      %1361 = vmatprep.mubr.bf16.mxu0 0
      %1362 = vmatmul.mubr.bf16.gmra.mrb[0].mxu0 %v1308
      %v1363 = vpop.f32.mrb[0].mxu0
      %v1364 = vadd.f32 0.0, %v1363
      %v1365 = vpop.f32.mrb[0].mxu0
      %v1366 = vpop.f32.mrb[0].mxu0
      %v1367 = vadd.f32 0.0, %v1366
      %v1368 = vpop.f32.mrb[0].mxu0
      %1369 = vmatprep.mubr.bf16.mxu0 0
      %1370 = vmatmul.mubr.bf16.gmra.mrb[0].mxu0 %v1311
      %v1371 = vpop.f32.mrb[0].mxu0
      %v1372 = vadd.f32 0.0, %v1371
      %v1373 = vpop.f32.mrb[0].mxu0
      %v1374 = vpop.f32.mrb[0].mxu0
      %v1375 = vadd.f32 0.0, %v1374
      %v1376 = vpop.f32.mrb[0].mxu0
      %1377 = vdwg.mxu0
      %v1378 = vtanh.pop %v1348
      %v1379 = vtanh.pop %v1351
      %v1380 = vtanh.pop %v1356
      %v1381 = vtanh.pop %v1359
      %v1382 = vtanh.pop %v1364
      %v1383 = vtanh.pop %v1367
      %v1384 = vtanh.pop %v1372
      %v1385 = vtanh.pop %v1375
      %v1386 = vmul.f32 %v1378, 15.0
      %v1387 = vmul.f32 %v1379, 15.0
      %v1388 = vmul.f32 %v1380, 15.0
      %v1389 = vmul.f32 %v1381, 15.0
      %v1390 = vmul.f32 %v1382, 15.0
      %v1391 = vmul.f32 %v1383, 15.0
      %v1392 = vmul.f32 %v1384, 15.0
      %v1393 = vmul.f32 %v1385, 15.0
      %v1394 = vlaneseq
      %v1395 = vshrl.u32 %v1394, 7
      %v1396 = vsub.s32 0, %v1395
      %v1397 = vrot.slane %v751, %v1396
      %1399 = vbcast.lane.b32.xlu0 %v1397, 256
      %v1400 = vpop.permute.xlu0 %1399
      %v1401 = vlaneseq
      %v1402 = vshrl.u32 %v1401, 7
      %v1403 = vsub.s32 1, %v1402
      %v1404 = vrot.slane %v751, %v1403
      %1406 = vbcast.lane.b32.xlu0 %v1404, 256
      %v1407 = vpop.permute.xlu0 %1406
      %v1408 = vlaneseq
      %v1409 = vshrl.u32 %v1408, 7
      %v1410 = vsub.s32 2, %v1409
      %v1411 = vrot.slane %v751, %v1410
      %1413 = vbcast.lane.b32.xlu0 %v1411, 256
      %v1414 = vpop.permute.xlu0 %1413
      %v1415 = vlaneseq
      %v1416 = vshrl.u32 %v1415, 7
      %v1417 = vsub.s32 3, %v1416
      %v1418 = vrot.slane %v751, %v1417
      %1420 = vbcast.lane.b32.xlu0 %v1418, 256
      %v1421 = vpop.permute.xlu0 %1420
      %v1422 = vlaneseq
      %v1423 = vshrl.u32 %v1422, 7
      %v1424 = vsub.s32 4, %v1423
      %v1425 = vrot.slane %v751, %v1424
      %1427 = vbcast.lane.b32.xlu0 %v1425, 256
      %v1428 = vpop.permute.xlu0 %1427
      %v1429 = vlaneseq
      %v1430 = vshrl.u32 %v1429, 7
      %v1431 = vsub.s32 5, %v1430
      %v1432 = vrot.slane %v751, %v1431
      %1434 = vbcast.lane.b32.xlu0 %v1432, 256
      %v1435 = vpop.permute.xlu0 %1434
      %v1436 = vlaneseq
      %v1437 = vshrl.u32 %v1436, 7
      %v1438 = vsub.s32 6, %v1437
      %v1439 = vrot.slane %v751, %v1438
      %1441 = vbcast.lane.b32.xlu0 %v1439, 256
      %v1442 = vpop.permute.xlu0 %1441
      %v1443 = vlaneseq
      %v1444 = vshrl.u32 %v1443, 7
      %v1445 = vsub.s32 7, %v1444
      %v1446 = vrot.slane %v751, %v1445
      %1448 = vbcast.lane.b32.xlu0 %v1446, 256
      %v1449 = vpop.permute.xlu0 %1448
      %v1450 = vmul.f32 %v1386, %v1400
      %v1451 = vmul.f32 %v1387, %v1407
      %v1452 = vmul.f32 %v1388, %v1414
      %v1453 = vmul.f32 %v1389, %v1421
      %v1454 = vmul.f32 %v1390, %v1428
      %v1455 = vmul.f32 %v1391, %v1435
      %v1456 = vmul.f32 %v1392, %v1442
      %v1457 = vmul.f32 %v1393, %v1449
      %1459 = vset.pattern.permute.xlu0 0
      %1460 = vperm.xlu0 %1459, %v1450
      %v1461 = vpop.permute.xlu0 %1460
      %1464 = vset.pattern.permute.xlu0 0
      %1465 = vperm.xlu0 %1464, %v1451
      %v1466 = vpop.permute.xlu0 %1465
      %1469 = vset.pattern.permute.xlu0 0
      %1470 = vperm.xlu0 %1469, %v1452
      %v1471 = vpop.permute.xlu0 %1470
      %1474 = vset.pattern.permute.xlu0 0
      %1475 = vperm.xlu0 %1474, %v1453
      %v1476 = vpop.permute.xlu0 %1475
      %1479 = vset.pattern.permute.xlu0 0
      %1480 = vperm.xlu0 %1479, %v1454
      %v1481 = vpop.permute.xlu0 %1480
      %1484 = vset.pattern.permute.xlu0 0
      %1485 = vperm.xlu0 %1484, %v1455
      %v1486 = vpop.permute.xlu0 %1485
      %1489 = vset.pattern.permute.xlu0 0
      %1490 = vperm.xlu0 %1489, %v1456
      %v1491 = vpop.permute.xlu0 %1490
      %1494 = vset.pattern.permute.xlu0 0
      %1495 = vperm.xlu0 %1494, %v1457
      %v1496 = vpop.permute.xlu0 %1495
      %v1498 = vmul.f32 %v743, %v1461
      %v1499 = vmul.f32 %v744, %v1466
      %v1500 = vmul.f32 %v745, %v1471
      %v1501 = vmul.f32 %v746, %v1476
      %v1502 = vmul.f32 %v747, %v1481
      %v1503 = vmul.f32 %v748, %v1486
      %v1504 = vmul.f32 %v749, %v1491
      %v1505 = vmul.f32 %v750, %v1496
      %v1506 = vsel %vm875, %v1498, 0.0
      %v1507 = vrot.slane %v1506, 4
      %v1508 = vadd.f32 %v1506, %v1507
      %v1509 = vrot.slane %v1508, 2
      %v1510 = vadd.f32 %v1508, %v1509
      %v1511 = vrot.slane %v1510, 1
      %v1512 = vadd.f32 %v1510, %v1511
      %v1513 = vsel %vm875, %v1499, 0.0
      %v1514 = vrot.slane %v1513, 4
      %v1515 = vadd.f32 %v1513, %v1514
      %v1516 = vrot.slane %v1515, 2
      %v1517 = vadd.f32 %v1515, %v1516
      %v1518 = vrot.slane %v1517, 1
      %v1519 = vadd.f32 %v1517, %v1518
      %v1520 = vsel %vm875, %v1500, 0.0
      %v1521 = vrot.slane %v1520, 4
      %v1522 = vadd.f32 %v1520, %v1521
      %v1523 = vrot.slane %v1522, 2
      %v1524 = vadd.f32 %v1522, %v1523
      %v1525 = vrot.slane %v1524, 1
      %v1526 = vadd.f32 %v1524, %v1525
      %v1527 = vsel %vm875, %v1501, 0.0
      %v1528 = vrot.slane %v1527, 4
      %v1529 = vadd.f32 %v1527, %v1528
      %v1530 = vrot.slane %v1529, 2
      %v1531 = vadd.f32 %v1529, %v1530
      %v1532 = vrot.slane %v1531, 1
      %v1533 = vadd.f32 %v1531, %v1532
      %v1534 = vsel %vm875, %v1502, 0.0
      %v1535 = vrot.slane %v1534, 4
      %v1536 = vadd.f32 %v1534, %v1535
      %v1537 = vrot.slane %v1536, 2
      %v1538 = vadd.f32 %v1536, %v1537
      %v1539 = vrot.slane %v1538, 1
      %v1540 = vadd.f32 %v1538, %v1539
      %v1541 = vsel %vm875, %v1503, 0.0
      %v1542 = vrot.slane %v1541, 4
      %v1543 = vadd.f32 %v1541, %v1542
      %v1544 = vrot.slane %v1543, 2
      %v1545 = vadd.f32 %v1543, %v1544
      %v1546 = vrot.slane %v1545, 1
      %v1547 = vadd.f32 %v1545, %v1546
      %v1548 = vsel %vm875, %v1504, 0.0
      %v1549 = vrot.slane %v1548, 4
      %v1550 = vadd.f32 %v1548, %v1549
      %v1551 = vrot.slane %v1550, 2
      %v1552 = vadd.f32 %v1550, %v1551
      %v1553 = vrot.slane %v1552, 1
      %v1554 = vadd.f32 %v1552, %v1553
      %v1555 = vsel %vm875, %v1505, 0.0
      %v1556 = vrot.slane %v1555, 4
      %v1557 = vadd.f32 %v1555, %v1556
      %v1558 = vrot.slane %v1557, 2
      %v1559 = vadd.f32 %v1557, %v1558
      %v1560 = vrot.slane %v1559, 1
      %v1561 = vadd.f32 %v1559, %v1560
      %v1562 = vmul.f32 %v1512, 0.25
      %v1563 = vmul.f32 %v1519, 0.25
      %v1564 = vmul.f32 %v1526, 0.25
      %v1565 = vmul.f32 %v1533, 0.25
      %v1566 = vmul.f32 %v1540, 0.25
      %v1567 = vmul.f32 %v1547, 0.25
      %v1568 = vmul.f32 %v1554, 0.25
      %v1569 = vmul.f32 %v1561, 0.25
      %vm1578 = vcmask 1041409
      %v1579 = vsel %vm1578, %v1563, %v1562
      %vm1580 = vcmask 1042434
      %v1581 = vsel %vm1580, %v1564, %v1579
      %vm1582 = vcmask 1043459
      %v1583 = vsel %vm1582, %v1565, %v1581
      %vm1584 = vcmask 1044484
      %v1585 = vsel %vm1584, %v1566, %v1583
      %vm1586 = vcmask 1045509
      %v1587 = vsel %vm1586, %v1567, %v1585
      %vm1588 = vcmask 1046534
      %v1589 = vsel %vm1588, %v1568, %v1587
      %vm1590 = vcmask 1047559
      %v1591 = vsel %vm1590, %v1569, %v1589
      %v1593 = vadd.f32 %v753, %v1591
      %1595 = vset.pattern.permute.xlu0 0
      %1596 = vperm.xlu0 %1595, %v752
      %v1597 = vpop.permute.xlu0 %1596
      %v1599 = vmul.f32 %v1593, %v1597
      %1600 = vst.msk [vmem:[%s724] sm:$0xff] %vm875, %v1599
      %v1601 = vld [vmem:[%s713] sm:$0xf]
      %v1602 = vld [vmem:[%s713 + $0x4] sm:$0xf]
      %v1603 = vld [vmem:[%s716] sm:$0x1]
      %v1605 = vlaneseq
      %v1606 = vshrl.u32 %v1605, 7
      %v1607 = vsub.s32 0, %v1606
      %v1608 = vrot.slane %v1603, %v1607
      %v1612 = vunpack.c.l.b16 %v1601
      %v1613 = vunpack.c.l.b16 %v1602
      %v1614 = vpack.c.b16 %v1613, %v1612
      %1616 = vmatprep.subr.bf16.mxu0 0
      %1617 = vmatpush1.bf16.msra.mxu0 %v1614
      %1618 = vmatprep.subr.bf16.mxu0 0
      %1619 = vmatpush1.bf16.msra.mxu0 0
      %1620 = vmatprep.subr.bf16.mxu0 0
      %1621 = vmatpush1.bf16.msra.mxu0 0
      %1622 = vmatprep.subr.bf16.mxu0 0
      %1623 = vmatpush1.bf16.msra.mxu0 0
      %1624 = vmatprep.subr.bf16.mxu0 0
      %1625 = vmatpush1.bf16.msra.mxu0 0
      %1626 = vmatprep.subr.bf16.mxu0 0
      %1627 = vmatpush1.bf16.msra.mxu0 0
      %1628 = vmatprep.subr.bf16.mxu0 0
      %1629 = vmatpush1.bf16.msra.mxu0 0
      %1630 = vmatprep.subr.bf16.mxu0 0
      %1631 = vmatpush1.bf16.msra.mxu0 0
      %1632 = vmatprep.subr.bf16.mxu0 0
      %1633 = vmatpush1.bf16.msra.mxu0 0
      %1634 = vmatprep.subr.bf16.mxu0 0
      %1635 = vmatpush1.bf16.msra.mxu0 0
      %1636 = vmatprep.subr.bf16.mxu0 0
      %1637 = vmatpush1.bf16.msra.mxu0 0
      %1638 = vmatprep.subr.bf16.mxu0 0
      %1639 = vmatpush1.bf16.msra.mxu0 0
      %1640 = vmatprep.subr.bf16.mxu0 0
      %1641 = vmatpush1.bf16.msra.mxu0 0
      %1642 = vmatprep.subr.bf16.mxu0 0
      %1643 = vmatpush1.bf16.msra.mxu0 0
      %1644 = vmatprep.subr.bf16.mxu0 0
      %1645 = vmatpush1.bf16.msra.mxu0 0
      %1646 = vmatprep.subr.bf16.mxu0 0
      %1647 = vmatpush1.bf16.msra.mxu0 0
      %1648 = vmatprep.mubr.bf16.mxu0 0
      %1649 = vmatmul.mubr.bf16.gmra.mrb[0].mxu0 %v767
      %v1650 = vpop.f32.mrb[0].mxu0
      %v1651 = vadd.f32 %v1608, %v1650
      %v1652 = vpop.f32.mrb[0].mxu0
      %v1653 = vpop.f32.mrb[0].mxu0
      %v1654 = vpop.f32.mrb[0].mxu0
      %1655 = vdwg.mxu0
      %v1656 = vmul.f32 %v1651, %v1597
      %1657 = vst.msk [vmem:[%s732] sm:$0xff] %vm765, %v1656
      %p1658 = scmp.lt.s32.totalorder %s31, 2
      %s1659 = scalar_select %p1658, %s31, 2
      %p1660 = scmp.lt.s32.totalorder %s30, 1
      %s1661 = scalar_select %p1660, %s30, 1
      %s1662 = smul.addr %s1659, 2
      %s1663 = sadd.s32 %s1661, %s1662
      %s1664 = smul.addr %s1663, 8
      %s1665 = scalar_lea.vmem %s13, %s1664
      %p1666 = scmp.lt.s32.totalorder %s31, 2
      %s1667 = scalar_select %p1666, %s31, 2
      %p1668 = scmp.lt.s32.totalorder %s30, 1
      %s1669 = scalar_select %p1668, %s30, 1
      %s1670 = smul.addr %s1667, 2
      %s1671 = sadd.s32 %s1669, %s1670
      %s1672 = smul.addr %s1671, 8
      %s1673 = scalar_lea.vmem %s14, %s1672
      // Predicated region
      $region73: #{attention_forward.4} parent=71 // pred_check
        %p1674 = pneg %p398
      $region74: #{attention_forward.4} parent=71 // pred_check_branch
        %1676 = sbr.rel (%p1674) target = $region76
      $region75: #{attention_forward.4} parent=71 // pred_region
        _
      $region76: #{attention_forward.4} parent=71 // pred_fallthru
        _
      // Predicated region
      $region77: #{attention_forward.4} parent=71 // pred_check
        %p1677 = pneg %p426
      $region78: #{attention_forward.4} parent=71 // pred_check_branch
        %1679 = sbr.rel (%p1677) target = $region80
      $region79: #{attention_forward.4} parent=71 // pred_region
        _
      $region80: #{attention_forward.4} parent=71 // pred_fallthru
        _
    $region72: #{attention_forward.4} parent=5 // pred_fallthru
      _
    %p1680 = scmp.le.s32.totalorder 2, %s21
    // Predicated region
    $region81: #{attention_forward.4} parent=5 // pred_check
      %p1681 = pneg %p1680
    $region82: #{attention_forward.4} parent=5 // pred_check_branch
      %1683 = sbr.rel (%p1681) target = $region84
    $region83: #{attention_forward.4} parent=5 // pred_region
      %s1684 = ssub.s32 %s21, 2
      // Predicated region
      $region85: #{attention_forward.4} parent=83 // pred_check
        %p1685 = pneg %p404
      $region86: #{attention_forward.4} parent=83 // pred_check_branch
        %1687 = sbr.rel (%p1685) target = $region88
      $region87: #{attention_forward.4} parent=83 // pred_region
        %p1688 = scmp.lt.s32.totalorder %s33, 2
        %s1689 = scalar_select %p1688, %s33, 2
        %p1690 = scmp.lt.s32.totalorder %s32, 1
        %s1691 = scalar_select %p1690, %s32, 1
        %s1692 = smul.addr %s1689, 2
        %s1693 = sadd.s32 %s1691, %s1692
        %s1694 = smul.addr %s1693, 8
        %s1695 = scalar_lea.vmem %s13, %s1694
      $region88: #{attention_forward.4} parent=83 // pred_fallthru
        _
      // Predicated region
      $region89: #{attention_forward.4} parent=83 // pred_check
        %p1696 = pneg %p432
      $region90: #{attention_forward.4} parent=83 // pred_check_branch
        %1698 = sbr.rel (%p1696) target = $region92
      $region91: #{attention_forward.4} parent=83 // pred_region
        %p1699 = scmp.lt.s32.totalorder %s33, 2
        %s1700 = scalar_select %p1699, %s33, 2
        %p1701 = scmp.lt.s32.totalorder %s32, 1
        %s1702 = scalar_select %p1701, %s32, 1
        %s1703 = smul.addr %s1700, 2
        %s1704 = sadd.s32 %s1702, %s1703
        %s1705 = smul.addr %s1704, 8
        %s1706 = scalar_lea.vmem %s14, %s1705
      $region92: #{attention_forward.4} parent=83 // pred_fallthru
        _
    $region84: #{attention_forward.4} parent=5 // pred_fallthru
      _
  $region6: #{attention_forward.4} parent=0 // loop_footer
    %s25 = sadd.s32 1, %s21
  $region7: #{attention_forward.4} parent=0 // loop_footer_branch
    %20 = sbr.rel target = $region3
  $region8: #{attention_forward.4} parent=0 // loop_exit
    _

// kernel: attention_forward.5
$region0: #{attention_forward.5}
  #allocation0 [shape = 'u32[]', space=smem, size = 0x4, offset = 0x4, fixed_abs, tag = 'smem constant byte address 0x4 - core index']
  #allocation1 [shape = 'u32[144,128]{1,0:T(1,128)}', space=vmem, size = 0x12000, scoped, tag = 'internal scratch']
  %s0 = inlined_call_operand.vmem [shape: bf16[2,4,8,4], index: 0, kind: input, shape index: {}]
  %s1 = inlined_call_operand.vmem [shape: bf16[2,4,8,4], index: 1, kind: input, shape index: {}]
  %s2 = inlined_call_operand.hbm [shape: f32[2,8,8], index: 2, kind: output, shape index: {}]
  %s3 = sld [smem:[#allocation0]]
  $region41: #{attention_forward.5} parent=0
    _
  %s5 = ssub.s32 1, %s3
  %s6 = scalar_select 0, %s5, %s3
  $region1: #{attention_forward.5} parent=0
    #allocation2 [shape = 'u8[8192]{0}', space=vmem, size = 0x2000, scoped, tag = 'output window, operand 0']
    #allocation3 [shape = 's32[2]{0}', space=sflag, size = 0x8, scoped, tag = 'scoped memory for attention_forward.5']
    %7 = vsyncpa [#allocation3], 0
    %s8 = scalar_lea.sflag [#allocation3], 1
    %9 = vsyncpa %s8, 0
    loop: start=0, step=1, limit=4
    $region2: #{attention_forward.5} parent=1 // loop_pre_header
      _
    $region3: #{attention_forward.5} parent=1 // loop_header
      %s11 = sphi 0, %s15
      %p12 = scmp.ge.s32.totalorder %s11, 4
      %s21 = sphi 0, %s23
      %s24 = sphi 0, %s21
      %s25 = sphi 0, %s24
      %s41 = sphi 0, %s25
      %s47 = sphi 0, %s49
      %s50 = sphi 0, %s47
      %s51 = sphi 0, %s50
      %s67 = sphi 0, %s51
      %s73 = sphi 0, %s75
      %s76 = sphi 0, %s73
      %s77 = sphi 0, %s76
      %s93 = sphi 0, %s77
    $region4: #{attention_forward.5} parent=1 // loop_header_branch
      %14 = sbr.rel (%p12) target = $region8
    $region5: #{attention_forward.5} parent=1 // loop_body
      %s16 = ssub.s32 %s11, 1
      %s17 = ssub.s32 %s11, 2
      %s18 = sadd.s32 %s11, 1
      %s19 = ssub.s32 %s11, %s18
      %p20 = scmp.eq.s32.totalorder %s19, 0
      %s22 = sadd.s32 %s21, 1
      %s23 = scalar_select %p20, %s21, %s22
      %p26 = pneg %p20
      %p27 = scmp.eq.s32.totalorder %s11, 1
      %p28 = por %p26, %p27
      %p29 = scmp.ne.s32.totalorder %s21, %s24
      %p30 = scmp.eq.s32.totalorder %s11, 0
      %p31 = por %p29, %p30
      %p32 = scmp.ne.s32.totalorder %s21, %s24
      %p33 = scmp.eq.s32.totalorder %s16, 1
      %p34 = por %p32, %p33
      %p35 = scmp.ne.s32.totalorder %s24, %s25
      %p36 = scmp.eq.s32.totalorder %s16, 0
      %p37 = por %p35, %p36
      %p38 = scmp.ne.s32.totalorder %s24, %s25
      %p39 = scmp.eq.s32.totalorder %s17, 1
      %p40 = por %p38, %p39
      %p42 = scmp.ne.s32.totalorder %s25, %s41
      %p43 = scmp.eq.s32.totalorder %s17, 0
      %p44 = por %p42, %p43
      %s45 = ssub.s32 %s11, %s18
      %p46 = scmp.eq.s32.totalorder %s45, 0
      %s48 = sadd.s32 %s47, 1
      %s49 = scalar_select %p46, %s47, %s48
      %p52 = pneg %p46
      %p53 = scmp.eq.s32.totalorder %s11, 1
      %p54 = por %p52, %p53
      %p55 = scmp.ne.s32.totalorder %s47, %s50
      %p56 = scmp.eq.s32.totalorder %s11, 0
      %p57 = por %p55, %p56
      %p58 = scmp.ne.s32.totalorder %s47, %s50
      %p59 = scmp.eq.s32.totalorder %s16, 1
      %p60 = por %p58, %p59
      %p61 = scmp.ne.s32.totalorder %s50, %s51
      %p62 = scmp.eq.s32.totalorder %s16, 0
      %p63 = por %p61, %p62
      %p64 = scmp.ne.s32.totalorder %s50, %s51
      %p65 = scmp.eq.s32.totalorder %s17, 1
      %p66 = por %p64, %p65
      %p68 = scmp.ne.s32.totalorder %s51, %s67
      %p69 = scmp.eq.s32.totalorder %s17, 0
      %p70 = por %p68, %p69
      %s71 = ssub.s32 %s11, %s18
      %p72 = scmp.eq.s32.totalorder %s71, 0
      %s74 = sadd.s32 %s73, 1
      %s75 = scalar_select %p72, %s73, %s74
      %p78 = pneg %p72
      %p79 = scmp.eq.s32.totalorder %s11, 1
      %p80 = por %p78, %p79
      %p81 = scmp.ne.s32.totalorder %s73, %s76
      %p82 = scmp.eq.s32.totalorder %s11, 0
      %p83 = por %p81, %p82
      %p84 = scmp.ne.s32.totalorder %s73, %s76
      %p85 = scmp.eq.s32.totalorder %s16, 1
      %p86 = por %p84, %p85
      %p87 = scmp.ne.s32.totalorder %s76, %s77
      %p88 = scmp.eq.s32.totalorder %s16, 0
      %p89 = por %p87, %p88
      %p90 = scmp.ne.s32.totalorder %s76, %s77
      %p91 = scmp.eq.s32.totalorder %s17, 1
      %p92 = por %p90, %p91
      %p94 = scmp.ne.s32.totalorder %s77, %s93
      %p95 = scmp.eq.s32.totalorder %s17, 0
      %p96 = por %p94, %p95
      %p97 = scmp.le.s32.totalorder 1, %s11
      %p98 = scmp.lt.s32.totalorder %s11, 3
      %p99 = pnand %p97, %p98
      %p100 = pneg %p99
      // Predicated region
      $region9: #{attention_forward.5} parent=5 // pred_check
        _
      $region10: #{attention_forward.5} parent=5 // pred_check_branch
        %102 = sbr.rel (%p99) target = $region12
      $region11: #{attention_forward.5} parent=5 // pred_region
        %s103 = ssub.s32 %s11, 1
      $region12: #{attention_forward.5} parent=5 // pred_fallthru
        _
      %p104 = scmp.lt.s32.totalorder %s11, 2
      // Predicated region
      $region13: #{attention_forward.5} parent=5 // pred_check
        %p105 = pneg %p104
      $region14: #{attention_forward.5} parent=5 // pred_check_branch
        %107 = sbr.rel (%p105) target = $region16
      $region15: #{attention_forward.5} parent=5 // pred_region
        // Predicated region
        $region17: #{attention_forward.5} parent=15 // pred_check
          %p108 = pneg %p31
        $region18: #{attention_forward.5} parent=15 // pred_check_branch
          %110 = sbr.rel (%p108) target = $region20
        $region19: #{attention_forward.5} parent=15 // pred_region
          %p111 = scmp.lt.s32.totalorder %s11, 1
          %s112 = scalar_select %p111, %s11, 1
          %s113 = smul.addr %s112, 4
          %s114 = smul.addr %s113, 4
          %s115 = scalar_lea.vmem %s0, %s114
        $region20: #{attention_forward.5} parent=15 // pred_fallthru
          _
        // Predicated region
        $region21: #{attention_forward.5} parent=15 // pred_check
          %p116 = pneg %p57
        $region22: #{attention_forward.5} parent=15 // pred_check_branch
          %118 = sbr.rel (%p116) target = $region24
        $region23: #{attention_forward.5} parent=15 // pred_region
          %p119 = scmp.lt.s32.totalorder %s11, 1
          %s120 = scalar_select %p119, %s11, 1
          %s121 = smul.addr %s120, 4
          %s122 = smul.addr %s121, 4
          %s123 = scalar_lea.vmem %s1, %s122
        $region24: #{attention_forward.5} parent=15 // pred_fallthru
          _
      $region16: #{attention_forward.5} parent=5 // pred_fallthru
        _
      %p124 = scmp.le.s32.totalorder 1, %s11
      %p125 = scmp.lt.s32.totalorder %s11, 3
      %p126 = pnand %p124, %p125
      %p127 = pneg %p126
      // Predicated region
      $region25: #{attention_forward.5} parent=5 // pred_check
        _
      $region26: #{attention_forward.5} parent=5 // pred_check_branch
        %129 = sbr.rel (%p126) target = $region28
      $region27: #{attention_forward.5} parent=5 // pred_region
        %s130 = ssub.s32 %s11, 1
        %p131 = scmp.lt.s32.totalorder %s16, 1
        %s132 = scalar_select %p131, %s16, 1
        %s133 = smul.addr %s132, 4
        %s134 = smul.addr %s133, 4
        %s135 = scalar_lea.vmem %s0, %s134
        %p136 = pneg %p37
        %p137 = pneg %p34
        %p138 = scmp.lt.s32.totalorder %s16, 1
        %s139 = scalar_select %p138, %s16, 1
        %s140 = smul.addr %s139, 4
        %s141 = smul.addr %s140, 4
        %s142 = scalar_lea.vmem %s1, %s141
        %p143 = pneg %p63
        %p144 = pneg %p60
        %p145 = pneg %p89
        %p146 = pneg %p86
        %s147 = sand.u32 %s76, 1
        %s148 = scalar_lea.sflag [#allocation3], %s147
        %s149 = sand.u32 %s76, 1
        %s150 = smul.addr %s149, 8
        %s151 = scalar_lea.vmem [#allocation2], %s150
        %p152 = scmp.lt.s32.totalorder %s16, 1
        %s153 = scalar_select %p152, %s16, 1
        %s154 = smul.addr %s153, 4
        %s155 = smul.addr %s154, 4
        %s156 = scalar_lea.vmem %s0, %s155
        %p157 = scmp.lt.s32.totalorder %s16, 1
        %s158 = scalar_select %p157, %s16, 1
        %s159 = smul.addr %s158, 4
        %s160 = smul.addr %s159, 4
        %s161 = scalar_lea.vmem %s1, %s160
        %v163 = vld [vmem:[%s156] sm:$0xf]
        %v164 = vld [vmem:[%s156 + $0x4] sm:$0xf]
        %v165 = vld [vmem:[%s156 + $0x8] sm:$0xf]
        %v166 = vld [vmem:[%s156 + $0xc] sm:$0xf]
        %v167 = vld [vmem:[%s161] sm:$0xf]
        %v168 = vld [vmem:[%s161 + $0x4] sm:$0xf]
        %v169 = vld [vmem:[%s161 + $0x8] sm:$0xf]
        %v170 = vld [vmem:[%s161 + $0xc] sm:$0xf]
        %vm171 = vcmask 31744
        %v173 = vsel %vm171, %v163, 0
        %v176 = vsel %vm171, %v167, 0
        %178 = vmatprep.subr.bf16.mxu0 0
        %179 = vmatpush1.bf16.xpose.msra.mxu0 %v176
        %180 = vmatprep.subr.bf16.mxu0 0
        %181 = vmatpush1.bf16.xpose.msra.mxu0 0
        %182 = vmatprep.subr.bf16.mxu0 0
        %183 = vmatpush1.bf16.xpose.msra.mxu0 0
        %184 = vmatprep.subr.bf16.mxu0 0
        %185 = vmatpush1.bf16.xpose.msra.mxu0 0
        %186 = vmatprep.subr.bf16.mxu0 0
        %187 = vmatpush1.bf16.xpose.msra.mxu0 0
        %188 = vmatprep.subr.bf16.mxu0 0
        %189 = vmatpush1.bf16.xpose.msra.mxu0 0
        %190 = vmatprep.subr.bf16.mxu0 0
        %191 = vmatpush1.bf16.xpose.msra.mxu0 0
        %192 = vmatprep.subr.bf16.mxu0 0
        %193 = vmatpush1.bf16.xpose.msra.mxu0 0
        %194 = vmatprep.subr.bf16.mxu0 0
        %195 = vmatpush1.bf16.xpose.msra.mxu0 0
        %196 = vmatprep.subr.bf16.mxu0 0
        %197 = vmatpush1.bf16.xpose.msra.mxu0 0
        %198 = vmatprep.subr.bf16.mxu0 0
        %199 = vmatpush1.bf16.xpose.msra.mxu0 0
        %200 = vmatprep.subr.bf16.mxu0 0
        %201 = vmatpush1.bf16.xpose.msra.mxu0 0
        %202 = vmatprep.subr.bf16.mxu0 0
        %203 = vmatpush1.bf16.xpose.msra.mxu0 0
        %204 = vmatprep.subr.bf16.mxu0 0
        %205 = vmatpush1.bf16.xpose.msra.mxu0 0
        %206 = vmatprep.subr.bf16.mxu0 0
        %207 = vmatpush1.bf16.xpose.msra.mxu0 0
        %208 = vmatprep.subr.bf16.mxu0 0
        %209 = vmatpush1.bf16.xpose.msra.mxu0 0
        %210 = vmatprep.mubr.bf16.mxu0 0
        %211 = vmatmul.mubr.bf16.gmra.mrb[0].mxu0 %v173
        %v212 = vpop.f32.mrb[0].mxu0
        %v213 = vadd.f32 0.0, %v212
        %v214 = vpop.f32.mrb[0].mxu0
        %v215 = vpop.f32.mrb[0].mxu0
        %v216 = vpop.f32.mrb[0].mxu0
        %217 = vdwg.mxu0
        %v219 = vsel %vm171, %v164, 0
        %v222 = vsel %vm171, %v168, 0
        %224 = vmatprep.subr.bf16.mxu0 0
        %225 = vmatpush1.bf16.xpose.msra.mxu0 %v222
        %226 = vmatprep.subr.bf16.mxu0 0
        %227 = vmatpush1.bf16.xpose.msra.mxu0 0
        %228 = vmatprep.subr.bf16.mxu0 0
        %229 = vmatpush1.bf16.xpose.msra.mxu0 0
        %230 = vmatprep.subr.bf16.mxu0 0
        %231 = vmatpush1.bf16.xpose.msra.mxu0 0
        %232 = vmatprep.subr.bf16.mxu0 0
        %233 = vmatpush1.bf16.xpose.msra.mxu0 0
        %234 = vmatprep.subr.bf16.mxu0 0
        %235 = vmatpush1.bf16.xpose.msra.mxu0 0
        %236 = vmatprep.subr.bf16.mxu0 0
        %237 = vmatpush1.bf16.xpose.msra.mxu0 0
        %238 = vmatprep.subr.bf16.mxu0 0
        %239 = vmatpush1.bf16.xpose.msra.mxu0 0
        %240 = vmatprep.subr.bf16.mxu0 0
        %241 = vmatpush1.bf16.xpose.msra.mxu0 0
        %242 = vmatprep.subr.bf16.mxu0 0
        %243 = vmatpush1.bf16.xpose.msra.mxu0 0
        %244 = vmatprep.subr.bf16.mxu0 0
        %245 = vmatpush1.bf16.xpose.msra.mxu0 0
        %246 = vmatprep.subr.bf16.mxu0 0
        %247 = vmatpush1.bf16.xpose.msra.mxu0 0
        %248 = vmatprep.subr.bf16.mxu0 0
        %249 = vmatpush1.bf16.xpose.msra.mxu0 0
        %250 = vmatprep.subr.bf16.mxu0 0
        %251 = vmatpush1.bf16.xpose.msra.mxu0 0
        %252 = vmatprep.subr.bf16.mxu0 0
        %253 = vmatpush1.bf16.xpose.msra.mxu0 0
        %254 = vmatprep.subr.bf16.mxu0 0
        %255 = vmatpush1.bf16.xpose.msra.mxu0 0
        %256 = vmatprep.mubr.bf16.mxu0 0
        %257 = vmatmul.mubr.bf16.gmra.mrb[0].mxu0 %v219
        %v258 = vpop.f32.mrb[0].mxu0
        %v259 = vadd.f32 0.0, %v258
        %v260 = vpop.f32.mrb[0].mxu0
        %v261 = vpop.f32.mrb[0].mxu0
        %v262 = vpop.f32.mrb[0].mxu0
        %263 = vdwg.mxu0
        %v265 = vsel %vm171, %v165, 0
        %v268 = vsel %vm171, %v169, 0
        %270 = vmatprep.subr.bf16.mxu0 0
        %271 = vmatpush1.bf16.xpose.msra.mxu0 %v268
        %272 = vmatprep.subr.bf16.mxu0 0
        %273 = vmatpush1.bf16.xpose.msra.mxu0 0
        %274 = vmatprep.subr.bf16.mxu0 0
        %275 = vmatpush1.bf16.xpose.msra.mxu0 0
        %276 = vmatprep.subr.bf16.mxu0 0
        %277 = vmatpush1.bf16.xpose.msra.mxu0 0
        %278 = vmatprep.subr.bf16.mxu0 0
        %279 = vmatpush1.bf16.xpose.msra.mxu0 0
        %280 = vmatprep.subr.bf16.mxu0 0
        %281 = vmatpush1.bf16.xpose.msra.mxu0 0
        %282 = vmatprep.subr.bf16.mxu0 0
        %283 = vmatpush1.bf16.xpose.msra.mxu0 0
        %284 = vmatprep.subr.bf16.mxu0 0
        %285 = vmatpush1.bf16.xpose.msra.mxu0 0
        %286 = vmatprep.subr.bf16.mxu0 0
        %287 = vmatpush1.bf16.xpose.msra.mxu0 0
        %288 = vmatprep.subr.bf16.mxu0 0
        %289 = vmatpush1.bf16.xpose.msra.mxu0 0
        %290 = vmatprep.subr.bf16.mxu0 0
        %291 = vmatpush1.bf16.xpose.msra.mxu0 0
        %292 = vmatprep.subr.bf16.mxu0 0
        %293 = vmatpush1.bf16.xpose.msra.mxu0 0
        %294 = vmatprep.subr.bf16.mxu0 0
        %295 = vmatpush1.bf16.xpose.msra.mxu0 0
        %296 = vmatprep.subr.bf16.mxu0 0
        %297 = vmatpush1.bf16.xpose.msra.mxu0 0
        %298 = vmatprep.subr.bf16.mxu0 0
        %299 = vmatpush1.bf16.xpose.msra.mxu0 0
        %300 = vmatprep.subr.bf16.mxu0 0
        %301 = vmatpush1.bf16.xpose.msra.mxu0 0
        %302 = vmatprep.mubr.bf16.mxu0 0
        %303 = vmatmul.mubr.bf16.gmra.mrb[0].mxu0 %v265
        %v304 = vpop.f32.mrb[0].mxu0
        %v305 = vadd.f32 0.0, %v304
        %v306 = vpop.f32.mrb[0].mxu0
        %v307 = vpop.f32.mrb[0].mxu0
        %v308 = vpop.f32.mrb[0].mxu0
        %309 = vdwg.mxu0
        %v311 = vsel %vm171, %v166, 0
        %v314 = vsel %vm171, %v170, 0
        %316 = vmatprep.subr.bf16.mxu0 0
        %317 = vmatpush1.bf16.xpose.msra.mxu0 %v314
        %318 = vmatprep.subr.bf16.mxu0 0
        %319 = vmatpush1.bf16.xpose.msra.mxu0 0
        %320 = vmatprep.subr.bf16.mxu0 0
        %321 = vmatpush1.bf16.xpose.msra.mxu0 0
        %322 = vmatprep.subr.bf16.mxu0 0
        %323 = vmatpush1.bf16.xpose.msra.mxu0 0
        %324 = vmatprep.subr.bf16.mxu0 0
        %325 = vmatpush1.bf16.xpose.msra.mxu0 0
        %326 = vmatprep.subr.bf16.mxu0 0
        %327 = vmatpush1.bf16.xpose.msra.mxu0 0
        %328 = vmatprep.subr.bf16.mxu0 0
        %329 = vmatpush1.bf16.xpose.msra.mxu0 0
        %330 = vmatprep.subr.bf16.mxu0 0
        %331 = vmatpush1.bf16.xpose.msra.mxu0 0
        %332 = vmatprep.subr.bf16.mxu0 0
        %333 = vmatpush1.bf16.xpose.msra.mxu0 0
        %334 = vmatprep.subr.bf16.mxu0 0
        %335 = vmatpush1.bf16.xpose.msra.mxu0 0
        %336 = vmatprep.subr.bf16.mxu0 0
        %337 = vmatpush1.bf16.xpose.msra.mxu0 0
        %338 = vmatprep.subr.bf16.mxu0 0
        %339 = vmatpush1.bf16.xpose.msra.mxu0 0
        %340 = vmatprep.subr.bf16.mxu0 0
        %341 = vmatpush1.bf16.xpose.msra.mxu0 0
        %342 = vmatprep.subr.bf16.mxu0 0
        %343 = vmatpush1.bf16.xpose.msra.mxu0 0
        %344 = vmatprep.subr.bf16.mxu0 0
        %345 = vmatpush1.bf16.xpose.msra.mxu0 0
        %346 = vmatprep.subr.bf16.mxu0 0
        %347 = vmatpush1.bf16.xpose.msra.mxu0 0
        %348 = vmatprep.mubr.bf16.mxu0 0
        %349 = vmatmul.mubr.bf16.gmra.mrb[0].mxu0 %v311
        %v350 = vpop.f32.mrb[0].mxu0
        %v351 = vadd.f32 0.0, %v350
        %v352 = vpop.f32.mrb[0].mxu0
        %v353 = vpop.f32.mrb[0].mxu0
        %v354 = vpop.f32.mrb[0].mxu0
        %355 = vdwg.mxu0
        %v356 = vmul.f32 %v213, 0.25
        %v357 = vmul.f32 %v259, 0.25
        %v358 = vmul.f32 %v305, 0.25
        %v359 = vmul.f32 %v351, 0.25
        %v360 = vtanh.pop %v356
        %v361 = vtanh.pop %v357
        %v362 = vtanh.pop %v358
        %v363 = vtanh.pop %v359
        %vm364 = vcmask 64512
        %v365 = vsel %vm364, %v360, 0.0
        %v366 = vsel %vm364, %v361, 0.0
        %v367 = vadd.f32 %v365, %v366
        %v368 = vsel %vm364, %v362, 0.0
        %v369 = vadd.f32 %v367, %v368
        %v370 = vsel %vm364, %v363, 0.0
        %v371 = vadd.f32 %v369, %v370
        %v372 = vmul.f32 %v371, 0.25
        %373 = vxpose.xlu0.b32.start [1/16] %v372, 128
        %374 = vxpose.xlu0.b32.cont [2/16] 0.0, 128
        %375 = vxpose.xlu0.b32.cont [3/16] 0.0, 128
        %376 = vxpose.xlu0.b32.cont [4/16] 0.0, 128
        %377 = vxpose.xlu0.b32.cont [5/16] 0.0, 128
        %378 = vxpose.xlu0.b32.cont [6/16] 0.0, 128
        %379 = vxpose.xlu0.b32.cont [7/16] 0.0, 128
        %380 = vxpose.xlu0.b32.cont [8/16] 0.0, 128
        %381 = vxpose.xlu0.b32.cont [9/16] 0.0, 128
        %382 = vxpose.xlu0.b32.cont [10/16] 0.0, 128
        %383 = vxpose.xlu0.b32.cont [11/16] 0.0, 128
        %384 = vxpose.xlu0.b32.cont [12/16] 0.0, 128
        %385 = vxpose.xlu0.b32.cont [13/16] 0.0, 128
        %386 = vxpose.xlu0.b32.cont [14/16] 0.0, 128
        %387 = vxpose.xlu0.b32.cont [15/16] 0.0, 128
        %388 = vxpose.xlu0.b32.end [16/16] 0.0, 128
        %v389 = vpop.trf.xlu0
        %v390 = vpop.trf.xlu0
        %v391 = vpop.trf.xlu0
        %v392 = vpop.trf.xlu0
        %v393 = vpop.trf.xlu0
        %v394 = vpop.trf.xlu0
        %v395 = vpop.trf.xlu0
        %v396 = vpop.trf.xlu0
        %v397 = vpop.trf.xlu0
        %v398 = vpop.trf.xlu0
        %v399 = vpop.trf.xlu0
        %v400 = vpop.trf.xlu0
        %v401 = vpop.trf.xlu0
        %v402 = vpop.trf.xlu0
        %v403 = vpop.trf.xlu0
        %v404 = vpop.trf.xlu0
        %v405 = vadd.f32 %v372, %v389
        %v406 = vmul.f32 %v405, 0.5
        %407 = vst.msk [vmem:[%s151] sm:$0xff] %vm364, %v406
        %s408 = sand.u32 %s76, 1
        %s409 = scalar_lea.sflag [#allocation3], %s408
        %s410 = sand.u32 %s76, 1
        %s411 = smul.addr %s410, 8
        %s412 = scalar_lea.vmem [#allocation2], %s411
        // Predicated region
        $region29: #{attention_forward.5} parent=27 // pred_check
          %p413 = pneg %p86
        $region30: #{attention_forward.5} parent=27 // pred_check_branch
          %415 = sbr.rel (%p413) target = $region32
        $region31: #{attention_forward.5} parent=27 // pred_region
          %s417 = ssub.s32 128, 128
          %418 = vsyncadd %s409, %s417
          %s419 = smul.addr %s16, 128
          %s420 = scalar_lea.hbm %s2, %s419
          %s422 = sshll.u32 %s412, 4
          %s423 = int_to_ptr.vmem [resolvable:$true] %s422
          %425 = dma.vmem_to_hbm [thread:$0]  %s423, 128, %s420, %s409
        $region32: #{attention_forward.5} parent=27 // pred_fallthru
          _
      $region28: #{attention_forward.5} parent=5 // pred_fallthru
        _
      %p426 = scmp.le.s32.totalorder 2, %s11
      // Predicated region
      $region33: #{attention_forward.5} parent=5 // pred_check
        %p427 = pneg %p426
      $region34: #{attention_forward.5} parent=5 // pred_check_branch
        %429 = sbr.rel (%p427) target = $region36
      $region35: #{attention_forward.5} parent=5 // pred_region
        %s430 = ssub.s32 %s11, 2
        // Predicated region
        $region37: #{attention_forward.5} parent=35 // pred_check
          %p431 = pneg %p92
        $region38: #{attention_forward.5} parent=35 // pred_check_branch
          %433 = sbr.rel (%p431) target = $region40
        $region39: #{attention_forward.5} parent=35 // pred_region
          %s434 = sand.u32 %s77, 1
          %s435 = scalar_lea.sflag [#allocation3], %s434
          %s436 = sand.u32 %s77, 1
          %s437 = smul.addr %s436, 8
          %s438 = scalar_lea.vmem [#allocation2], %s437
          %439 = dma.done %s435, 128
        $region40: #{attention_forward.5} parent=35 // pred_fallthru
          _
      $region36: #{attention_forward.5} parent=5 // pred_fallthru
        _
    $region6: #{attention_forward.5} parent=1 // loop_footer
      %s15 = sadd.s32 1, %s11
    $region7: #{attention_forward.5} parent=1 // loop_footer_branch
      %10 = sbr.rel target = $region3
    $region8: #{attention_forward.5} parent=1 // loop_exit
      _
    %440 = vsyncpa [#allocation3], 1
    %s441 = scalar_lea.sflag [#allocation3], 1
    %442 = vsyncpa %s441, 1

// kernel: attention_forward.3
$region0: #{attention_forward.3}
  #allocation0 [shape = 'u32[]', space=smem, size = 0x4, offset = 0x4, fixed_abs, tag = 'smem constant byte address 0x4 - core index']
  #allocation1 [shape = 'u32[144,128]{1,0:T(1,128)}', space=vmem, size = 0x12000, scoped, tag = 'internal scratch']
  %s0 = inlined_call_operand.vmem [shape: bf16[2,8,4], index: 0, kind: input, shape index: {}]
  %s1 = inlined_call_operand.vmem [shape: bf16[2,8,8,3], index: 1, kind: input, shape index: {}]
  %s2 = inlined_call_operand.vmem [shape: f32[2,8,8], index: 2, kind: input, shape index: {}]
  %s3 = inlined_call_operand.vmem [shape: f32[2,8,1], index: 3, kind: input, shape index: {}]
  %s4 = inlined_call_operand.vmem [shape: bf16[3,4,16], index: 4, kind: input, shape index: {}]
  %s5 = inlined_call_operand.vmem [shape: f32[3,1,16], index: 5, kind: input, shape index: {}]
  %s6 = inlined_call_operand.vmem [shape: bf16[3,35,16], index: 6, kind: input, shape index: {}]
  %s7 = inlined_call_operand.vmem [shape: f32[3,1,16], index: 7, kind: input, shape index: {}]
  %s8 = inlined_call_operand.vmem [shape: bf16[3,16,16], index: 8, kind: input, shape index: {}]
  %s9 = inlined_call_operand.vmem [shape: f32[3,1,16], index: 9, kind: input, shape index: {}]
  %s10 = inlined_call_operand.vmem [shape: bf16[3,16,1], index: 10, kind: input, shape index: {}]
  %s11 = inlined_call_operand.vmem [shape: f32[3,1,1], index: 11, kind: input, shape index: {}]
  %s12 = inlined_call_operand.vmem [shape: bf16[3,32,16], index: 12, kind: input, shape index: {}]
  %s13 = inlined_call_operand.vmem [shape: f32[3,1,16], index: 13, kind: input, shape index: {}]
  %s14 = inlined_call_operand.vmem [shape: bf16[3,16,16], index: 14, kind: input, shape index: {}]
  %s15 = inlined_call_operand.vmem [shape: f32[3,1,16], index: 15, kind: input, shape index: {}]
  %s16 = inlined_call_operand.vmem [shape: bf16[3,2,8,16], index: 16, kind: output, shape index: {}]
  %s17 = sld [smem:[#allocation0]]
  $region97: #{attention_forward.3} parent=0
    _
  %s19 = ssub.s32 1, %s17
  %s20 = scalar_select 0, %s19, %s17
  loop: start=0, step=1, limit=8
  $region2: #{attention_forward.3} parent=0 // loop_pre_header
    _
  $region3: #{attention_forward.3} parent=0 // loop_header
    %s22 = sphi 0, %s26
    %p23 = scmp.ge.s32.totalorder %s22, 8
    %s29 = sphi 0, %s41
    %s30 = sphi 0, %s37
    %s31 = sphi 0, %s29
    %s32 = sphi 0, %s30
    %s33 = sphi 0, %s31
    %s34 = sphi 0, %s32
    %s44 = sphi 0, %s46
    %s47 = sphi 0, %s44
    %s48 = sphi 0, %s47
    %s64 = sphi 0, %s48
    %s70 = sphi 0, %s72
    %s73 = sphi 0, %s70
    %s74 = sphi 0, %s73
    %s90 = sphi 0, %s74
    %s96 = sphi 0, %s98
    %s99 = sphi 0, %s96
    %s100 = sphi 0, %s99
    %s116 = sphi 0, %s100
    %s122 = sphi 0, %s124
    %s125 = sphi 0, %s122
    %s126 = sphi 0, %s125
    %s142 = sphi 0, %s126
    %s148 = sphi 0, %s150
    %s151 = sphi 0, %s148
    %s152 = sphi 0, %s151
    %s168 = sphi 0, %s152
    %s174 = sphi 0, %s176
    %s177 = sphi 0, %s174
    %s178 = sphi 0, %s177
    %s194 = sphi 0, %s178
    %s200 = sphi 0, %s202
    %s203 = sphi 0, %s200
    %s204 = sphi 0, %s203
    %s220 = sphi 0, %s204
    %s226 = sphi 0, %s228
    %s229 = sphi 0, %s226
    %s230 = sphi 0, %s229
    %s246 = sphi 0, %s230
    %s252 = sphi 0, %s254
    %s255 = sphi 0, %s252
    %s256 = sphi 0, %s255
    %s272 = sphi 0, %s256
    %s278 = sphi 0, %s280
    %s281 = sphi 0, %s278
    %s282 = sphi 0, %s281
    %s298 = sphi 0, %s282
    %s304 = sphi 0, %s306
    %s307 = sphi 0, %s304
    %s308 = sphi 0, %s307
    %s324 = sphi 0, %s308
    %s330 = sphi 0, %s332
    %s333 = sphi 0, %s330
    %s334 = sphi 0, %s333
    %s350 = sphi 0, %s334
    %s356 = sphi 0, %s358
    %s359 = sphi 0, %s356
    %s360 = sphi 0, %s359
    %s376 = sphi 0, %s360
    %s382 = sphi 0, %s384
    %s385 = sphi 0, %s382
    %s386 = sphi 0, %s385
    %s402 = sphi 0, %s386
    %s408 = sphi 0, %s410
    %s411 = sphi 0, %s408
    %s412 = sphi 0, %s411
    %s428 = sphi 0, %s412
    %s434 = sphi 0, %s436
    %s437 = sphi 0, %s434
    %s438 = sphi 0, %s437
    %s454 = sphi 0, %s438
    %s462 = sphi 0, %s464
    %s465 = sphi 0, %s462
    %s466 = sphi 0, %s465
    %s482 = sphi 0, %s466
  $region4: #{attention_forward.3} parent=0 // loop_header_branch
    %25 = sbr.rel (%p23) target = $region8
  $region5: #{attention_forward.3} parent=0 // loop_body
    %s27 = ssub.s32 %s22, 1
    %s28 = ssub.s32 %s22, 2
    %s35 = sadd.s32 1, %s30
    %p36 = scmp.ge.s32.totalorder %s35, 3
    %s37 = scalar_select %p36, 0, %s35
    %s38 = sadd.s32 1, %s29
    %s39 = scalar_select %p36, %s38, %s29
    %p40 = scmp.ge.s32.totalorder %s39, 2
    %s41 = scalar_select %p40, 0, %s39
    %s42 = ssub.s32 %s29, %s41
    %p43 = scmp.eq.s32.totalorder %s42, 0
    %s45 = sadd.s32 %s44, 1
    %s46 = scalar_select %p43, %s44, %s45
    %p49 = pneg %p43
    %p50 = scmp.eq.s32.totalorder %s22, 5
    %p51 = por %p49, %p50
    %p52 = scmp.ne.s32.totalorder %s44, %s47
    %p53 = scmp.eq.s32.totalorder %s22, 0
    %p54 = por %p52, %p53
    %p55 = scmp.ne.s32.totalorder %s44, %s47
    %p56 = scmp.eq.s32.totalorder %s27, 5
    %p57 = por %p55, %p56
    %p58 = scmp.ne.s32.totalorder %s47, %s48
    %p59 = scmp.eq.s32.totalorder %s27, 0
    %p60 = por %p58, %p59
    %p61 = scmp.ne.s32.totalorder %s47, %s48
    %p62 = scmp.eq.s32.totalorder %s28, 5
    %p63 = por %p61, %p62
    %p65 = scmp.ne.s32.totalorder %s48, %s64
    %p66 = scmp.eq.s32.totalorder %s28, 0
    %p67 = por %p65, %p66
    %s68 = ssub.s32 %s29, %s41
    %p69 = scmp.eq.s32.totalorder %s68, 0
    %s71 = sadd.s32 %s70, 1
    %s72 = scalar_select %p69, %s70, %s71
    %p75 = pneg %p69
    %p76 = scmp.eq.s32.totalorder %s22, 5
    %p77 = por %p75, %p76
    %p78 = scmp.ne.s32.totalorder %s70, %s73
    %p79 = scmp.eq.s32.totalorder %s22, 0
    %p80 = por %p78, %p79
    %p81 = scmp.ne.s32.totalorder %s70, %s73
    %p82 = scmp.eq.s32.totalorder %s27, 5
    %p83 = por %p81, %p82
    %p84 = scmp.ne.s32.totalorder %s73, %s74
    %p85 = scmp.eq.s32.totalorder %s27, 0
    %p86 = por %p84, %p85
    %p87 = scmp.ne.s32.totalorder %s73, %s74
    %p88 = scmp.eq.s32.totalorder %s28, 5
    %p89 = por %p87, %p88
    %p91 = scmp.ne.s32.totalorder %s74, %s90
    %p92 = scmp.eq.s32.totalorder %s28, 0
    %p93 = por %p91, %p92
    %s94 = ssub.s32 %s29, %s41
    %p95 = scmp.eq.s32.totalorder %s94, 0
    %s97 = sadd.s32 %s96, 1
    %s98 = scalar_select %p95, %s96, %s97
    %p101 = pneg %p95
    %p102 = scmp.eq.s32.totalorder %s22, 5
    %p103 = por %p101, %p102
    %p104 = scmp.ne.s32.totalorder %s96, %s99
    %p105 = scmp.eq.s32.totalorder %s22, 0
    %p106 = por %p104, %p105
    %p107 = scmp.ne.s32.totalorder %s96, %s99
    %p108 = scmp.eq.s32.totalorder %s27, 5
    %p109 = por %p107, %p108
    %p110 = scmp.ne.s32.totalorder %s99, %s100
    %p111 = scmp.eq.s32.totalorder %s27, 0
    %p112 = por %p110, %p111
    %p113 = scmp.ne.s32.totalorder %s99, %s100
    %p114 = scmp.eq.s32.totalorder %s28, 5
    %p115 = por %p113, %p114
    %p117 = scmp.ne.s32.totalorder %s100, %s116
    %p118 = scmp.eq.s32.totalorder %s28, 0
    %p119 = por %p117, %p118
    %s120 = ssub.s32 %s29, %s41
    %p121 = scmp.eq.s32.totalorder %s120, 0
    %s123 = sadd.s32 %s122, 1
    %s124 = scalar_select %p121, %s122, %s123
    %p127 = pneg %p121
    %p128 = scmp.eq.s32.totalorder %s22, 5
    %p129 = por %p127, %p128
    %p130 = scmp.ne.s32.totalorder %s122, %s125
    %p131 = scmp.eq.s32.totalorder %s22, 0
    %p132 = por %p130, %p131
    %p133 = scmp.ne.s32.totalorder %s122, %s125
    %p134 = scmp.eq.s32.totalorder %s27, 5
    %p135 = por %p133, %p134
    %p136 = scmp.ne.s32.totalorder %s125, %s126
    %p137 = scmp.eq.s32.totalorder %s27, 0
    %p138 = por %p136, %p137
    %p139 = scmp.ne.s32.totalorder %s125, %s126
    %p140 = scmp.eq.s32.totalorder %s28, 5
    %p141 = por %p139, %p140
    %p143 = scmp.ne.s32.totalorder %s126, %s142
    %p144 = scmp.eq.s32.totalorder %s28, 0
    %p145 = por %p143, %p144
    %s146 = ssub.s32 %s30, %s37
    %p147 = scmp.eq.s32.totalorder %s146, 0
    %s149 = sadd.s32 %s148, 1
    %s150 = scalar_select %p147, %s148, %s149
    %p153 = pneg %p147
    %p154 = scmp.eq.s32.totalorder %s22, 5
    %p155 = por %p153, %p154
    %p156 = scmp.ne.s32.totalorder %s148, %s151
    %p157 = scmp.eq.s32.totalorder %s22, 0
    %p158 = por %p156, %p157
    %p159 = scmp.ne.s32.totalorder %s148, %s151
    %p160 = scmp.eq.s32.totalorder %s27, 5
    %p161 = por %p159, %p160
    %p162 = scmp.ne.s32.totalorder %s151, %s152
    %p163 = scmp.eq.s32.totalorder %s27, 0
    %p164 = por %p162, %p163
    %p165 = scmp.ne.s32.totalorder %s151, %s152
    %p166 = scmp.eq.s32.totalorder %s28, 5
    %p167 = por %p165, %p166
    %p169 = scmp.ne.s32.totalorder %s152, %s168
    %p170 = scmp.eq.s32.totalorder %s28, 0
    %p171 = por %p169, %p170
    %s172 = ssub.s32 %s30, %s37
    %p173 = scmp.eq.s32.totalorder %s172, 0
    %s175 = sadd.s32 %s174, 1
    %s176 = scalar_select %p173, %s174, %s175
    %p179 = pneg %p173
    %p180 = scmp.eq.s32.totalorder %s22, 5
    %p181 = por %p179, %p180
    %p182 = scmp.ne.s32.totalorder %s174, %s177
    %p183 = scmp.eq.s32.totalorder %s22, 0
    %p184 = por %p182, %p183
    %p185 = scmp.ne.s32.totalorder %s174, %s177
    %p186 = scmp.eq.s32.totalorder %s27, 5
    %p187 = por %p185, %p186
    %p188 = scmp.ne.s32.totalorder %s177, %s178
    %p189 = scmp.eq.s32.totalorder %s27, 0
    %p190 = por %p188, %p189
    %p191 = scmp.ne.s32.totalorder %s177, %s178
    %p192 = scmp.eq.s32.totalorder %s28, 5
    %p193 = por %p191, %p192
    %p195 = scmp.ne.s32.totalorder %s178, %s194
    %p196 = scmp.eq.s32.totalorder %s28, 0
    %p197 = por %p195, %p196
    %s198 = ssub.s32 %s30, %s37
    %p199 = scmp.eq.s32.totalorder %s198, 0
    %s201 = sadd.s32 %s200, 1
    %s202 = scalar_select %p199, %s200, %s201
    %p205 = pneg %p199
    %p206 = scmp.eq.s32.totalorder %s22, 5
    %p207 = por %p205, %p206
    %p208 = scmp.ne.s32.totalorder %s200, %s203
    %p209 = scmp.eq.s32.totalorder %s22, 0
    %p210 = por %p208, %p209
    %p211 = scmp.ne.s32.totalorder %s200, %s203
    %p212 = scmp.eq.s32.totalorder %s27, 5
    %p213 = por %p211, %p212
    %p214 = scmp.ne.s32.totalorder %s203, %s204
    %p215 = scmp.eq.s32.totalorder %s27, 0
    %p216 = por %p214, %p215
    %p217 = scmp.ne.s32.totalorder %s203, %s204
    %p218 = scmp.eq.s32.totalorder %s28, 5
    %p219 = por %p217, %p218
    %p221 = scmp.ne.s32.totalorder %s204, %s220
    %p222 = scmp.eq.s32.totalorder %s28, 0
    %p223 = por %p221, %p222
    %s224 = ssub.s32 %s30, %s37
    %p225 = scmp.eq.s32.totalorder %s224, 0
    %s227 = sadd.s32 %s226, 1
    %s228 = scalar_select %p225, %s226, %s227
    %p231 = pneg %p225
    %p232 = scmp.eq.s32.totalorder %s22, 5
    %p233 = por %p231, %p232
    %p234 = scmp.ne.s32.totalorder %s226, %s229
    %p235 = scmp.eq.s32.totalorder %s22, 0
    %p236 = por %p234, %p235
    %p237 = scmp.ne.s32.totalorder %s226, %s229
    %p238 = scmp.eq.s32.totalorder %s27, 5
    %p239 = por %p237, %p238
    %p240 = scmp.ne.s32.totalorder %s229, %s230
    %p241 = scmp.eq.s32.totalorder %s27, 0
    %p242 = por %p240, %p241
    %p243 = scmp.ne.s32.totalorder %s229, %s230
    %p244 = scmp.eq.s32.totalorder %s28, 5
    %p245 = por %p243, %p244
    %p247 = scmp.ne.s32.totalorder %s230, %s246
    %p248 = scmp.eq.s32.totalorder %s28, 0
    %p249 = por %p247, %p248
    %s250 = ssub.s32 %s30, %s37
    %p251 = scmp.eq.s32.totalorder %s250, 0
    %s253 = sadd.s32 %s252, 1
    %s254 = scalar_select %p251, %s252, %s253
    %p257 = pneg %p251
    %p258 = scmp.eq.s32.totalorder %s22, 5
    %p259 = por %p257, %p258
    %p260 = scmp.ne.s32.totalorder %s252, %s255
    %p261 = scmp.eq.s32.totalorder %s22, 0
    %p262 = por %p260, %p261
    %p263 = scmp.ne.s32.totalorder %s252, %s255
    %p264 = scmp.eq.s32.totalorder %s27, 5
    %p265 = por %p263, %p264
    %p266 = scmp.ne.s32.totalorder %s255, %s256
    %p267 = scmp.eq.s32.totalorder %s27, 0
    %p268 = por %p266, %p267
    %p269 = scmp.ne.s32.totalorder %s255, %s256
    %p270 = scmp.eq.s32.totalorder %s28, 5
    %p271 = por %p269, %p270
    %p273 = scmp.ne.s32.totalorder %s256, %s272
    %p274 = scmp.eq.s32.totalorder %s28, 0
    %p275 = por %p273, %p274
    %s276 = ssub.s32 %s30, %s37
    %p277 = scmp.eq.s32.totalorder %s276, 0
    %s279 = sadd.s32 %s278, 1
    %s280 = scalar_select %p277, %s278, %s279
    %p283 = pneg %p277
    %p284 = scmp.eq.s32.totalorder %s22, 5
    %p285 = por %p283, %p284
    %p286 = scmp.ne.s32.totalorder %s278, %s281
    %p287 = scmp.eq.s32.totalorder %s22, 0
    %p288 = por %p286, %p287
    %p289 = scmp.ne.s32.totalorder %s278, %s281
    %p290 = scmp.eq.s32.totalorder %s27, 5
    %p291 = por %p289, %p290
    %p292 = scmp.ne.s32.totalorder %s281, %s282
    %p293 = scmp.eq.s32.totalorder %s27, 0
    %p294 = por %p292, %p293
    %p295 = scmp.ne.s32.totalorder %s281, %s282
    %p296 = scmp.eq.s32.totalorder %s28, 5
    %p297 = por %p295, %p296
    %p299 = scmp.ne.s32.totalorder %s282, %s298
    %p300 = scmp.eq.s32.totalorder %s28, 0
    %p301 = por %p299, %p300
    %s302 = ssub.s32 %s30, %s37
    %p303 = scmp.eq.s32.totalorder %s302, 0
    %s305 = sadd.s32 %s304, 1
    %s306 = scalar_select %p303, %s304, %s305
    %p309 = pneg %p303
    %p310 = scmp.eq.s32.totalorder %s22, 5
    %p311 = por %p309, %p310
    %p312 = scmp.ne.s32.totalorder %s304, %s307
    %p313 = scmp.eq.s32.totalorder %s22, 0
    %p314 = por %p312, %p313
    %p315 = scmp.ne.s32.totalorder %s304, %s307
    %p316 = scmp.eq.s32.totalorder %s27, 5
    %p317 = por %p315, %p316
    %p318 = scmp.ne.s32.totalorder %s307, %s308
    %p319 = scmp.eq.s32.totalorder %s27, 0
    %p320 = por %p318, %p319
    %p321 = scmp.ne.s32.totalorder %s307, %s308
    %p322 = scmp.eq.s32.totalorder %s28, 5
    %p323 = por %p321, %p322
    %p325 = scmp.ne.s32.totalorder %s308, %s324
    %p326 = scmp.eq.s32.totalorder %s28, 0
    %p327 = por %p325, %p326
    %s328 = ssub.s32 %s30, %s37
    %p329 = scmp.eq.s32.totalorder %s328, 0
    %s331 = sadd.s32 %s330, 1
    %s332 = scalar_select %p329, %s330, %s331
    %p335 = pneg %p329
    %p336 = scmp.eq.s32.totalorder %s22, 5
    %p337 = por %p335, %p336
    %p338 = scmp.ne.s32.totalorder %s330, %s333
    %p339 = scmp.eq.s32.totalorder %s22, 0
    %p340 = por %p338, %p339
    %p341 = scmp.ne.s32.totalorder %s330, %s333
    %p342 = scmp.eq.s32.totalorder %s27, 5
    %p343 = por %p341, %p342
    %p344 = scmp.ne.s32.totalorder %s333, %s334
    %p345 = scmp.eq.s32.totalorder %s27, 0
    %p346 = por %p344, %p345
    %p347 = scmp.ne.s32.totalorder %s333, %s334
    %p348 = scmp.eq.s32.totalorder %s28, 5
    %p349 = por %p347, %p348
    %p351 = scmp.ne.s32.totalorder %s334, %s350
    %p352 = scmp.eq.s32.totalorder %s28, 0
    %p353 = por %p351, %p352
    %s354 = ssub.s32 %s30, %s37
    %p355 = scmp.eq.s32.totalorder %s354, 0
    %s357 = sadd.s32 %s356, 1
    %s358 = scalar_select %p355, %s356, %s357
    %p361 = pneg %p355
    %p362 = scmp.eq.s32.totalorder %s22, 5
    %p363 = por %p361, %p362
    %p364 = scmp.ne.s32.totalorder %s356, %s359
    %p365 = scmp.eq.s32.totalorder %s22, 0
    %p366 = por %p364, %p365
    %p367 = scmp.ne.s32.totalorder %s356, %s359
    %p368 = scmp.eq.s32.totalorder %s27, 5
    %p369 = por %p367, %p368
    %p370 = scmp.ne.s32.totalorder %s359, %s360
    %p371 = scmp.eq.s32.totalorder %s27, 0
    %p372 = por %p370, %p371
    %p373 = scmp.ne.s32.totalorder %s359, %s360
    %p374 = scmp.eq.s32.totalorder %s28, 5
    %p375 = por %p373, %p374
    %p377 = scmp.ne.s32.totalorder %s360, %s376
    %p378 = scmp.eq.s32.totalorder %s28, 0
    %p379 = por %p377, %p378
    %s380 = ssub.s32 %s30, %s37
    %p381 = scmp.eq.s32.totalorder %s380, 0
    %s383 = sadd.s32 %s382, 1
    %s384 = scalar_select %p381, %s382, %s383
    %p387 = pneg %p381
    %p388 = scmp.eq.s32.totalorder %s22, 5
    %p389 = por %p387, %p388
    %p390 = scmp.ne.s32.totalorder %s382, %s385
    %p391 = scmp.eq.s32.totalorder %s22, 0
    %p392 = por %p390, %p391
    %p393 = scmp.ne.s32.totalorder %s382, %s385
    %p394 = scmp.eq.s32.totalorder %s27, 5
    %p395 = por %p393, %p394
    %p396 = scmp.ne.s32.totalorder %s385, %s386
    %p397 = scmp.eq.s32.totalorder %s27, 0
    %p398 = por %p396, %p397
    %p399 = scmp.ne.s32.totalorder %s385, %s386
    %p400 = scmp.eq.s32.totalorder %s28, 5
    %p401 = por %p399, %p400
    %p403 = scmp.ne.s32.totalorder %s386, %s402
    %p404 = scmp.eq.s32.totalorder %s28, 0
    %p405 = por %p403, %p404
    %s406 = ssub.s32 %s30, %s37
    %p407 = scmp.eq.s32.totalorder %s406, 0
    %s409 = sadd.s32 %s408, 1
    %s410 = scalar_select %p407, %s408, %s409
    %p413 = pneg %p407
    %p414 = scmp.eq.s32.totalorder %s22, 5
    %p415 = por %p413, %p414
    %p416 = scmp.ne.s32.totalorder %s408, %s411
    %p417 = scmp.eq.s32.totalorder %s22, 0
    %p418 = por %p416, %p417
    %p419 = scmp.ne.s32.totalorder %s408, %s411
    %p420 = scmp.eq.s32.totalorder %s27, 5
    %p421 = por %p419, %p420
    %p422 = scmp.ne.s32.totalorder %s411, %s412
    %p423 = scmp.eq.s32.totalorder %s27, 0
    %p424 = por %p422, %p423
    %p425 = scmp.ne.s32.totalorder %s411, %s412
    %p426 = scmp.eq.s32.totalorder %s28, 5
    %p427 = por %p425, %p426
    %p429 = scmp.ne.s32.totalorder %s412, %s428
    %p430 = scmp.eq.s32.totalorder %s28, 0
    %p431 = por %p429, %p430
    %s432 = ssub.s32 %s30, %s37
    %p433 = scmp.eq.s32.totalorder %s432, 0
    %s435 = sadd.s32 %s434, 1
    %s436 = scalar_select %p433, %s434, %s435
    %p439 = pneg %p433
    %p440 = scmp.eq.s32.totalorder %s22, 5
    %p441 = por %p439, %p440
    %p442 = scmp.ne.s32.totalorder %s434, %s437
    %p443 = scmp.eq.s32.totalorder %s22, 0
    %p444 = por %p442, %p443
    %p445 = scmp.ne.s32.totalorder %s434, %s437
    %p446 = scmp.eq.s32.totalorder %s27, 5
    %p447 = por %p445, %p446
    %p448 = scmp.ne.s32.totalorder %s437, %s438
    %p449 = scmp.eq.s32.totalorder %s27, 0
    %p450 = por %p448, %p449
    %p451 = scmp.ne.s32.totalorder %s437, %s438
    %p452 = scmp.eq.s32.totalorder %s28, 5
    %p453 = por %p451, %p452
    %p455 = scmp.ne.s32.totalorder %s438, %s454
    %p456 = scmp.eq.s32.totalorder %s28, 0
    %p457 = por %p455, %p456
    %s458 = ssub.s32 %s30, %s37
    %s459 = ssub.s32 %s29, %s41
    %s460 = sor.u32 %s458, %s459
    %p461 = scmp.eq.s32.totalorder %s460, 0
    %s463 = sadd.s32 %s462, 1
    %s464 = scalar_select %p461, %s462, %s463
    %p467 = pneg %p461
    %p468 = scmp.eq.s32.totalorder %s22, 5
    %p469 = por %p467, %p468
    %p470 = scmp.ne.s32.totalorder %s462, %s465
    %p471 = scmp.eq.s32.totalorder %s22, 0
    %p472 = por %p470, %p471
    %p473 = scmp.ne.s32.totalorder %s462, %s465
    %p474 = scmp.eq.s32.totalorder %s27, 5
    %p475 = por %p473, %p474
    %p476 = scmp.ne.s32.totalorder %s465, %s466
    %p477 = scmp.eq.s32.totalorder %s27, 0
    %p478 = por %p476, %p477
    %p479 = scmp.ne.s32.totalorder %s465, %s466
    %p480 = scmp.eq.s32.totalorder %s28, 5
    %p481 = por %p479, %p480
    %p483 = scmp.ne.s32.totalorder %s466, %s482
    %p484 = scmp.eq.s32.totalorder %s28, 0
    %p485 = por %p483, %p484
    %p486 = scmp.le.s32.totalorder 1, %s22
    %p487 = scmp.lt.s32.totalorder %s22, 7
    %p488 = pnand %p486, %p487
    %p489 = pneg %p488
    // Predicated region
    $region9: #{attention_forward.3} parent=5 // pred_check
      _
    $region10: #{attention_forward.3} parent=5 // pred_check_branch
      %491 = sbr.rel (%p488) target = $region12
    $region11: #{attention_forward.3} parent=5 // pred_region
      %s492 = ssub.s32 %s22, 1
    $region12: #{attention_forward.3} parent=5 // pred_fallthru
      _
    %p493 = scmp.lt.s32.totalorder %s22, 6
    // Predicated region
    $region13: #{attention_forward.3} parent=5 // pred_check
      %p494 = pneg %p493
    $region14: #{attention_forward.3} parent=5 // pred_check_branch
      %496 = sbr.rel (%p494) target = $region16
    $region15: #{attention_forward.3} parent=5 // pred_region
      // Predicated region
      $region17: #{attention_forward.3} parent=15 // pred_check
        %p497 = pneg %p54
      $region18: #{attention_forward.3} parent=15 // pred_check_branch
        %499 = sbr.rel (%p497) target = $region20
      $region19: #{attention_forward.3} parent=15 // pred_region
        %p500 = scmp.lt.s32.totalorder %s29, 1
        %s501 = scalar_select %p500, %s29, 1
        %s502 = smul.addr %s501, 4
        %s503 = scalar_lea.vmem %s0, %s502
      $region20: #{attention_forward.3} parent=15 // pred_fallthru
        _
      // Predicated region
      $region21: #{attention_forward.3} parent=15 // pred_check
        %p504 = pneg %p80
      $region22: #{attention_forward.3} parent=15 // pred_check_branch
        %506 = sbr.rel (%p504) target = $region24
      $region23: #{attention_forward.3} parent=15 // pred_region
        %p507 = scmp.lt.s32.totalorder %s29, 1
        %s508 = scalar_select %p507, %s29, 1
        %s509 = smul.addr %s508, 8
        %s510 = smul.addr %s509, 4
        %s511 = scalar_lea.vmem %s1, %s510
      $region24: #{attention_forward.3} parent=15 // pred_fallthru
        _
      // Predicated region
      $region25: #{attention_forward.3} parent=15 // pred_check
        %p512 = pneg %p106
      $region26: #{attention_forward.3} parent=15 // pred_check_branch
        %514 = sbr.rel (%p512) target = $region28
      $region27: #{attention_forward.3} parent=15 // pred_region
        %p515 = scmp.lt.s32.totalorder %s29, 1
        %s516 = scalar_select %p515, %s29, 1
        %s517 = smul.addr %s516, 8
        %s518 = scalar_lea.vmem %s2, %s517
      $region28: #{attention_forward.3} parent=15 // pred_fallthru
        _
      // Predicated region
      $region29: #{attention_forward.3} parent=15 // pred_check
        %p519 = pneg %p132
      $region30: #{attention_forward.3} parent=15 // pred_check_branch
        %521 = sbr.rel (%p519) target = $region32
      $region31: #{attention_forward.3} parent=15 // pred_region
        %p522 = scmp.lt.s32.totalorder %s29, 1
        %s523 = scalar_select %p522, %s29, 1
        %s524 = smul.addr %s523, 8
        %s525 = scalar_lea.vmem %s3, %s524
      $region32: #{attention_forward.3} parent=15 // pred_fallthru
        _
      // Predicated region
      $region33: #{attention_forward.3} parent=15 // pred_check
        %p526 = pneg %p158
      $region34: #{attention_forward.3} parent=15 // pred_check_branch
        %528 = sbr.rel (%p526) target = $region36
      $region35: #{attention_forward.3} parent=15 // pred_region
        %p529 = scmp.lt.s32.totalorder %s30, 2
        %s530 = scalar_select %p529, %s30, 2
        %s531 = smul.addr %s530, 2
        %s532 = scalar_lea.vmem %s4, %s531
      $region36: #{attention_forward.3} parent=15 // pred_fallthru
        _
      // Predicated region
      $region37: #{attention_forward.3} parent=15 // pred_check
        %p533 = pneg %p184
      $region38: #{attention_forward.3} parent=15 // pred_check_branch
        %535 = sbr.rel (%p533) target = $region40
      $region39: #{attention_forward.3} parent=15 // pred_region
        %p536 = scmp.lt.s32.totalorder %s30, 2
        %s537 = scalar_select %p536, %s30, 2
        %s538 = scalar_lea.vmem %s5, %s537
      $region40: #{attention_forward.3} parent=15 // pred_fallthru
        _
      // Predicated region
      $region41: #{attention_forward.3} parent=15 // pred_check
        %p539 = pneg %p210
      $region42: #{attention_forward.3} parent=15 // pred_check_branch
        %541 = sbr.rel (%p539) target = $region44
      $region43: #{attention_forward.3} parent=15 // pred_region
        %p542 = scmp.lt.s32.totalorder %s30, 2
        %s543 = scalar_select %p542, %s30, 2
        %s544 = smul.addr %s543, 5
        %s545 = smul.addr %s544, 4
        %s546 = scalar_lea.vmem %s6, %s545
      $region44: #{attention_forward.3} parent=15 // pred_fallthru
        _
      // Predicated region
      $region45: #{attention_forward.3} parent=15 // pred_check
        %p547 = pneg %p236
      $region46: #{attention_forward.3} parent=15 // pred_check_branch
        %549 = sbr.rel (%p547) target = $region48
      $region47: #{attention_forward.3} parent=15 // pred_region
        %p550 = scmp.lt.s32.totalorder %s30, 2
        %s551 = scalar_select %p550, %s30, 2
        %s552 = scalar_lea.vmem %s7, %s551
      $region48: #{attention_forward.3} parent=15 // pred_fallthru
        _
      // Predicated region
      $region49: #{attention_forward.3} parent=15 // pred_check
        %p553 = pneg %p262
      $region50: #{attention_forward.3} parent=15 // pred_check_branch
        %555 = sbr.rel (%p553) target = $region52
      $region51: #{attention_forward.3} parent=15 // pred_region
        %p556 = scmp.lt.s32.totalorder %s30, 2
        %s557 = scalar_select %p556, %s30, 2
        %s558 = smul.addr %s557, 2
        %s559 = smul.addr %s558, 4
        %s560 = scalar_lea.vmem %s8, %s559
      $region52: #{attention_forward.3} parent=15 // pred_fallthru
        _
      // Predicated region
      $region53: #{attention_forward.3} parent=15 // pred_check
        %p561 = pneg %p288
      $region54: #{attention_forward.3} parent=15 // pred_check_branch
        %563 = sbr.rel (%p561) target = $region56
      $region55: #{attention_forward.3} parent=15 // pred_region
        %p564 = scmp.lt.s32.totalorder %s30, 2
        %s565 = scalar_select %p564, %s30, 2
        %s566 = scalar_lea.vmem %s9, %s565
      $region56: #{attention_forward.3} parent=15 // pred_fallthru
        _
      // Predicated region
      $region57: #{attention_forward.3} parent=15 // pred_check
        %p567 = pneg %p314
      $region58: #{attention_forward.3} parent=15 // pred_check_branch
        %569 = sbr.rel (%p567) target = $region60
      $region59: #{attention_forward.3} parent=15 // pred_region
        %p570 = scmp.lt.s32.totalorder %s30, 2
        %s571 = scalar_select %p570, %s30, 2
        %s572 = smul.addr %s571, 2
        %s573 = smul.addr %s572, 4
        %s574 = scalar_lea.vmem %s10, %s573
      $region60: #{attention_forward.3} parent=15 // pred_fallthru
        _
      // Predicated region
      $region61: #{attention_forward.3} parent=15 // pred_check
        %p575 = pneg %p340
      $region62: #{attention_forward.3} parent=15 // pred_check_branch
        %577 = sbr.rel (%p575) target = $region64
      $region63: #{attention_forward.3} parent=15 // pred_region
        %p578 = scmp.lt.s32.totalorder %s30, 2
        %s579 = scalar_select %p578, %s30, 2
        %s580 = scalar_lea.vmem %s11, %s579
      $region64: #{attention_forward.3} parent=15 // pred_fallthru
        _
      // Predicated region
      $region65: #{attention_forward.3} parent=15 // pred_check
        %p581 = pneg %p366
      $region66: #{attention_forward.3} parent=15 // pred_check_branch
        %583 = sbr.rel (%p581) target = $region68
      $region67: #{attention_forward.3} parent=15 // pred_region
        %p584 = scmp.lt.s32.totalorder %s30, 2
        %s585 = scalar_select %p584, %s30, 2
        %s586 = smul.addr %s585, 4
        %s587 = smul.addr %s586, 4
        %s588 = scalar_lea.vmem %s12, %s587
      $region68: #{attention_forward.3} parent=15 // pred_fallthru
        _
      // Predicated region
      $region69: #{attention_forward.3} parent=15 // pred_check
        %p589 = pneg %p392
      $region70: #{attention_forward.3} parent=15 // pred_check_branch
        %591 = sbr.rel (%p589) target = $region72
      $region71: #{attention_forward.3} parent=15 // pred_region
        %p592 = scmp.lt.s32.totalorder %s30, 2
        %s593 = scalar_select %p592, %s30, 2
        %s594 = scalar_lea.vmem %s13, %s593
      $region72: #{attention_forward.3} parent=15 // pred_fallthru
        _
      // Predicated region
      $region73: #{attention_forward.3} parent=15 // pred_check
        %p595 = pneg %p418
      $region74: #{attention_forward.3} parent=15 // pred_check_branch
        %597 = sbr.rel (%p595) target = $region76
      $region75: #{attention_forward.3} parent=15 // pred_region
        %p598 = scmp.lt.s32.totalorder %s30, 2
        %s599 = scalar_select %p598, %s30, 2
        %s600 = smul.addr %s599, 2
        %s601 = smul.addr %s600, 4
        %s602 = scalar_lea.vmem %s14, %s601
      $region76: #{attention_forward.3} parent=15 // pred_fallthru
        _
      // Predicated region
      $region77: #{attention_forward.3} parent=15 // pred_check
        %p603 = pneg %p444
      $region78: #{attention_forward.3} parent=15 // pred_check_branch
        %605 = sbr.rel (%p603) target = $region80
      $region79: #{attention_forward.3} parent=15 // pred_region
        %p606 = scmp.lt.s32.totalorder %s30, 2
        %s607 = scalar_select %p606, %s30, 2
        %s608 = scalar_lea.vmem %s15, %s607
      $region80: #{attention_forward.3} parent=15 // pred_fallthru
        _
    $region16: #{attention_forward.3} parent=5 // pred_fallthru
      _
    %p609 = scmp.le.s32.totalorder 1, %s22
    %p610 = scmp.lt.s32.totalorder %s22, 7
    %p611 = pnand %p609, %p610
    %p612 = pneg %p611
    // Predicated region
    $region81: #{attention_forward.3} parent=5 // pred_check
      _
    $region82: #{attention_forward.3} parent=5 // pred_check_branch
      %614 = sbr.rel (%p611) target = $region84
    $region83: #{attention_forward.3} parent=5 // pred_region
      %s615 = ssub.s32 %s22, 1
      %p616 = scmp.lt.s32.totalorder %s31, 1
      %s617 = scalar_select %p616, %s31, 1
      %s618 = smul.addr %s617, 4
      %s619 = scalar_lea.vmem %s0, %s618
      %p620 = pneg %p60
      %p621 = pneg %p57
      %p622 = scmp.lt.s32.totalorder %s31, 1
      %s623 = scalar_select %p622, %s31, 1
      %s624 = smul.addr %s623, 8
      %s625 = smul.addr %s624, 4
      %s626 = scalar_lea.vmem %s1, %s625
      %p627 = pneg %p86
      %p628 = pneg %p83
      %p629 = scmp.lt.s32.totalorder %s31, 1
      %s630 = scalar_select %p629, %s31, 1
      %s631 = smul.addr %s630, 8
      %s632 = scalar_lea.vmem %s2, %s631
      %p633 = pneg %p112
      %p634 = pneg %p109
      %p635 = scmp.lt.s32.totalorder %s31, 1
      %s636 = scalar_select %p635, %s31, 1
      %s637 = smul.addr %s636, 8
      %s638 = scalar_lea.vmem %s3, %s637
      %p639 = pneg %p138
      %p640 = pneg %p135
      %p641 = scmp.lt.s32.totalorder %s32, 2
      %s642 = scalar_select %p641, %s32, 2
      %s643 = smul.addr %s642, 2
      %s644 = scalar_lea.vmem %s4, %s643
      %p645 = pneg %p164
      %p646 = pneg %p161
      %p647 = scmp.lt.s32.totalorder %s32, 2
      %s648 = scalar_select %p647, %s32, 2
      %s649 = scalar_lea.vmem %s5, %s648
      %p650 = pneg %p190
      %p651 = pneg %p187
      %p652 = scmp.lt.s32.totalorder %s32, 2
      %s653 = scalar_select %p652, %s32, 2
      %s654 = smul.addr %s653, 5
      %s655 = smul.addr %s654, 4
      %s656 = scalar_lea.vmem %s6, %s655
      %p657 = pneg %p216
      %p658 = pneg %p213
      %p659 = scmp.lt.s32.totalorder %s32, 2
      %s660 = scalar_select %p659, %s32, 2
      %s661 = scalar_lea.vmem %s7, %s660
      %p662 = pneg %p242
      %p663 = pneg %p239
      %p664 = scmp.lt.s32.totalorder %s32, 2
      %s665 = scalar_select %p664, %s32, 2
      %s666 = smul.addr %s665, 2
      %s667 = smul.addr %s666, 4
      %s668 = scalar_lea.vmem %s8, %s667
      %p669 = pneg %p268
      %p670 = pneg %p265
      %p671 = scmp.lt.s32.totalorder %s32, 2
      %s672 = scalar_select %p671, %s32, 2
      %s673 = scalar_lea.vmem %s9, %s672
      %p674 = pneg %p294
      %p675 = pneg %p291
      %p676 = scmp.lt.s32.totalorder %s32, 2
      %s677 = scalar_select %p676, %s32, 2
      %s678 = smul.addr %s677, 2
      %s679 = smul.addr %s678, 4
      %s680 = scalar_lea.vmem %s10, %s679
      %p681 = pneg %p320
      %p682 = pneg %p317
      %p683 = scmp.lt.s32.totalorder %s32, 2
      %s684 = scalar_select %p683, %s32, 2
      %s685 = scalar_lea.vmem %s11, %s684
      %p686 = pneg %p346
      %p687 = pneg %p343
      %p688 = scmp.lt.s32.totalorder %s32, 2
      %s689 = scalar_select %p688, %s32, 2
      %s690 = smul.addr %s689, 4
      %s691 = smul.addr %s690, 4
      %s692 = scalar_lea.vmem %s12, %s691
      %p693 = pneg %p372
      %p694 = pneg %p369
      %p695 = scmp.lt.s32.totalorder %s32, 2
      %s696 = scalar_select %p695, %s32, 2
      %s697 = scalar_lea.vmem %s13, %s696
      %p698 = pneg %p398
      %p699 = pneg %p395
      %p700 = scmp.lt.s32.totalorder %s32, 2
      %s701 = scalar_select %p700, %s32, 2
      %s702 = smul.addr %s701, 2
      %s703 = smul.addr %s702, 4
      %s704 = scalar_lea.vmem %s14, %s703
      %p705 = pneg %p424
      %p706 = pneg %p421
      %p707 = scmp.lt.s32.totalorder %s32, 2
      %s708 = scalar_select %p707, %s32, 2
      %s709 = scalar_lea.vmem %s15, %s708
      %p710 = pneg %p450
      %p711 = pneg %p447
      %p712 = pneg %p478
      %p713 = pneg %p475
      %p714 = scmp.lt.s32.totalorder %s32, 2
      %s715 = scalar_select %p714, %s32, 2
      %p716 = scmp.lt.s32.totalorder %s31, 1
      %s717 = scalar_select %p716, %s31, 1
      %s718 = smul.addr %s715, 2
      %s719 = sadd.s32 %s717, %s718
      %s720 = smul.addr %s719, 4
      %s721 = scalar_lea.vmem %s16, %s720
      %p722 = scmp.lt.s32.totalorder %s31, 1
      %s723 = scalar_select %p722, %s31, 1
      %s724 = smul.addr %s723, 4
      %s725 = scalar_lea.vmem %s0, %s724
      %p726 = scmp.lt.s32.totalorder %s31, 1
      %s727 = scalar_select %p726, %s31, 1
      %s728 = smul.addr %s727, 8
      %s729 = smul.addr %s728, 4
      %s730 = scalar_lea.vmem %s1, %s729
      %p731 = scmp.lt.s32.totalorder %s31, 1
      %s732 = scalar_select %p731, %s31, 1
      %s733 = smul.addr %s732, 8
      %s734 = scalar_lea.vmem %s2, %s733
      %p735 = scmp.lt.s32.totalorder %s31, 1
      %s736 = scalar_select %p735, %s31, 1
      %s737 = smul.addr %s736, 8
      %s738 = scalar_lea.vmem %s3, %s737
      %p739 = scmp.lt.s32.totalorder %s32, 2
      %s740 = scalar_select %p739, %s32, 2
      %s741 = smul.addr %s740, 2
      %s742 = scalar_lea.vmem %s4, %s741
      %p743 = scmp.lt.s32.totalorder %s32, 2
      %s744 = scalar_select %p743, %s32, 2
      %s745 = scalar_lea.vmem %s5, %s744
      %p746 = scmp.lt.s32.totalorder %s32, 2
      %s747 = scalar_select %p746, %s32, 2
      %s748 = smul.addr %s747, 5
      %s749 = smul.addr %s748, 4
      %s750 = scalar_lea.vmem %s6, %s749
      %p751 = scmp.lt.s32.totalorder %s32, 2
      %s752 = scalar_select %p751, %s32, 2
      %s753 = scalar_lea.vmem %s7, %s752
      %p754 = scmp.lt.s32.totalorder %s32, 2
      %s755 = scalar_select %p754, %s32, 2
      %s756 = smul.addr %s755, 2
      %s757 = smul.addr %s756, 4
      %s758 = scalar_lea.vmem %s8, %s757
      %p759 = scmp.lt.s32.totalorder %s32, 2
      %s760 = scalar_select %p759, %s32, 2
      %s761 = scalar_lea.vmem %s9, %s760
      %p762 = scmp.lt.s32.totalorder %s32, 2
      %s763 = scalar_select %p762, %s32, 2
      %s764 = smul.addr %s763, 2
      %s765 = smul.addr %s764, 4
      %s766 = scalar_lea.vmem %s10, %s765
      %p767 = scmp.lt.s32.totalorder %s32, 2
      %s768 = scalar_select %p767, %s32, 2
      %s769 = scalar_lea.vmem %s11, %s768
      %p770 = scmp.lt.s32.totalorder %s32, 2
      %s771 = scalar_select %p770, %s32, 2
      %s772 = smul.addr %s771, 4
      %s773 = smul.addr %s772, 4
      %s774 = scalar_lea.vmem %s12, %s773
      %p775 = scmp.lt.s32.totalorder %s32, 2
      %s776 = scalar_select %p775, %s32, 2
      %s777 = scalar_lea.vmem %s13, %s776
      %p778 = scmp.lt.s32.totalorder %s32, 2
      %s779 = scalar_select %p778, %s32, 2
      %s780 = smul.addr %s779, 2
      %s781 = smul.addr %s780, 4
      %s782 = scalar_lea.vmem %s14, %s781
      %p783 = scmp.lt.s32.totalorder %s32, 2
      %s784 = scalar_select %p783, %s32, 2
      %s785 = scalar_lea.vmem %s15, %s784
      %p786 = scmp.lt.s32.totalorder %s32, 2
      %s787 = scalar_select %p786, %s32, 2
      %p788 = scmp.lt.s32.totalorder %s31, 1
      %s789 = scalar_select %p788, %s31, 1
      %s790 = smul.addr %s787, 2
      %s791 = sadd.s32 %s789, %s790
      %s792 = smul.addr %s791, 4
      %s793 = scalar_lea.vmem %s16, %s792
      %v795 = vld [vmem:[%s725] sm:$0xf]
      %v796 = vld [vmem:[%s730] sm:$0xf]
      %v797 = vld [vmem:[%s730 + $0x4] sm:$0xf]
      %v798 = vld [vmem:[%s730 + $0x8] sm:$0xf]
      %v799 = vld [vmem:[%s730 + $0xc] sm:$0xf]
      %v800 = vld [vmem:[%s730 + $0x10] sm:$0xf]
      %v801 = vld [vmem:[%s730 + $0x14] sm:$0xf]
      %v802 = vld [vmem:[%s730 + $0x18] sm:$0xf]
      %v803 = vld [vmem:[%s730 + $0x1c] sm:$0xf]
      %v804 = vld [vmem:[%s734] sm:$0xff]
      %v805 = vld [vmem:[%s738] sm:$0xff]
      %v806 = vld [vmem:[%s742] sm:$0x3]
      %v807 = vld [vmem:[%s745] sm:$0x1]
      %v809 = vlaneseq
      %v810 = vshrl.u32 %v809, 7
      %v811 = vsub.s32 0, %v810
      %v812 = vrot.slane %v807, %v811
      %vm814 = vcmask 31744
      %v816 = vsel %vm814, %v795, 0
      %vm818 = vcmask 1041408
      %v820 = vsel %vm818, %v806, 0
      %822 = vmatprep.subr.bf16.mxu0 0
      %823 = vmatpush1.bf16.msra.mxu0 %v820
      %824 = vmatprep.subr.bf16.mxu0 0
      %825 = vmatpush1.bf16.msra.mxu0 0
      %826 = vmatprep.subr.bf16.mxu0 0
      %827 = vmatpush1.bf16.msra.mxu0 0
      %828 = vmatprep.subr.bf16.mxu0 0
      %829 = vmatpush1.bf16.msra.mxu0 0
      %830 = vmatprep.subr.bf16.mxu0 0
      %831 = vmatpush1.bf16.msra.mxu0 0
      %832 = vmatprep.subr.bf16.mxu0 0
      %833 = vmatpush1.bf16.msra.mxu0 0
      %834 = vmatprep.subr.bf16.mxu0 0
      %835 = vmatpush1.bf16.msra.mxu0 0
      %836 = vmatprep.subr.bf16.mxu0 0
      %837 = vmatpush1.bf16.msra.mxu0 0
      %838 = vmatprep.subr.bf16.mxu0 0
      %839 = vmatpush1.bf16.msra.mxu0 0
      %840 = vmatprep.subr.bf16.mxu0 0
      %841 = vmatpush1.bf16.msra.mxu0 0
      %842 = vmatprep.subr.bf16.mxu0 0
      %843 = vmatpush1.bf16.msra.mxu0 0
      %844 = vmatprep.subr.bf16.mxu0 0
      %845 = vmatpush1.bf16.msra.mxu0 0
      %846 = vmatprep.subr.bf16.mxu0 0
      %847 = vmatpush1.bf16.msra.mxu0 0
      %848 = vmatprep.subr.bf16.mxu0 0
      %849 = vmatpush1.bf16.msra.mxu0 0
      %850 = vmatprep.subr.bf16.mxu0 0
      %851 = vmatpush1.bf16.msra.mxu0 0
      %852 = vmatprep.subr.bf16.mxu0 0
      %853 = vmatpush1.bf16.msra.mxu0 0
      %854 = vmatprep.mubr.bf16.mxu0 0
      %855 = vmatmul.mubr.bf16.gmra.mrb[0].mxu0 %v816
      %v856 = vpop.f32.mrb[0].mxu0
      %v857 = vadd.f32 %v812, %v856
      %v858 = vpop.f32.mrb[0].mxu0
      %v859 = vpop.f32.mrb[0].mxu0
      %v860 = vpop.f32.mrb[0].mxu0
      %861 = vdwg.mxu0
      %v862 = vpack.c.bf16 %v857, %v857
      %v863 = vld [vmem:[%s750] sm:$0xf]
      %v864 = vld [vmem:[%s750 + $0x4] sm:$0xf]
      %v865 = vld [vmem:[%s750 + $0x8] sm:$0xf]
      %v866 = vld [vmem:[%s750 + $0xc] sm:$0xf]
      %v867 = vld [vmem:[%s750 + $0x10] sm:$0x3]
      %v870 = vunpack.c.l.b16 %v863
      %v871 = vunpack.c.l.b16 %v864
      %v872 = vpack.c.b16 %v871, %v870
      %vm874 = vcmask 130048
      %v876 = vsel %vm874, %v862, 0
      %878 = vmatprep.subr.bf16.mxu0 0
      %879 = vmatpush1.bf16.msra.mxu0 %v872
      %880 = vmatprep.subr.bf16.mxu0 0
      %881 = vmatpush1.bf16.msra.mxu0 0
      %882 = vmatprep.subr.bf16.mxu0 0
      %883 = vmatpush1.bf16.msra.mxu0 0
      %884 = vmatprep.subr.bf16.mxu0 0
      %885 = vmatpush1.bf16.msra.mxu0 0
      %886 = vmatprep.subr.bf16.mxu0 0
      %887 = vmatpush1.bf16.msra.mxu0 0
      %888 = vmatprep.subr.bf16.mxu0 0
      %889 = vmatpush1.bf16.msra.mxu0 0
      %890 = vmatprep.subr.bf16.mxu0 0
      %891 = vmatpush1.bf16.msra.mxu0 0
      %892 = vmatprep.subr.bf16.mxu0 0
      %893 = vmatpush1.bf16.msra.mxu0 0
      %894 = vmatprep.subr.bf16.mxu0 0
      %895 = vmatpush1.bf16.msra.mxu0 0
      %896 = vmatprep.subr.bf16.mxu0 0
      %897 = vmatpush1.bf16.msra.mxu0 0
      %898 = vmatprep.subr.bf16.mxu0 0
      %899 = vmatpush1.bf16.msra.mxu0 0
      %900 = vmatprep.subr.bf16.mxu0 0
      %901 = vmatpush1.bf16.msra.mxu0 0
      %902 = vmatprep.subr.bf16.mxu0 0
      %903 = vmatpush1.bf16.msra.mxu0 0
      %904 = vmatprep.subr.bf16.mxu0 0
      %905 = vmatpush1.bf16.msra.mxu0 0
      %906 = vmatprep.subr.bf16.mxu0 0
      %907 = vmatpush1.bf16.msra.mxu0 0
      %908 = vmatprep.subr.bf16.mxu0 0
      %909 = vmatpush1.bf16.msra.mxu0 0
      %910 = vmatprep.mubr.bf16.mxu0 0
      %911 = vmatmul.mubr.bf16.gmra.mrb[0].mxu0 %v876
      %v912 = vpop.f32.mrb[0].mxu0
      %v913 = vadd.f32 0.0, %v912
      %v914 = vpop.f32.mrb[0].mxu0
      %v915 = vpop.f32.mrb[0].mxu0
      %v916 = vpop.f32.mrb[0].mxu0
      %917 = vdwg.mxu0
      %v920 = vunpack.c.l.b16 %v865
      %v921 = vunpack.c.l.b16 %v866
      %v922 = vpack.c.b16 %v921, %v920
      %924 = vmatprep.subr.bf16.mxu0 0
      %925 = vmatpush1.bf16.msra.mxu0 %v922
      %926 = vmatprep.subr.bf16.mxu0 0
      %927 = vmatpush1.bf16.msra.mxu0 0
      %928 = vmatprep.subr.bf16.mxu0 0
      %929 = vmatpush1.bf16.msra.mxu0 0
      %930 = vmatprep.subr.bf16.mxu0 0
      %931 = vmatpush1.bf16.msra.mxu0 0
      %932 = vmatprep.subr.bf16.mxu0 0
      %933 = vmatpush1.bf16.msra.mxu0 0
      %934 = vmatprep.subr.bf16.mxu0 0
      %935 = vmatpush1.bf16.msra.mxu0 0
      %936 = vmatprep.subr.bf16.mxu0 0
      %937 = vmatpush1.bf16.msra.mxu0 0
      %938 = vmatprep.subr.bf16.mxu0 0
      %939 = vmatpush1.bf16.msra.mxu0 0
      %940 = vmatprep.subr.bf16.mxu0 0
      %941 = vmatpush1.bf16.msra.mxu0 0
      %942 = vmatprep.subr.bf16.mxu0 0
      %943 = vmatpush1.bf16.msra.mxu0 0
      %944 = vmatprep.subr.bf16.mxu0 0
      %945 = vmatpush1.bf16.msra.mxu0 0
      %946 = vmatprep.subr.bf16.mxu0 0
      %947 = vmatpush1.bf16.msra.mxu0 0
      %948 = vmatprep.subr.bf16.mxu0 0
      %949 = vmatpush1.bf16.msra.mxu0 0
      %950 = vmatprep.subr.bf16.mxu0 0
      %951 = vmatpush1.bf16.msra.mxu0 0
      %952 = vmatprep.subr.bf16.mxu0 0
      %953 = vmatpush1.bf16.msra.mxu0 0
      %954 = vmatprep.subr.bf16.mxu0 0
      %955 = vmatpush1.bf16.msra.mxu0 0
      %956 = vmatprep.mubr.bf16.mxu0 0
      %957 = vmatmul.mubr.bf16.gmra.mrb[0].mxu0 %v876
      %v958 = vpop.f32.mrb[0].mxu0
      %v959 = vadd.f32 0.0, %v958
      %v960 = vpop.f32.mrb[0].mxu0
      %v961 = vpop.f32.mrb[0].mxu0
      %v962 = vpop.f32.mrb[0].mxu0
      %963 = vdwg.mxu0
      %v972 = vunpack.c.l.b16 %v796
      %v973 = vunpack.c.l.b16 %v797
      %v974 = vunpack.c.l.b16 %v798
      %v975 = vunpack.c.l.b16 %v799
      %v976 = vunpack.c.l.b16 %v800
      %v977 = vunpack.c.l.b16 %v801
      %v978 = vunpack.c.l.b16 %v802
      %v979 = vunpack.c.l.b16 %v803
      %v980 = vpack.c.b16 %v973, %v972
      %v981 = vpack.c.b16 %v975, %v974
      %v982 = vpack.c.b16 %v977, %v976
      %v983 = vpack.c.b16 %v979, %v978
      %vm984 = vcmask 23552
      %v986 = vsel %vm984, %v980, 0
      %v989 = vsel %vm984, %v981, 0
      %v992 = vsel %vm984, %v982, 0
      %v995 = vsel %vm984, %v983, 0
      %vm997 = vcmask 1040384
      %v998 = vsel %vm997, 4294967295, 65535
      %v999 = vsel %vm818, %v998, 0
      %v1001 = vand.u32 %v867, %v999
      %1003 = vmatprep.subr.bf16.mxu0 0
      %1004 = vmatpush1.bf16.msra.mxu0 %v1001
      %1005 = vmatprep.subr.bf16.mxu0 0
      %1006 = vmatpush1.bf16.msra.mxu0 0
      %1007 = vmatprep.subr.bf16.mxu0 0
      %1008 = vmatpush1.bf16.msra.mxu0 0
      %1009 = vmatprep.subr.bf16.mxu0 0
      %1010 = vmatpush1.bf16.msra.mxu0 0
      %1011 = vmatprep.subr.bf16.mxu0 0
      %1012 = vmatpush1.bf16.msra.mxu0 0
      %1013 = vmatprep.subr.bf16.mxu0 0
      %1014 = vmatpush1.bf16.msra.mxu0 0
      %1015 = vmatprep.subr.bf16.mxu0 0
      %1016 = vmatpush1.bf16.msra.mxu0 0
      %1017 = vmatprep.subr.bf16.mxu0 0
      %1018 = vmatpush1.bf16.msra.mxu0 0
      %1019 = vmatprep.subr.bf16.mxu0 0
      %1020 = vmatpush1.bf16.msra.mxu0 0
      %1021 = vmatprep.subr.bf16.mxu0 0
      %1022 = vmatpush1.bf16.msra.mxu0 0
      %1023 = vmatprep.subr.bf16.mxu0 0
      %1024 = vmatpush1.bf16.msra.mxu0 0
      %1025 = vmatprep.subr.bf16.mxu0 0
      %1026 = vmatpush1.bf16.msra.mxu0 0
      %1027 = vmatprep.subr.bf16.mxu0 0
      %1028 = vmatpush1.bf16.msra.mxu0 0
      %1029 = vmatprep.subr.bf16.mxu0 0
      %1030 = vmatpush1.bf16.msra.mxu0 0
      %1031 = vmatprep.subr.bf16.mxu0 0
      %1032 = vmatpush1.bf16.msra.mxu0 0
      %1033 = vmatprep.subr.bf16.mxu0 0
      %1034 = vmatpush1.bf16.msra.mxu0 0
      %1035 = vmatprep.mubr.bf16.mxu0 0
      %1036 = vmatmul.mubr.bf16.gmra.mrb[0].mxu0 %v986
      %v1037 = vpop.f32.mrb[0].mxu0
      %v1038 = vadd.f32 0.0, %v1037
      %v1039 = vpop.f32.mrb[0].mxu0
      %v1040 = vpop.f32.mrb[0].mxu0
      %v1041 = vadd.f32 0.0, %v1040
      %v1042 = vpop.f32.mrb[0].mxu0
      %1043 = vmatprep.mubr.bf16.mxu0 0
      %1044 = vmatmul.mubr.bf16.gmra.mrb[0].mxu0 %v989
      %v1045 = vpop.f32.mrb[0].mxu0
      %v1046 = vadd.f32 0.0, %v1045
      %v1047 = vpop.f32.mrb[0].mxu0
      %v1048 = vpop.f32.mrb[0].mxu0
      %v1049 = vadd.f32 0.0, %v1048
      %v1050 = vpop.f32.mrb[0].mxu0
      %1051 = vmatprep.mubr.bf16.mxu0 0
      %1052 = vmatmul.mubr.bf16.gmra.mrb[0].mxu0 %v992
      %v1053 = vpop.f32.mrb[0].mxu0
      %v1054 = vadd.f32 0.0, %v1053
      %v1055 = vpop.f32.mrb[0].mxu0
      %v1056 = vpop.f32.mrb[0].mxu0
      %v1057 = vadd.f32 0.0, %v1056
      %v1058 = vpop.f32.mrb[0].mxu0
      %1059 = vmatprep.mubr.bf16.mxu0 0
      %1060 = vmatmul.mubr.bf16.gmra.mrb[0].mxu0 %v995
      %v1061 = vpop.f32.mrb[0].mxu0
      %v1062 = vadd.f32 0.0, %v1061
      %v1063 = vpop.f32.mrb[0].mxu0
      %v1064 = vpop.f32.mrb[0].mxu0
      %v1065 = vadd.f32 0.0, %v1064
      %v1066 = vpop.f32.mrb[0].mxu0
      %1067 = vdwg.mxu0
      %v1069 = vcombine.high %v913, %v913
      %v1071 = vunpack.c.l.s4 1966171168
      %v1072 = vunpack.c.0.s8 %v1071
      %v1073 = vlaneseq
      %v1074 = vshrl.u32 %v1073, 7
      %v1075 = vsub.s32 %v1072, %v1074
      %v1076 = vrot.slane %v913, %v1075
      %v1078 = vunpack.c.l.s4 1966171168
      %v1079 = vunpack.c.0.s8 %v1078
      %v1080 = vlaneseq
      %v1081 = vshrl.u32 %v1080, 7
      %v1082 = vsub.s32 %v1079, %v1081
      %v1083 = vrot.slane %v1069, %v1082
      %v1084 = vcombine.high %v1076, %v1076
      %v1085 = vcombine.high %v1083, %v1083
      %v1087 = vunpack.c.l.s4 1966171168
      %v1088 = vunpack.c.0.s8 %v1087
      %v1089 = vlaneseq
      %v1090 = vshrl.u32 %v1089, 7
      %v1091 = vsub.s32 %v1088, %v1090
      %v1092 = vrot.slane %v1076, %v1091
      %v1094 = vunpack.c.l.s4 1966171168
      %v1095 = vunpack.c.0.s8 %v1094
      %v1096 = vlaneseq
      %v1097 = vshrl.u32 %v1096, 7
      %v1098 = vsub.s32 %v1095, %v1097
      %v1099 = vrot.slane %v1083, %v1098
      %v1101 = vunpack.c.l.s4 1966171168
      %v1102 = vunpack.c.0.s8 %v1101
      %v1103 = vlaneseq
      %v1104 = vshrl.u32 %v1103, 7
      %v1105 = vsub.s32 %v1102, %v1104
      %v1106 = vrot.slane %v1084, %v1105
      %v1108 = vunpack.c.l.s4 1966171168
      %v1109 = vunpack.c.0.s8 %v1108
      %v1110 = vlaneseq
      %v1111 = vshrl.u32 %v1110, 7
      %v1112 = vsub.s32 %v1109, %v1111
      %v1113 = vrot.slane %v1085, %v1112
      %v1114 = vcombine.high %v1092, %v1092
      %v1115 = vcombine.high %v1099, %v1099
      %v1116 = vcombine.high %v1106, %v1106
      %v1117 = vcombine.high %v1113, %v1113
      %v1118 = vlaneseq
      %v1119 = vshrl.u32 %v1118, 7
      %v1120 = vsub.s32 0, %v1119
      %v1121 = vrot.slane %v1092, %v1120
      %v1122 = vlaneseq
      %v1123 = vshrl.u32 %v1122, 7
      %v1124 = vsub.s32 0, %v1123
      %v1125 = vrot.slane %v1106, %v1124
      %v1126 = vlaneseq
      %v1127 = vshrl.u32 %v1126, 7
      %v1128 = vsub.s32 0, %v1127
      %v1129 = vrot.slane %v1114, %v1128
      %v1130 = vlaneseq
      %v1131 = vshrl.u32 %v1130, 7
      %v1132 = vsub.s32 0, %v1131
      %v1133 = vrot.slane %v1116, %v1132
      %v1134 = vlaneseq
      %v1135 = vshrl.u32 %v1134, 7
      %v1136 = vsub.s32 0, %v1135
      %v1137 = vrot.slane %v1099, %v1136
      %v1138 = vlaneseq
      %v1139 = vshrl.u32 %v1138, 7
      %v1140 = vsub.s32 0, %v1139
      %v1141 = vrot.slane %v1113, %v1140
      %v1142 = vlaneseq
      %v1143 = vshrl.u32 %v1142, 7
      %v1144 = vsub.s32 0, %v1143
      %v1145 = vrot.slane %v1115, %v1144
      %v1146 = vlaneseq
      %v1147 = vshrl.u32 %v1146, 7
      %v1148 = vsub.s32 0, %v1147
      %v1149 = vrot.slane %v1117, %v1148
      %v1158 = vadd.f32 %v1038, %v1121
      %v1159 = vadd.f32 %v1041, %v1125
      %v1160 = vadd.f32 %v1046, %v1129
      %v1161 = vadd.f32 %v1049, %v1133
      %v1162 = vadd.f32 %v1054, %v1137
      %v1163 = vadd.f32 %v1057, %v1141
      %v1164 = vadd.f32 %v1062, %v1145
      %v1165 = vadd.f32 %v1065, %v1149
      %v1166 = vadd.f32 %v1158, %v959
      %v1167 = vadd.f32 %v1159, %v959
      %v1168 = vadd.f32 %v1160, %v959
      %v1169 = vadd.f32 %v1161, %v959
      %v1170 = vadd.f32 %v1162, %v959
      %v1171 = vadd.f32 %v1163, %v959
      %v1172 = vadd.f32 %v1164, %v959
      %v1173 = vadd.f32 %v1165, %v959
      %v1174 = vld [vmem:[%s753] sm:$0x1]
      %v1176 = vlaneseq
      %v1177 = vshrl.u32 %v1176, 7
      %v1178 = vsub.s32 0, %v1177
      %v1179 = vrot.slane %v1174, %v1178
      %v1181 = vadd.f32 %v1166, %v1179
      %v1182 = vadd.f32 %v1167, %v1179
      %v1183 = vadd.f32 %v1168, %v1179
      %v1184 = vadd.f32 %v1169, %v1179
      %v1185 = vadd.f32 %v1170, %v1179
      %v1186 = vadd.f32 %v1171, %v1179
      %v1187 = vadd.f32 %v1172, %v1179
      %v1188 = vadd.f32 %v1173, %v1179
      %v1189 = vxor.u32 %v1181, 2147483648
      %v1190 = vxor.u32 %v1182, 2147483648
      %v1191 = vxor.u32 %v1183, 2147483648
      %v1192 = vxor.u32 %v1184, 2147483648
      %v1193 = vxor.u32 %v1185, 2147483648
      %v1194 = vxor.u32 %v1186, 2147483648
      %v1195 = vxor.u32 %v1187, 2147483648
      %v1196 = vxor.u32 %v1188, 2147483648
      %v1197 = vmul.f32 %v1189, 1.442695
      %v1198 = vpow.pop %v1197
      %v1199 = vmul.f32 %v1190, 1.442695
      %v1200 = vpow.pop %v1199
      %v1201 = vmul.f32 %v1191, 1.442695
      %v1202 = vpow.pop %v1201
      %v1203 = vmul.f32 %v1192, 1.442695
      %v1204 = vpow.pop %v1203
      %v1205 = vmul.f32 %v1193, 1.442695
      %v1206 = vpow.pop %v1205
      %v1207 = vmul.f32 %v1194, 1.442695
      %v1208 = vpow.pop %v1207
      %v1209 = vmul.f32 %v1195, 1.442695
      %v1210 = vpow.pop %v1209
      %v1211 = vmul.f32 %v1196, 1.442695
      %v1212 = vpow.pop %v1211
      %v1213 = vadd.f32 %v1198, 1.0
      %v1214 = vadd.f32 %v1200, 1.0
      %v1215 = vadd.f32 %v1202, 1.0
      %v1216 = vadd.f32 %v1204, 1.0
      %v1217 = vadd.f32 %v1206, 1.0
      %v1218 = vadd.f32 %v1208, 1.0
      %v1219 = vadd.f32 %v1210, 1.0
      %v1220 = vadd.f32 %v1212, 1.0
      %v1221 = vrcp.pop %v1213
      %v1222 = vmul.f32 1.0, %v1221
      %v1223 = vrcp.pop %v1214
      %v1224 = vmul.f32 1.0, %v1223
      %v1225 = vrcp.pop %v1215
      %v1226 = vmul.f32 1.0, %v1225
      %v1227 = vrcp.pop %v1216
      %v1228 = vmul.f32 1.0, %v1227
      %v1229 = vrcp.pop %v1217
      %v1230 = vmul.f32 1.0, %v1229
      %v1231 = vrcp.pop %v1218
      %v1232 = vmul.f32 1.0, %v1231
      %v1233 = vrcp.pop %v1219
      %v1234 = vmul.f32 1.0, %v1233
      %v1235 = vrcp.pop %v1220
      %v1236 = vmul.f32 1.0, %v1235
      %v1237 = vmul.f32 %v1181, %v1222
      %v1238 = vmul.f32 %v1182, %v1224
      %v1239 = vmul.f32 %v1183, %v1226
      %v1240 = vmul.f32 %v1184, %v1228
      %v1241 = vmul.f32 %v1185, %v1230
      %v1242 = vmul.f32 %v1186, %v1232
      %v1243 = vmul.f32 %v1187, %v1234
      %v1244 = vmul.f32 %v1188, %v1236
      %v1245 = vpack.c.bf16 %v1238, %v1237
      %v1246 = vpack.c.bf16 %v1240, %v1239
      %v1247 = vpack.c.bf16 %v1242, %v1241
      %v1248 = vpack.c.bf16 %v1244, %v1243
      %v1249 = vld [vmem:[%s758] sm:$0xf]
      %v1250 = vld [vmem:[%s758 + $0x4] sm:$0xf]
      %v1251 = vld [vmem:[%s761] sm:$0x1]
      %v1253 = vlaneseq
      %v1254 = vshrl.u32 %v1253, 7
      %v1255 = vsub.s32 0, %v1254
      %v1256 = vrot.slane %v1251, %v1255
      %v1260 = vunpack.c.l.b16 %v1249
      %v1261 = vunpack.c.l.b16 %v1250
      %v1262 = vpack.c.b16 %v1261, %v1260
      %v1265 = vsel %vm874, %v1245, 0
      %v1268 = vsel %vm874, %v1246, 0
      %v1271 = vsel %vm874, %v1247, 0
      %v1274 = vsel %vm874, %v1248, 0
      %1276 = vmatprep.subr.bf16.mxu0 0
      %1277 = vmatpush1.bf16.msra.mxu0 %v1262
      %1278 = vmatprep.subr.bf16.mxu0 0
      %1279 = vmatpush1.bf16.msra.mxu0 0
      %1280 = vmatprep.subr.bf16.mxu0 0
      %1281 = vmatpush1.bf16.msra.mxu0 0
      %1282 = vmatprep.subr.bf16.mxu0 0
      %1283 = vmatpush1.bf16.msra.mxu0 0
      %1284 = vmatprep.subr.bf16.mxu0 0
      %1285 = vmatpush1.bf16.msra.mxu0 0
      %1286 = vmatprep.subr.bf16.mxu0 0
      %1287 = vmatpush1.bf16.msra.mxu0 0
      %1288 = vmatprep.subr.bf16.mxu0 0
      %1289 = vmatpush1.bf16.msra.mxu0 0
      %1290 = vmatprep.subr.bf16.mxu0 0
      %1291 = vmatpush1.bf16.msra.mxu0 0
      %1292 = vmatprep.subr.bf16.mxu0 0
      %1293 = vmatpush1.bf16.msra.mxu0 0
      %1294 = vmatprep.subr.bf16.mxu0 0
      %1295 = vmatpush1.bf16.msra.mxu0 0
      %1296 = vmatprep.subr.bf16.mxu0 0
      %1297 = vmatpush1.bf16.msra.mxu0 0
      %1298 = vmatprep.subr.bf16.mxu0 0
      %1299 = vmatpush1.bf16.msra.mxu0 0
      %1300 = vmatprep.subr.bf16.mxu0 0
      %1301 = vmatpush1.bf16.msra.mxu0 0
      %1302 = vmatprep.subr.bf16.mxu0 0
      %1303 = vmatpush1.bf16.msra.mxu0 0
      %1304 = vmatprep.subr.bf16.mxu0 0
      %1305 = vmatpush1.bf16.msra.mxu0 0
      %1306 = vmatprep.subr.bf16.mxu0 0
      %1307 = vmatpush1.bf16.msra.mxu0 0
      %1308 = vmatprep.mubr.bf16.mxu0 0
      %1309 = vmatmul.mubr.bf16.gmra.mrb[0].mxu0 %v1265
      %v1310 = vpop.f32.mrb[0].mxu0
      %v1311 = vadd.f32 %v1256, %v1310
      %v1312 = vpop.f32.mrb[0].mxu0
      %v1313 = vpop.f32.mrb[0].mxu0
      %v1314 = vadd.f32 %v1256, %v1313
      %v1315 = vpop.f32.mrb[0].mxu0
      %1316 = vmatprep.mubr.bf16.mxu0 0
      %1317 = vmatmul.mubr.bf16.gmra.mrb[0].mxu0 %v1268
      %v1318 = vpop.f32.mrb[0].mxu0
      %v1319 = vadd.f32 %v1256, %v1318
      %v1320 = vpop.f32.mrb[0].mxu0
      %v1321 = vpop.f32.mrb[0].mxu0
      %v1322 = vadd.f32 %v1256, %v1321
      %v1323 = vpop.f32.mrb[0].mxu0
      %1324 = vmatprep.mubr.bf16.mxu0 0
      %1325 = vmatmul.mubr.bf16.gmra.mrb[0].mxu0 %v1271
      %v1326 = vpop.f32.mrb[0].mxu0
      %v1327 = vadd.f32 %v1256, %v1326
      %v1328 = vpop.f32.mrb[0].mxu0
      %v1329 = vpop.f32.mrb[0].mxu0
      %v1330 = vadd.f32 %v1256, %v1329
      %v1331 = vpop.f32.mrb[0].mxu0
      %1332 = vmatprep.mubr.bf16.mxu0 0
      %1333 = vmatmul.mubr.bf16.gmra.mrb[0].mxu0 %v1274
      %v1334 = vpop.f32.mrb[0].mxu0
      %v1335 = vadd.f32 %v1256, %v1334
      %v1336 = vpop.f32.mrb[0].mxu0
      %v1337 = vpop.f32.mrb[0].mxu0
      %v1338 = vadd.f32 %v1256, %v1337
      %v1339 = vpop.f32.mrb[0].mxu0
      %1340 = vdwg.mxu0
      %v1341 = vxor.u32 %v1311, 2147483648
      %v1342 = vxor.u32 %v1314, 2147483648
      %v1343 = vxor.u32 %v1319, 2147483648
      %v1344 = vxor.u32 %v1322, 2147483648
      %v1345 = vxor.u32 %v1327, 2147483648
      %v1346 = vxor.u32 %v1330, 2147483648
      %v1347 = vxor.u32 %v1335, 2147483648
      %v1348 = vxor.u32 %v1338, 2147483648
      %v1349 = vmul.f32 %v1341, 1.442695
      %v1350 = vpow.pop %v1349
      %v1351 = vmul.f32 %v1342, 1.442695
      %v1352 = vpow.pop %v1351
      %v1353 = vmul.f32 %v1343, 1.442695
      %v1354 = vpow.pop %v1353
      %v1355 = vmul.f32 %v1344, 1.442695
      %v1356 = vpow.pop %v1355
      %v1357 = vmul.f32 %v1345, 1.442695
      %v1358 = vpow.pop %v1357
      %v1359 = vmul.f32 %v1346, 1.442695
      %v1360 = vpow.pop %v1359
      %v1361 = vmul.f32 %v1347, 1.442695
      %v1362 = vpow.pop %v1361
      %v1363 = vmul.f32 %v1348, 1.442695
      %v1364 = vpow.pop %v1363
      %v1365 = vadd.f32 %v1350, 1.0
      %v1366 = vadd.f32 %v1352, 1.0
      %v1367 = vadd.f32 %v1354, 1.0
      %v1368 = vadd.f32 %v1356, 1.0
      %v1369 = vadd.f32 %v1358, 1.0
      %v1370 = vadd.f32 %v1360, 1.0
      %v1371 = vadd.f32 %v1362, 1.0
      %v1372 = vadd.f32 %v1364, 1.0
      %v1373 = vrcp.pop %v1365
      %v1374 = vmul.f32 1.0, %v1373
      %v1375 = vrcp.pop %v1366
      %v1376 = vmul.f32 1.0, %v1375
      %v1377 = vrcp.pop %v1367
      %v1378 = vmul.f32 1.0, %v1377
      %v1379 = vrcp.pop %v1368
      %v1380 = vmul.f32 1.0, %v1379
      %v1381 = vrcp.pop %v1369
      %v1382 = vmul.f32 1.0, %v1381
      %v1383 = vrcp.pop %v1370
      %v1384 = vmul.f32 1.0, %v1383
      %v1385 = vrcp.pop %v1371
      %v1386 = vmul.f32 1.0, %v1385
      %v1387 = vrcp.pop %v1372
      %v1388 = vmul.f32 1.0, %v1387
      %v1389 = vmul.f32 %v1311, %v1374
      %v1390 = vmul.f32 %v1314, %v1376
      %v1391 = vmul.f32 %v1319, %v1378
      %v1392 = vmul.f32 %v1322, %v1380
      %v1393 = vmul.f32 %v1327, %v1382
      %v1394 = vmul.f32 %v1330, %v1384
      %v1395 = vmul.f32 %v1335, %v1386
      %v1396 = vmul.f32 %v1338, %v1388
      %v1397 = vpack.c.bf16 %v1390, %v1389
      %v1398 = vpack.c.bf16 %v1392, %v1391
      %v1399 = vpack.c.bf16 %v1394, %v1393
      %v1400 = vpack.c.bf16 %v1396, %v1395
      %v1401 = vld [vmem:[%s766] sm:$0xf]
      %v1402 = vld [vmem:[%s766 + $0x4] sm:$0xf]
      %v1403 = vld [vmem:[%s769] sm:$0x1]
      %v1405 = vlaneseq
      %v1406 = vshrl.u32 %v1405, 7
      %v1407 = vsub.s32 0, %v1406
      %v1408 = vrot.slane %v1403, %v1407
      %v1412 = vunpack.c.l.b16 %v1401
      %v1413 = vunpack.c.l.b16 %v1402
      %v1414 = vpack.c.b16 %v1413, %v1412
      %v1417 = vsel %vm874, %v1397, 0
      %v1420 = vsel %vm874, %v1398, 0
      %v1423 = vsel %vm874, %v1399, 0
      %v1426 = vsel %vm874, %v1400, 0
      %1428 = vmatprep.subr.bf16.mxu0 0
      %1429 = vmatpush1.bf16.msra.mxu0 %v1414
      %1430 = vmatprep.subr.bf16.mxu0 0
      %1431 = vmatpush1.bf16.msra.mxu0 0
      %1432 = vmatprep.subr.bf16.mxu0 0
      %1433 = vmatpush1.bf16.msra.mxu0 0
      %1434 = vmatprep.subr.bf16.mxu0 0
      %1435 = vmatpush1.bf16.msra.mxu0 0
      %1436 = vmatprep.subr.bf16.mxu0 0
      %1437 = vmatpush1.bf16.msra.mxu0 0
      %1438 = vmatprep.subr.bf16.mxu0 0
      %1439 = vmatpush1.bf16.msra.mxu0 0
      %1440 = vmatprep.subr.bf16.mxu0 0
      %1441 = vmatpush1.bf16.msra.mxu0 0
      %1442 = vmatprep.subr.bf16.mxu0 0
      %1443 = vmatpush1.bf16.msra.mxu0 0
      %1444 = vmatprep.subr.bf16.mxu0 0
      %1445 = vmatpush1.bf16.msra.mxu0 0
      %1446 = vmatprep.subr.bf16.mxu0 0
      %1447 = vmatpush1.bf16.msra.mxu0 0
      %1448 = vmatprep.subr.bf16.mxu0 0
      %1449 = vmatpush1.bf16.msra.mxu0 0
      %1450 = vmatprep.subr.bf16.mxu0 0
      %1451 = vmatpush1.bf16.msra.mxu0 0
      %1452 = vmatprep.subr.bf16.mxu0 0
      %1453 = vmatpush1.bf16.msra.mxu0 0
      %1454 = vmatprep.subr.bf16.mxu0 0
      %1455 = vmatpush1.bf16.msra.mxu0 0
      %1456 = vmatprep.subr.bf16.mxu0 0
      %1457 = vmatpush1.bf16.msra.mxu0 0
      %1458 = vmatprep.subr.bf16.mxu0 0
      %1459 = vmatpush1.bf16.msra.mxu0 0
      %1460 = vmatprep.mubr.bf16.mxu0 0
      %1461 = vmatmul.mubr.bf16.gmra.mrb[0].mxu0 %v1417
      %v1462 = vpop.f32.mrb[0].mxu0
      %v1463 = vadd.f32 %v1408, %v1462
      %v1464 = vpop.f32.mrb[0].mxu0
      %v1465 = vpop.f32.mrb[0].mxu0
      %v1466 = vadd.f32 %v1408, %v1465
      %v1467 = vpop.f32.mrb[0].mxu0
      %1468 = vmatprep.mubr.bf16.mxu0 0
      %1469 = vmatmul.mubr.bf16.gmra.mrb[0].mxu0 %v1420
      %v1470 = vpop.f32.mrb[0].mxu0
      %v1471 = vadd.f32 %v1408, %v1470
      %v1472 = vpop.f32.mrb[0].mxu0
      %v1473 = vpop.f32.mrb[0].mxu0
      %v1474 = vadd.f32 %v1408, %v1473
      %v1475 = vpop.f32.mrb[0].mxu0
      %1476 = vmatprep.mubr.bf16.mxu0 0
      %1477 = vmatmul.mubr.bf16.gmra.mrb[0].mxu0 %v1423
      %v1478 = vpop.f32.mrb[0].mxu0
      %v1479 = vadd.f32 %v1408, %v1478
      %v1480 = vpop.f32.mrb[0].mxu0
      %v1481 = vpop.f32.mrb[0].mxu0
      %v1482 = vadd.f32 %v1408, %v1481
      %v1483 = vpop.f32.mrb[0].mxu0
      %1484 = vmatprep.mubr.bf16.mxu0 0
      %1485 = vmatmul.mubr.bf16.gmra.mrb[0].mxu0 %v1426
      %v1486 = vpop.f32.mrb[0].mxu0
      %v1487 = vadd.f32 %v1408, %v1486
      %v1488 = vpop.f32.mrb[0].mxu0
      %v1489 = vpop.f32.mrb[0].mxu0
      %v1490 = vadd.f32 %v1408, %v1489
      %v1491 = vpop.f32.mrb[0].mxu0
      %1492 = vdwg.mxu0
      %v1493 = vxor.u32 %v1463, 2147483648
      %v1494 = vxor.u32 %v1466, 2147483648
      %v1495 = vxor.u32 %v1471, 2147483648
      %v1496 = vxor.u32 %v1474, 2147483648
      %v1497 = vxor.u32 %v1479, 2147483648
      %v1498 = vxor.u32 %v1482, 2147483648
      %v1499 = vxor.u32 %v1487, 2147483648
      %v1500 = vxor.u32 %v1490, 2147483648
      %v1501 = vmul.f32 %v1493, 1.442695
      %v1502 = vpow.pop %v1501
      %v1503 = vmul.f32 %v1494, 1.442695
      %v1504 = vpow.pop %v1503
      %v1505 = vmul.f32 %v1495, 1.442695
      %v1506 = vpow.pop %v1505
      %v1507 = vmul.f32 %v1496, 1.442695
      %v1508 = vpow.pop %v1507
      %v1509 = vmul.f32 %v1497, 1.442695
      %v1510 = vpow.pop %v1509
      %v1511 = vmul.f32 %v1498, 1.442695
      %v1512 = vpow.pop %v1511
      %v1513 = vmul.f32 %v1499, 1.442695
      %v1514 = vpow.pop %v1513
      %v1515 = vmul.f32 %v1500, 1.442695
      %v1516 = vpow.pop %v1515
      %v1517 = vadd.f32 %v1502, 1.0
      %v1518 = vadd.f32 %v1504, 1.0
      %v1519 = vadd.f32 %v1506, 1.0
      %v1520 = vadd.f32 %v1508, 1.0
      %v1521 = vadd.f32 %v1510, 1.0
      %v1522 = vadd.f32 %v1512, 1.0
      %v1523 = vadd.f32 %v1514, 1.0
      %v1524 = vadd.f32 %v1516, 1.0
      %v1525 = vrcp.pop %v1517
      %v1526 = vmul.f32 1.0, %v1525
      %v1527 = vrcp.pop %v1518
      %v1528 = vmul.f32 1.0, %v1527
      %v1529 = vrcp.pop %v1519
      %v1530 = vmul.f32 1.0, %v1529
      %v1531 = vrcp.pop %v1520
      %v1532 = vmul.f32 1.0, %v1531
      %v1533 = vrcp.pop %v1521
      %v1534 = vmul.f32 1.0, %v1533
      %v1535 = vrcp.pop %v1522
      %v1536 = vmul.f32 1.0, %v1535
      %v1537 = vrcp.pop %v1523
      %v1538 = vmul.f32 1.0, %v1537
      %v1539 = vrcp.pop %v1524
      %v1540 = vmul.f32 1.0, %v1539
      %1542 = vset.pattern.permute.xlu0 0
      %1543 = vperm.xlu0 %1542, %v1526
      %v1544 = vpop.permute.xlu0 %1543
      %1547 = vset.pattern.permute.xlu0 0
      %1548 = vperm.xlu0 %1547, %v1528
      %v1549 = vpop.permute.xlu0 %1548
      %1552 = vset.pattern.permute.xlu0 0
      %1553 = vperm.xlu0 %1552, %v1530
      %v1554 = vpop.permute.xlu0 %1553
      %1557 = vset.pattern.permute.xlu0 0
      %1558 = vperm.xlu0 %1557, %v1532
      %v1559 = vpop.permute.xlu0 %1558
      %1562 = vset.pattern.permute.xlu0 0
      %1563 = vperm.xlu0 %1562, %v1534
      %v1564 = vpop.permute.xlu0 %1563
      %1567 = vset.pattern.permute.xlu0 0
      %1568 = vperm.xlu0 %1567, %v1536
      %v1569 = vpop.permute.xlu0 %1568
      %1572 = vset.pattern.permute.xlu0 0
      %1573 = vperm.xlu0 %1572, %v1538
      %v1574 = vpop.permute.xlu0 %1573
      %1577 = vset.pattern.permute.xlu0 0
      %1578 = vperm.xlu0 %1577, %v1540
      %v1579 = vpop.permute.xlu0 %1578
      %v1581 = vmul.f32 %v1389, %v1544
      %v1582 = vmul.f32 %v1390, %v1549
      %v1583 = vmul.f32 %v1391, %v1554
      %v1584 = vmul.f32 %v1392, %v1559
      %v1585 = vmul.f32 %v1393, %v1564
      %v1586 = vmul.f32 %v1394, %v1569
      %v1587 = vmul.f32 %v1395, %v1574
      %v1588 = vmul.f32 %v1396, %v1579
      %v1589 = vlaneseq
      %v1590 = vshrl.u32 %v1589, 7
      %v1591 = vsub.s32 0, %v1590
      %v1592 = vrot.slane %v804, %v1591
      %1594 = vbcast.lane.b32.xlu0 %v1592, 256
      %v1595 = vpop.permute.xlu0 %1594
      %v1596 = vlaneseq
      %v1597 = vshrl.u32 %v1596, 7
      %v1598 = vsub.s32 1, %v1597
      %v1599 = vrot.slane %v804, %v1598
      %1601 = vbcast.lane.b32.xlu0 %v1599, 256
      %v1602 = vpop.permute.xlu0 %1601
      %v1603 = vlaneseq
      %v1604 = vshrl.u32 %v1603, 7
      %v1605 = vsub.s32 2, %v1604
      %v1606 = vrot.slane %v804, %v1605
      %1608 = vbcast.lane.b32.xlu0 %v1606, 256
      %v1609 = vpop.permute.xlu0 %1608
      %v1610 = vlaneseq
      %v1611 = vshrl.u32 %v1610, 7
      %v1612 = vsub.s32 3, %v1611
      %v1613 = vrot.slane %v804, %v1612
      %1615 = vbcast.lane.b32.xlu0 %v1613, 256
      %v1616 = vpop.permute.xlu0 %1615
      %v1617 = vlaneseq
      %v1618 = vshrl.u32 %v1617, 7
      %v1619 = vsub.s32 4, %v1618
      %v1620 = vrot.slane %v804, %v1619
      %1622 = vbcast.lane.b32.xlu0 %v1620, 256
      %v1623 = vpop.permute.xlu0 %1622
      %v1624 = vlaneseq
      %v1625 = vshrl.u32 %v1624, 7
      %v1626 = vsub.s32 5, %v1625
      %v1627 = vrot.slane %v804, %v1626
      %1629 = vbcast.lane.b32.xlu0 %v1627, 256
      %v1630 = vpop.permute.xlu0 %1629
      %v1631 = vlaneseq
      %v1632 = vshrl.u32 %v1631, 7
      %v1633 = vsub.s32 6, %v1632
      %v1634 = vrot.slane %v804, %v1633
      %1636 = vbcast.lane.b32.xlu0 %v1634, 256
      %v1637 = vpop.permute.xlu0 %1636
      %v1638 = vlaneseq
      %v1639 = vshrl.u32 %v1638, 7
      %v1640 = vsub.s32 7, %v1639
      %v1641 = vrot.slane %v804, %v1640
      %1643 = vbcast.lane.b32.xlu0 %v1641, 256
      %v1644 = vpop.permute.xlu0 %1643
      %v1645 = vmul.f32 %v1581, %v1595
      %v1646 = vmul.f32 %v1582, %v1602
      %v1647 = vmul.f32 %v1583, %v1609
      %v1648 = vmul.f32 %v1584, %v1616
      %v1649 = vmul.f32 %v1585, %v1623
      %v1650 = vmul.f32 %v1586, %v1630
      %v1651 = vmul.f32 %v1587, %v1637
      %v1652 = vmul.f32 %v1588, %v1644
      %v1653 = vsel %vm874, %v1645, 0.0
      %v1654 = vrot.slane %v1653, 4
      %v1655 = vadd.f32 %v1653, %v1654
      %v1656 = vrot.slane %v1655, 2
      %v1657 = vadd.f32 %v1655, %v1656
      %v1658 = vrot.slane %v1657, 1
      %v1659 = vadd.f32 %v1657, %v1658
      %v1660 = vsel %vm874, %v1646, 0.0
      %v1661 = vrot.slane %v1660, 4
      %v1662 = vadd.f32 %v1660, %v1661
      %v1663 = vrot.slane %v1662, 2
      %v1664 = vadd.f32 %v1662, %v1663
      %v1665 = vrot.slane %v1664, 1
      %v1666 = vadd.f32 %v1664, %v1665
      %v1667 = vsel %vm874, %v1647, 0.0
      %v1668 = vrot.slane %v1667, 4
      %v1669 = vadd.f32 %v1667, %v1668
      %v1670 = vrot.slane %v1669, 2
      %v1671 = vadd.f32 %v1669, %v1670
      %v1672 = vrot.slane %v1671, 1
      %v1673 = vadd.f32 %v1671, %v1672
      %v1674 = vsel %vm874, %v1648, 0.0
      %v1675 = vrot.slane %v1674, 4
      %v1676 = vadd.f32 %v1674, %v1675
      %v1677 = vrot.slane %v1676, 2
      %v1678 = vadd.f32 %v1676, %v1677
      %v1679 = vrot.slane %v1678, 1
      %v1680 = vadd.f32 %v1678, %v1679
      %v1681 = vsel %vm874, %v1649, 0.0
      %v1682 = vrot.slane %v1681, 4
      %v1683 = vadd.f32 %v1681, %v1682
      %v1684 = vrot.slane %v1683, 2
      %v1685 = vadd.f32 %v1683, %v1684
      %v1686 = vrot.slane %v1685, 1
      %v1687 = vadd.f32 %v1685, %v1686
      %v1688 = vsel %vm874, %v1650, 0.0
      %v1689 = vrot.slane %v1688, 4
      %v1690 = vadd.f32 %v1688, %v1689
      %v1691 = vrot.slane %v1690, 2
      %v1692 = vadd.f32 %v1690, %v1691
      %v1693 = vrot.slane %v1692, 1
      %v1694 = vadd.f32 %v1692, %v1693
      %v1695 = vsel %vm874, %v1651, 0.0
      %v1696 = vrot.slane %v1695, 4
      %v1697 = vadd.f32 %v1695, %v1696
      %v1698 = vrot.slane %v1697, 2
      %v1699 = vadd.f32 %v1697, %v1698
      %v1700 = vrot.slane %v1699, 1
      %v1701 = vadd.f32 %v1699, %v1700
      %v1702 = vsel %vm874, %v1652, 0.0
      %v1703 = vrot.slane %v1702, 4
      %v1704 = vadd.f32 %v1702, %v1703
      %v1705 = vrot.slane %v1704, 2
      %v1706 = vadd.f32 %v1704, %v1705
      %v1707 = vrot.slane %v1706, 1
      %v1708 = vadd.f32 %v1706, %v1707
      %v1709 = vmul.f32 %v1659, 0.25
      %v1710 = vmul.f32 %v1666, 0.25
      %v1711 = vmul.f32 %v1673, 0.25
      %v1712 = vmul.f32 %v1680, 0.25
      %v1713 = vmul.f32 %v1687, 0.25
      %v1714 = vmul.f32 %v1694, 0.25
      %v1715 = vmul.f32 %v1701, 0.25
      %v1716 = vmul.f32 %v1708, 0.25
      %v1717 = vld [vmem:[%s774] sm:$0xf]
      %v1718 = vld [vmem:[%s774 + $0x4] sm:$0xf]
      %v1719 = vld [vmem:[%s774 + $0x8] sm:$0xf]
      %v1720 = vld [vmem:[%s774 + $0xc] sm:$0xf]
      %v1721 = vpack.c.bf16 %v1709, %v1709
      %v1722 = vpack.c.bf16 %v1710, %v1710
      %v1723 = vpack.c.bf16 %v1711, %v1711
      %v1724 = vpack.c.bf16 %v1712, %v1712
      %v1725 = vpack.c.bf16 %v1713, %v1713
      %v1726 = vpack.c.bf16 %v1714, %v1714
      %v1727 = vpack.c.bf16 %v1715, %v1715
      %v1728 = vpack.c.bf16 %v1716, %v1716
      %v1737 = vunpack.c.l.b16 %v1721
      %v1738 = vunpack.c.l.b16 %v1722
      %v1739 = vunpack.c.l.b16 %v1723
      %v1740 = vunpack.c.l.b16 %v1724
      %v1741 = vunpack.c.l.b16 %v1725
      %v1742 = vunpack.c.l.b16 %v1726
      %v1743 = vunpack.c.l.b16 %v1727
      %v1744 = vunpack.c.l.b16 %v1728
      %vm1745 = vcmask 1041409
      %v1746 = vsel %vm1745, %v1738, %v1737
      %vm1747 = vcmask 1042434
      %v1748 = vsel %vm1747, %v1739, %v1746
      %vm1749 = vcmask 1043459
      %v1750 = vsel %vm1749, %v1740, %v1748
      %vm1751 = vcmask 1044484
      %v1752 = vsel %vm1751, %v1741, %v1750
      %vm1753 = vcmask 1045509
      %v1754 = vsel %vm1753, %v1742, %v1752
      %vm1755 = vcmask 1046534
      %v1756 = vsel %vm1755, %v1743, %v1754
      %vm1757 = vcmask 1047559
      %v1758 = vsel %vm1757, %v1744, %v1756
      %v1759 = vpack.c.b16 %v1758, %v1758
      %v1762 = vunpack.c.l.b16 %v1719
      %v1763 = vunpack.c.l.b16 %v1720
      %v1764 = vpack.c.b16 %v1763, %v1762
      %v1767 = vsel %vm874, %v1759, 0
      %1769 = vmatprep.subr.bf16.mxu0 0
      %1770 = vmatpush1.bf16.msra.mxu0 %v1764
      %1771 = vmatprep.subr.bf16.mxu0 0
      %1772 = vmatpush1.bf16.msra.mxu0 0
      %1773 = vmatprep.subr.bf16.mxu0 0
      %1774 = vmatpush1.bf16.msra.mxu0 0
      %1775 = vmatprep.subr.bf16.mxu0 0
      %1776 = vmatpush1.bf16.msra.mxu0 0
      %1777 = vmatprep.subr.bf16.mxu0 0
      %1778 = vmatpush1.bf16.msra.mxu0 0
      %1779 = vmatprep.subr.bf16.mxu0 0
      %1780 = vmatpush1.bf16.msra.mxu0 0
      %1781 = vmatprep.subr.bf16.mxu0 0
      %1782 = vmatpush1.bf16.msra.mxu0 0
      %1783 = vmatprep.subr.bf16.mxu0 0
      %1784 = vmatpush1.bf16.msra.mxu0 0
      %1785 = vmatprep.subr.bf16.mxu0 0
      %1786 = vmatpush1.bf16.msra.mxu0 0
      %1787 = vmatprep.subr.bf16.mxu0 0
      %1788 = vmatpush1.bf16.msra.mxu0 0
      %1789 = vmatprep.subr.bf16.mxu0 0
      %1790 = vmatpush1.bf16.msra.mxu0 0
      %1791 = vmatprep.subr.bf16.mxu0 0
      %1792 = vmatpush1.bf16.msra.mxu0 0
      %1793 = vmatprep.subr.bf16.mxu0 0
      %1794 = vmatpush1.bf16.msra.mxu0 0
      %1795 = vmatprep.subr.bf16.mxu0 0
      %1796 = vmatpush1.bf16.msra.mxu0 0
      %1797 = vmatprep.subr.bf16.mxu0 0
      %1798 = vmatpush1.bf16.msra.mxu0 0
      %1799 = vmatprep.subr.bf16.mxu0 0
      %1800 = vmatpush1.bf16.msra.mxu0 0
      %1801 = vmatprep.mubr.bf16.mxu0 0
      %1802 = vmatmul.mubr.bf16.gmra.mrb[0].mxu0 %v1767
      %v1803 = vpop.f32.mrb[0].mxu0
      %v1804 = vadd.f32 0.0, %v1803
      %v1805 = vpop.f32.mrb[0].mxu0
      %v1806 = vpop.f32.mrb[0].mxu0
      %v1807 = vpop.f32.mrb[0].mxu0
      %1808 = vdwg.mxu0
      %v1811 = vunpack.c.l.b16 %v1717
      %v1812 = vunpack.c.l.b16 %v1718
      %v1813 = vpack.c.b16 %v1812, %v1811
      %1815 = vmatprep.subr.bf16.mxu0 0
      %1816 = vmatpush1.bf16.msra.mxu0 %v1813
      %1817 = vmatprep.subr.bf16.mxu0 0
      %1818 = vmatpush1.bf16.msra.mxu0 0
      %1819 = vmatprep.subr.bf16.mxu0 0
      %1820 = vmatpush1.bf16.msra.mxu0 0
      %1821 = vmatprep.subr.bf16.mxu0 0
      %1822 = vmatpush1.bf16.msra.mxu0 0
      %1823 = vmatprep.subr.bf16.mxu0 0
      %1824 = vmatpush1.bf16.msra.mxu0 0
      %1825 = vmatprep.subr.bf16.mxu0 0
      %1826 = vmatpush1.bf16.msra.mxu0 0
      %1827 = vmatprep.subr.bf16.mxu0 0
      %1828 = vmatpush1.bf16.msra.mxu0 0
      %1829 = vmatprep.subr.bf16.mxu0 0
      %1830 = vmatpush1.bf16.msra.mxu0 0
      %1831 = vmatprep.subr.bf16.mxu0 0
      %1832 = vmatpush1.bf16.msra.mxu0 0
      %1833 = vmatprep.subr.bf16.mxu0 0
      %1834 = vmatpush1.bf16.msra.mxu0 0
      %1835 = vmatprep.subr.bf16.mxu0 0
      %1836 = vmatpush1.bf16.msra.mxu0 0
      %1837 = vmatprep.subr.bf16.mxu0 0
      %1838 = vmatpush1.bf16.msra.mxu0 0
      %1839 = vmatprep.subr.bf16.mxu0 0
      %1840 = vmatpush1.bf16.msra.mxu0 0
      %1841 = vmatprep.subr.bf16.mxu0 0
      %1842 = vmatpush1.bf16.msra.mxu0 0
      %1843 = vmatprep.subr.bf16.mxu0 0
      %1844 = vmatpush1.bf16.msra.mxu0 0
      %1845 = vmatprep.subr.bf16.mxu0 0
      %1846 = vmatpush1.bf16.msra.mxu0 0
      %1847 = vmatprep.mubr.bf16.mxu0 0
      %1848 = vmatmul.mubr.bf16.gmra.mrb[0].mxu0 %v876
      %v1849 = vpop.f32.mrb[0].mxu0
      %v1850 = vadd.f32 %v1804, %v1849
      %v1851 = vpop.f32.mrb[0].mxu0
      %v1852 = vpop.f32.mrb[0].mxu0
      %v1853 = vpop.f32.mrb[0].mxu0
      %1854 = vdwg.mxu0
      %v1855 = vld [vmem:[%s777] sm:$0x1]
      %v1857 = vlaneseq
      %v1858 = vshrl.u32 %v1857, 7
      %v1859 = vsub.s32 0, %v1858
      %v1860 = vrot.slane %v1855, %v1859
      %v1862 = vadd.f32 %v1850, %v1860
      %v1863 = vxor.u32 %v1862, 2147483648
      %v1864 = vmul.f32 %v1863, 1.442695
      %v1865 = vpow.pop %v1864
      %v1866 = vadd.f32 %v1865, 1.0
      %v1867 = vrcp.pop %v1866
      %v1868 = vmul.f32 1.0, %v1867
      %v1869 = vmul.f32 %v1862, %v1868
      %v1870 = vpack.c.bf16 %v1869, %v1869
      %v1871 = vld [vmem:[%s782] sm:$0xf]
      %v1872 = vld [vmem:[%s782 + $0x4] sm:$0xf]
      %v1873 = vld [vmem:[%s785] sm:$0x1]
      %v1875 = vlaneseq
      %v1876 = vshrl.u32 %v1875, 7
      %v1877 = vsub.s32 0, %v1876
      %v1878 = vrot.slane %v1873, %v1877
      %v1882 = vunpack.c.l.b16 %v1871
      %v1883 = vunpack.c.l.b16 %v1872
      %v1884 = vpack.c.b16 %v1883, %v1882
      %v1887 = vsel %vm874, %v1870, 0
      %1889 = vmatprep.subr.bf16.mxu0 0
      %1890 = vmatpush1.bf16.msra.mxu0 %v1884
      %1891 = vmatprep.subr.bf16.mxu0 0
      %1892 = vmatpush1.bf16.msra.mxu0 0
      %1893 = vmatprep.subr.bf16.mxu0 0
      %1894 = vmatpush1.bf16.msra.mxu0 0
      %1895 = vmatprep.subr.bf16.mxu0 0
      %1896 = vmatpush1.bf16.msra.mxu0 0
      %1897 = vmatprep.subr.bf16.mxu0 0
      %1898 = vmatpush1.bf16.msra.mxu0 0
      %1899 = vmatprep.subr.bf16.mxu0 0
      %1900 = vmatpush1.bf16.msra.mxu0 0
      %1901 = vmatprep.subr.bf16.mxu0 0
      %1902 = vmatpush1.bf16.msra.mxu0 0
      %1903 = vmatprep.subr.bf16.mxu0 0
      %1904 = vmatpush1.bf16.msra.mxu0 0
      %1905 = vmatprep.subr.bf16.mxu0 0
      %1906 = vmatpush1.bf16.msra.mxu0 0
      %1907 = vmatprep.subr.bf16.mxu0 0
      %1908 = vmatpush1.bf16.msra.mxu0 0
      %1909 = vmatprep.subr.bf16.mxu0 0
      %1910 = vmatpush1.bf16.msra.mxu0 0
      %1911 = vmatprep.subr.bf16.mxu0 0
      %1912 = vmatpush1.bf16.msra.mxu0 0
      %1913 = vmatprep.subr.bf16.mxu0 0
      %1914 = vmatpush1.bf16.msra.mxu0 0
      %1915 = vmatprep.subr.bf16.mxu0 0
      %1916 = vmatpush1.bf16.msra.mxu0 0
      %1917 = vmatprep.subr.bf16.mxu0 0
      %1918 = vmatpush1.bf16.msra.mxu0 0
      %1919 = vmatprep.subr.bf16.mxu0 0
      %1920 = vmatpush1.bf16.msra.mxu0 0
      %1921 = vmatprep.mubr.bf16.mxu0 0
      %1922 = vmatmul.mubr.bf16.gmra.mrb[0].mxu0 %v1887
      %v1923 = vpop.f32.mrb[0].mxu0
      %v1924 = vadd.f32 %v1878, %v1923
      %v1925 = vpop.f32.mrb[0].mxu0
      %v1926 = vpop.f32.mrb[0].mxu0
      %v1927 = vpop.f32.mrb[0].mxu0
      %1928 = vdwg.mxu0
      %v1929 = vadd.f32 %v857, %v1924
      %1931 = vset.pattern.permute.xlu0 0
      %1932 = vperm.xlu0 %1931, %v805
      %v1933 = vpop.permute.xlu0 %1932
      %v1935 = vmul.f32 %v1929, %v1933
      %v1936 = vpack.c.bf16 %v1935, %v1935
      %vm1937 = vcmask 125952
      %1938 = vst.msk [vmem:[%s793] sm:$0xf] %vm1937, %v1936
      %p1939 = scmp.lt.s32.totalorder %s32, 2
      %s1940 = scalar_select %p1939, %s32, 2
      %p1941 = scmp.lt.s32.totalorder %s31, 1
      %s1942 = scalar_select %p1941, %s31, 1
      %s1943 = smul.addr %s1940, 2
      %s1944 = sadd.s32 %s1942, %s1943
      %s1945 = smul.addr %s1944, 4
      %s1946 = scalar_lea.vmem %s16, %s1945
      // Predicated region
      $region85: #{attention_forward.3} parent=83 // pred_check
        %p1947 = pneg %p475
      $region86: #{attention_forward.3} parent=83 // pred_check_branch
        %1949 = sbr.rel (%p1947) target = $region88
      $region87: #{attention_forward.3} parent=83 // pred_region
        _
      $region88: #{attention_forward.3} parent=83 // pred_fallthru
        _
    $region84: #{attention_forward.3} parent=5 // pred_fallthru
      _
    %p1950 = scmp.le.s32.totalorder 2, %s22
    // Predicated region
    $region89: #{attention_forward.3} parent=5 // pred_check
      %p1951 = pneg %p1950
    $region90: #{attention_forward.3} parent=5 // pred_check_branch
      %1953 = sbr.rel (%p1951) target = $region92
    $region91: #{attention_forward.3} parent=5 // pred_region
      %s1954 = ssub.s32 %s22, 2
      // Predicated region
      $region93: #{attention_forward.3} parent=91 // pred_check
        %p1955 = pneg %p481
      $region94: #{attention_forward.3} parent=91 // pred_check_branch
        %1957 = sbr.rel (%p1955) target = $region96
      $region95: #{attention_forward.3} parent=91 // pred_region
        %p1958 = scmp.lt.s32.totalorder %s34, 2
        %s1959 = scalar_select %p1958, %s34, 2
        %p1960 = scmp.lt.s32.totalorder %s33, 1
        %s1961 = scalar_select %p1960, %s33, 1
        %s1962 = smul.addr %s1959, 2
        %s1963 = sadd.s32 %s1961, %s1962
        %s1964 = smul.addr %s1963, 4
        %s1965 = scalar_lea.vmem %s16, %s1964
      $region96: #{attention_forward.3} parent=91 // pred_fallthru
        _
    $region92: #{attention_forward.3} parent=5 // pred_fallthru
      _
  $region6: #{attention_forward.3} parent=0 // loop_footer
    %s26 = sadd.s32 1, %s22
  $region7: #{attention_forward.3} parent=0 // loop_footer_branch
    %21 = sbr.rel target = $region3
  $region8: #{attention_forward.3} parent=0 // loop_exit
    _

</llo_original>
